<compile_context>
chip_gen: v6e
topology: v6e:2x2x1
jax: 0.10.0
libtpu: 0.0.40
codegen_flags: <defaults>
</compile_context>

<pallas_src>
import numpy as np

import jax
import jax.numpy as jnp
from jax import lax
from jax.experimental import pallas as pl
from jax.experimental.pallas import tpu as pltpu


# ----------------------------------------------------------------------------
# Fused Pallas kernel
# ----------------------------------------------------------------------------

def _fused_kernel(im2col1_ref, s2_ref, ublk_ref, mavg_ref, mexp_ref,
                  w1_ref, b1_ref, w2_ref, b2_ref, wup_ref, bup_ref,
                  wz_ref, bz_ref, wa_ref, ba_ref, wo_ref, bo_ref,
                  o0_ref, o1_ref, of_ref):
    """Everything after the host-side input unfold, channel-major (channels in sublanes,
    flattened (n,h,w) spatial positions in lanes).

    im2col1_ref : (9*Cin, N*H*W)      unfolded padded input for the 3x3/s1 conv
    s2_ref      : (N*H*W, 9*N*Hh*Wh)  0/1 tap-selection matrix for the 3x3/s2 conv (pad -> 0)
    ublk_ref    : (N*Hh*Wh, N*H*W)    block-diag-over-N bilinear x2 (align_corners) operator
    mavg_ref    : (N*H*W, N)          per-sample global-average-pool operator
    mexp_ref    : (N, N*H*W)          per-sample broadcast operator (transpose of N*mavg)
    w1_ref      : (C0, 9*Cin),  b1_ref (C0, 1)     encoder conv1
    w2_ref      : (C1, 9*C0),   b2_ref (C1, 1)     encoder conv2 (stride 2)
    wup_ref     : (C0, C1),     bup_ref (C0, 1)    1x1 conv with BatchNorm folded (eval mode)
    wz_ref      : (D, C0),      bz_ref (D, 1)      SKConv reduce FC
    wa_ref      : (2*C0, D),    ba_ref (2*C0, 1)   both SK branch FCs packed along sublanes
    wo_ref      : (K, C0),      bo_ref (K, 1)      shared outLayer (GAP + linear)
    o*_ref      : (K, N)        logits for head(feas[0]), head(feas[1]), head(fuse)
    """
    c0 = w1_ref.shape[0]
    m2 = ublk_ref.shape[0]                                      # N * Hh * Wh

    # ---- encoder conv1: ONE (C0, 9*Cin) @ (9*Cin, N*H*W) matmul + bias + ReLU ----
    f1 = jnp.maximum(
        jnp.dot(w1_ref[...], im2col1_ref[...], preferred_element_type=jnp.float32)
        + b1_ref[...], 0.0)                                     # (C0, N*H*W), lane-dense

    # ---- encoder conv2 (3x3 / stride 2 / pad 1): strided-tap gather as ONE matmul with a
    #      precomputed 0/1 matrix, 9 tile-aligned lane slices restacked along K, ONE weight
    #      matmul + bias + ReLU.  No strided loads / space-to-depth needed. ----
    taps = jnp.dot(f1, s2_ref[...], preferred_element_type=jnp.float32)   # (C0, 9*N*Hh*Wh)
    im2col2 = jnp.concatenate(
        [taps[:, t * m2:(t + 1) * m2] for t in range(9)], axis=0)         # (9*C0, N*Hh*Wh)
    f2 = jnp.maximum(
        jnp.dot(w2_ref[...], im2col2, preferred_element_type=jnp.float32)
        + b2_ref[...], 0.0)                                     # (C1, N*Hh*Wh)

    # ---- up_samples[0]: 1x1 conv (BN folded, no ReLU) + bilinear x2 as ONE batched matmul ----
    up = jnp.dot(wup_ref[...], f2, preferred_element_type=jnp.float32) + bup_ref[...]
    fea1 = jnp.dot(up, ublk_ref[...], preferred_element_type=jnp.float32)  # (C0, N*H*W)

    # ---- global average pools as matmuls with a constant averaging operator (no loops) ----
    mavg = mavg_ref[...]
    p0 = jnp.dot(f1, mavg, preferred_element_type=jnp.float32)   # (C0, N) = GAP(feas[0])
    p1 = jnp.dot(fea1, mavg, preferred_element_type=jnp.float32)  # (C0, N) = GAP(feas[1])

    # ---- SKConv attention: GAP(sum feas) -> FC+ReLU -> branch FCs -> softmax over M=2 ----
    s = p0 + p1
    z = jnp.maximum(jnp.dot(wz_ref[...], s, preferred_element_type=jnp.float32)
                    + bz_ref[...], 0.0)                          # (D, N)
    att = jnp.dot(wa_ref[...], z, preferred_element_type=jnp.float32) + ba_ref[...]  # (2C0, N)
    l0 = att[:c0, :]
    l1 = att[c0:, :]
    mx = jnp.maximum(l0, l1)
    e0 = jnp.exp(l0 - mx)
    e1 = jnp.exp(l1 - mx)
    a0 = e0 * pl.reciprocal(e0 + e1, approx=True)                # (C0, N), EUP reciprocal
    # (a1 = 1 - a0; broadcast once below)

    # ---- fuse = a0*feas[0] + a1*feas[1]; branch weights broadcast over lanes via matmul ----
    a0_full = jnp.dot(a0, mexp_ref[...], preferred_element_type=jnp.float32)  # (C0, N*H*W)
    fuse = a0_full * f1 + (1.0 - a0_full) * fea1
    pf = jnp.dot(fuse, mavg, preferred_element_type=jnp.float32)  # (C0, N) = GAP(fuse)

    # ---- shared outLayer heads ----
    wo = wo_ref[...]
    bo = bo_ref[...]
    o0_ref[...] = jnp.dot(wo, p0, preferred_element_type=jnp.float32) + bo
    o1_ref[...] = jnp.dot(wo, p1, preferred_element_type=jnp.float32) + bo
    of_ref[...] = jnp.dot(wo, pf, preferred_element_type=jnp.float32) + bo


def _vmem():
    return pl.BlockSpec(memory_space=pltpu.MemorySpace.VMEM)


# ----------------------------------------------------------------------------
# Host-side (pure layout plumbing on the raw input + constant operator construction)
# ----------------------------------------------------------------------------

def _im2col_3x3_s1(x_nchw):
    """Unfold the raw input for a 3x3/s1/p1 conv: (N,Cin,H,W) -> (9*Cin, N*H*W).
    Row t*Cin + c (t = 3*dy + dx) holds channel c shifted by (dy-1, dx-1); columns are the
    (n, h, w) output positions row-major.  This runs as one tiny fused XLA gather on the ~3 KB
    input before the single pallas_call (the conv matmul/bias/ReLU themselves run in-kernel)."""
    n, cin, h, w = x_nchw.shape
    xp = jnp.pad(x_nchw, ((0, 0), (0, 0), (1, 1), (1, 1)))
    taps = [xp[:, :, dy:dy + h, dx:dx + w] for dy in range(3) for dx in range(3)]
    t = jnp.stack(taps, axis=0)                                  # (9, N, Cin, H, W)
    return t.transpose(0, 2, 1, 3, 4).reshape(9 * cin, n * h * w)


def _bilinear_x2_matrix(h_in, w_in):
    """Dense (2H*2W, H*W) operator for nn.UpsamplingBilinear2d(scale_factor=2)
    (bilinear, align_corners=True).  Returns numpy."""
    def axis_matrix(size_in):
        size_out = 2 * size_in
        a = np.zeros((size_out, size_in), np.float32)
        if size_in == 1:
            a[:, 0] = 1.0
            return a
        scale = (size_in - 1) / (size_out - 1)
        for o in range(size_out):
            src = o * scale
            i0 = min(int(np.floor(src)), size_in - 2)
            frac = src - i0
            a[o, i0] += 1.0 - frac
            a[o, i0 + 1] += frac
        return a
    return np.kron(axis_matrix(h_in), axis_matrix(w_in)).astype(np.float32)


def _stride2_tap_gather(n, h, w):
    """0/1 matrix (N*H*W, 9*N*Hh*Wh): column t*N*Hh*Wh + q selects the scale-0 pixel feeding
    tap t (= 3*dy+dx) of output position q of a 3x3/stride-2/pad-1 conv (zero where the tap
    falls in the padding)."""
    hh, wh = (h - 1) // 2 + 1, (w - 1) // 2 + 1
    m2 = n * hh * wh
    S = np.zeros((n * h * w, 9 * m2), np.float32)
    for t in range(9):
        dy, dx = t // 3, t % 3
        for b in range(n):
            for oh in range(hh):
                ih = 2 * oh + dy - 1
                if ih < 0 or ih >= h:
                    continue
                for ow in range(wh):
                    iw = 2 * ow + dx - 1
                    if iw < 0 or iw >= w:
                        continue
                    S[b * h * w + ih * w + iw, t * m2 + b * hh * wh + oh * wh + ow] = 1.0
    return jnp.asarray(S)


def _upsample_x2_op(bmat_np, n):
    """Block-diagonal-over-N right-multiplication operator (N*Hh*Wh, N*H*W) so that the whole
    batched bilinear x2 upsample is a single matmul in channel-major layout."""
    hw, hwh = bmat_np.shape
    M = np.zeros((n * hwh, n * hw), np.float32)
    for i in range(n):
        M[i * hwh:(i + 1) * hwh, i * hw:(i + 1) * hw] = bmat_np.T
    return jnp.asarray(M)


def _gap_ops(n, hw):
    """Per-sample GAP operator (N*H*W, N) and its broadcast counterpart (N, N*H*W)."""
    mavg = np.zeros((n * hw, n), np.float32)
    mexp = np.zeros((n, n * hw), np.float32)
    for i in range(n):
        mavg[i * hw:(i + 1) * hw, i] = 1.0 / hw
        mexp[i, i * hw:(i + 1) * hw] = 1.0
    return jnp.asarray(mavg), jnp.asarray(mexp)


# ----------------------------------------------------------------------------
# Forward pass (mirrors IDEA_MScale_SK.forward) — ONE pallas_call
# ----------------------------------------------------------------------------

def idea_mscale_sk_forward(x_nchw, P):
    n = x_nchw.shape[0]
    k = P["woT"].shape[0]
    im2col1 = _im2col_3x3_s1(x_nchw.astype(jnp.float32))         # (9*Cin, N*H*W)

    args = (im2col1, P["s2all"], P["ublk"], P["mavg"], P["mexp"],
            P["w1cat"], P["b1col"], P["w2cat"], P["b2col"],
            P["wupT"], P["bupcol"], P["wzT"], P["bzcol"],
            P["waT"], P["bacol"], P["woT"], P["bocol"])

    o0, o1, of = pl.pallas_call(
        _fused_kernel,
        out_shape=(jax.ShapeDtypeStruct((k, n), jnp.float32),
                   jax.ShapeDtypeStruct((k, n), jnp.float32),
                   jax.ShapeDtypeStruct((k, n), jnp.float32)),
        in_specs=[_vmem() for _ in args],
        out_specs=(_vmem(), _vmem(), _vmem()),
    )(*args)
    # channel-major (K, N) -> (N, K); trivial 40-byte transposes fused into the jitted program
    return [o0.T, o1.T, of.T]


# ----------------------------------------------------------------------------
# Parameters
# ----------------------------------------------------------------------------

def make_params(key, cin, channel_list, class_num, spatial, batch, sk_d=32, bn_eps=1e-5):
    c0, c1 = channel_list
    h, w = spatial
    n = batch
    hh, wh = h // 2, w // 2                 # encoder conv2 output size (even H, W assumed)
    ks = iter(jax.random.split(key, 32))

    def rnd(shape, scale=0.1):
        return scale * jax.random.normal(next(ks), shape, jnp.float32)

    # raw parameters (mirror the PyTorch module; used verbatim by the jnp reference)
    w1 = rnd((3, 3, cin, c0)); b1 = rnd((c0,), 0.01)             # encoder conv1 (3x3 / s1)
    w2 = rnd((3, 3, c0, c1)); b2 = rnd((c1,), 0.01)              # encoder conv2 (3x3 / s2)
    wup = rnd((c1, c0))                                          # up_samples[0] 1x1 conv (no bias)
    gamma = 1.0 + rnd((c0,)); beta = rnd((c0,))                  # BatchNorm2d(c0) affine
    rmean = rnd((c0,))                                           # BatchNorm2d running stats
    rvar = 1.0 + 0.1 * jnp.abs(jax.random.normal(next(ks), (c0,), jnp.float32))
    wz = rnd((c0, sk_d)); bz = rnd((sk_d,), 0.01)                # SKConv reduce FC
    wa = rnd((sk_d, 2 * c0)); ba = rnd((2 * c0,), 0.01)          # SKConv branch FCs
    wo = rnd((c0, class_num)); bo = rnd((class_num,), 0.01)      # shared outLayer linear

    bmat_np = _bilinear_x2_matrix(hh, wh)                        # (H*W, Hh*Wh)

    P = dict(w1=w1, b1=b1, w2=w2, b2=b2, wup=wup, gamma=gamma, beta=beta,
             rmean=rmean, rvar=rvar, bn_eps=bn_eps,
             wz=wz, bz=bz, wa=wa, ba=ba, wo=wo, bo=bo,
             bmat=jnp.asarray(bmat_np))

    # kernel-side layouts: channel-major (lane-dense) weights, column-vector biases, BN folded
    # into the 1x1 conv (eval mode), and the precomputed constant operators.
    scale = gamma / jnp.sqrt(rvar + bn_eps)
    mavg, mexp = _gap_ops(n, h * w)
    P.update(
        w1cat=jnp.transpose(w1.reshape(9, cin, c0), (2, 0, 1)).reshape(c0, 9 * cin),
        b1col=b1.reshape(c0, 1),
        w2cat=jnp.transpose(w2.reshape(9, c0, c1), (2, 0, 1)).reshape(c1, 9 * c0),
        b2col=b2.reshape(c1, 1),
        wupT=(wup * scale[None, :]).T,
        bupcol=(beta - rmean * scale).reshape(c0, 1),
        wzT=wz.T, bzcol=bz.reshape(sk_d, 1),
        waT=wa.T, bacol=ba.reshape(2 * c0, 1),
        woT=wo.T, bocol=bo.reshape(class_num, 1),
        s2all=_stride2_tap_gather(n, h, w),
        ublk=_upsample_x2_op(bmat_np, n),
        mavg=mavg, mexp=mexp,
    )
    return P


# ----------------------------------------------------------------------------
# Pure-jnp reference (literal module structure) for a correctness check
# ----------------------------------------------------------------------------

def ref_forward(x_nchw, P):
    x = jnp.transpose(x_nchw, (0, 2, 3, 1)).astype(jnp.float32)
    dn = ("NHWC", "HWIO", "NHWC")
    f1 = jax.nn.relu(lax.conv_general_dilated(
        x, P["w1"], (1, 1), ((1, 1), (1, 1)), dimension_numbers=dn) + P["b1"])
    f2 = jax.nn.relu(lax.conv_general_dilated(
        f1, P["w2"], (2, 2), ((1, 1), (1, 1)), dimension_numbers=dn) + P["b2"])
    # up_samples[0]: 1x1 conv (no bias) -> BatchNorm2d (eval) -> bilinear x2 (align_corners)
    up = jnp.einsum("nhwc,cd->nhwd", f2, P["wup"])
    up = (up - P["rmean"]) / jnp.sqrt(P["rvar"] + P["bn_eps"]) * P["gamma"] + P["beta"]
    n, hh, wh, c0 = up.shape
    fea1 = jnp.einsum("op,npc->noc", P["bmat"], up.reshape(n, hh * wh, c0))
    fea1 = fea1.reshape(n, 2 * hh, 2 * wh, c0)
    fea0 = f1
    # SKConv
    s = (fea0 + fea1).mean(axis=(1, 2))
    z = jax.nn.relu(s @ P["wz"] + P["bz"])
    att = (z @ P["wa"] + P["ba"]).reshape(n, 2, c0)
    a = jax.nn.softmax(att, axis=1)
    fuse = a[:, 0, None, None, :] * fea0 + a[:, 1, None, None, :] * fea1
    head = lambda f: f.mean(axis=(1, 2)) @ P["wo"] + P["bo"]
    return [head(fea0), head(fea1), head(fuse)]


if __name__ == "__main__":
    N, CIN, H, W = 2, 3, 16, 16
    CHANNEL_LIST = [8, 16]
    CLASS_NUM = 5

    key = jax.random.PRNGKey(0)
    kx, kp = jax.random.split(key)
    x = jax.random.normal(kx, (N, CIN, H, W), jnp.float32)       # NCHW like PyTorch
    P = make_params(kp, CIN, CHANNEL_LIST, CLASS_NUM, spatial=(H, W), batch=N)

    fwd = jax.jit(lambda xx: idea_mscale_sk_forward(xx, P))
    outs = jax.block_until_ready(fwd(x))

    refs = ref_forward(x, P)
    assert len(outs) == len(refs) == len(CHANNEL_LIST) + 1
    for got, ref in zip(outs, refs):
        assert got.shape == ref.shape == (N, CLASS_NUM)
        err = float(jnp.max(jnp.abs(got - ref)))
        # tolerance covers the approximate EUP reciprocal used in the SK branch softmax
        assert err < 2e-3, f"mismatch vs reference: {err}"
    print("KERNEL_OK")
</pallas_src>

<mosaic_0001>
module attributes {stable_mosaic.version = 11 : i64} {
  func.func @_fused_kernel(%arg0: memref<27x512xf32, #tpu.memory_space<vmem>>, %arg1: memref<512x1152xf32, #tpu.memory_space<vmem>>, %arg2: memref<128x512xf32, #tpu.memory_space<vmem>>, %arg3: memref<512x2xf32, #tpu.memory_space<vmem>>, %arg4: memref<2x512xf32, #tpu.memory_space<vmem>>, %arg5: memref<8x27xf32, #tpu.memory_space<vmem>>, %arg6: memref<8x1xf32, #tpu.memory_space<vmem>>, %arg7: memref<16x72xf32, #tpu.memory_space<vmem>>, %arg8: memref<16x1xf32, #tpu.memory_space<vmem>>, %arg9: memref<8x16xf32, #tpu.memory_space<vmem>>, %arg10: memref<8x1xf32, #tpu.memory_space<vmem>>, %arg11: memref<32x8xf32, #tpu.memory_space<vmem>>, %arg12: memref<32x1xf32, #tpu.memory_space<vmem>>, %arg13: memref<16x32xf32, #tpu.memory_space<vmem>>, %arg14: memref<16x1xf32, #tpu.memory_space<vmem>>, %arg15: memref<5x8xf32, #tpu.memory_space<vmem>>, %arg16: memref<5x1xf32, #tpu.memory_space<vmem>>, %arg17: memref<5x2xf32, #tpu.memory_space<vmem>>, %arg18: memref<5x2xf32, #tpu.memory_space<vmem>>, %arg19: memref<5x2xf32, #tpu.memory_space<vmem>>) attributes {dimension_semantics = [], scalar_prefetch = 0 : i64, scratch_operands = 0 : i64, tpu.core_type = #tpu.core_type<tc>} {
    %c0 = arith.constant 0 : index
    %c0_0 = arith.constant 0 : index
    %0 = vector.load %arg5[%c0, %c0_0] : memref<8x27xf32, #tpu.memory_space<vmem>>, vector<8x27xf32>
    %c0_1 = arith.constant 0 : index
    %c0_2 = arith.constant 0 : index
    %1 = vector.load %arg0[%c0_1, %c0_2] : memref<27x512xf32, #tpu.memory_space<vmem>>, vector<27x512xf32>
    %cst = arith.constant dense<0.000000e+00> : vector<8x512xf32>
    %2 = tpu.matmul %0, %1, %cst {dimension_numbers = #tpu.dot_dimension_numbers<[1], [0], [0], [1], [0, 0, 1, 1], [], []>} : vector<8x27xf32>, vector<27x512xf32>, vector<8x512xf32> -> vector<8x512xf32>
    %c0_3 = arith.constant 0 : index
    %c0_4 = arith.constant 0 : index
    %3 = vector.load %arg6[%c0_3, %c0_4] : memref<8x1xf32, #tpu.memory_space<vmem>>, vector<8x1xf32>
    %4 = vector.broadcast %3 : vector<8x1xf32> to vector<8x512xf32>
    %5 = arith.addf %2, %4 : vector<8x512xf32>
    %cst_5 = arith.constant 0.000000e+00 : f32
    %6 = vector.broadcast %cst_5 : f32 to vector<8x512xf32>
    %7 = arith.maximumf %5, %6 : vector<8x512xf32>
    %c0_6 = arith.constant 0 : index
    %c0_7 = arith.constant 0 : index
    %8 = vector.load %arg1[%c0_6, %c0_7] : memref<512x1152xf32, #tpu.memory_space<vmem>>, vector<512x1152xf32>
    %cst_8 = arith.constant dense<0.000000e+00> : vector<8x1152xf32>
    %9 = tpu.matmul %7, %8, %cst_8 {dimension_numbers = #tpu.dot_dimension_numbers<[1], [0], [0], [1], [0, 0, 1, 1], [], []>} : vector<8x512xf32>, vector<512x1152xf32>, vector<8x1152xf32> -> vector<8x1152xf32>
    %10 = vector.extract_strided_slice %9 {offsets = [0, 0], sizes = [8, 128], strides = [1, 1]} : vector<8x1152xf32> to vector<8x128xf32>
    %11 = vector.extract_strided_slice %9 {offsets = [0, 128], sizes = [8, 128], strides = [1, 1]} : vector<8x1152xf32> to vector<8x128xf32>
    %12 = vector.extract_strided_slice %9 {offsets = [0, 256], sizes = [8, 128], strides = [1, 1]} : vector<8x1152xf32> to vector<8x128xf32>
    %13 = vector.extract_strided_slice %9 {offsets = [0, 384], sizes = [8, 128], strides = [1, 1]} : vector<8x1152xf32> to vector<8x128xf32>
    %14 = vector.extract_strided_slice %9 {offsets = [0, 512], sizes = [8, 128], strides = [1, 1]} : vector<8x1152xf32> to vector<8x128xf32>
    %15 = vector.extract_strided_slice %9 {offsets = [0, 640], sizes = [8, 128], strides = [1, 1]} : vector<8x1152xf32> to vector<8x128xf32>
    %16 = vector.extract_strided_slice %9 {offsets = [0, 768], sizes = [8, 128], strides = [1, 1]} : vector<8x1152xf32> to vector<8x128xf32>
    %17 = vector.extract_strided_slice %9 {offsets = [0, 896], sizes = [8, 128], strides = [1, 1]} : vector<8x1152xf32> to vector<8x128xf32>
    %18 = vector.extract_strided_slice %9 {offsets = [0, 1024], sizes = [8, 128], strides = [1, 1]} : vector<8x1152xf32> to vector<8x128xf32>
    %19 = tpu.concatenate %10, %11, %12, %13, %14, %15, %16, %17, %18 in 0 : vector<8x128xf32>, vector<8x128xf32>, vector<8x128xf32>, vector<8x128xf32>, vector<8x128xf32>, vector<8x128xf32>, vector<8x128xf32>, vector<8x128xf32>, vector<8x128xf32> -> vector<72x128xf32>
    %c0_9 = arith.constant 0 : index
    %c0_10 = arith.constant 0 : index
    %20 = vector.load %arg7[%c0_9, %c0_10] : memref<16x72xf32, #tpu.memory_space<vmem>>, vector<16x72xf32>
    %cst_11 = arith.constant dense<0.000000e+00> : vector<16x128xf32>
    %21 = tpu.matmul %20, %19, %cst_11 {dimension_numbers = #tpu.dot_dimension_numbers<[1], [0], [0], [1], [0, 0, 1, 1], [], []>} : vector<16x72xf32>, vector<72x128xf32>, vector<16x128xf32> -> vector<16x128xf32>
    %c0_12 = arith.constant 0 : index
    %c0_13 = arith.constant 0 : index
    %22 = vector.load %arg8[%c0_12, %c0_13] : memref<16x1xf32, #tpu.memory_space<vmem>>, vector<16x1xf32>
    %23 = vector.broadcast %22 : vector<16x1xf32> to vector<16x128xf32>
    %24 = arith.addf %21, %23 : vector<16x128xf32>
    %cst_14 = arith.constant 0.000000e+00 : f32
    %25 = vector.broadcast %cst_14 : f32 to vector<16x128xf32>
    %26 = arith.maximumf %24, %25 : vector<16x128xf32>
    %c0_15 = arith.constant 0 : index
    %c0_16 = arith.constant 0 : index
    %27 = vector.load %arg9[%c0_15, %c0_16] : memref<8x16xf32, #tpu.memory_space<vmem>>, vector<8x16xf32>
    %cst_17 = arith.constant dense<0.000000e+00> : vector<8x128xf32>
    %28 = tpu.matmul %27, %26, %cst_17 {dimension_numbers = #tpu.dot_dimension_numbers<[1], [0], [0], [1], [0, 0, 1, 1], [], []>} : vector<8x16xf32>, vector<16x128xf32>, vector<8x128xf32> -> vector<8x128xf32>
    %c0_18 = arith.constant 0 : index
    %c0_19 = arith.constant 0 : index
    %29 = vector.load %arg10[%c0_18, %c0_19] : memref<8x1xf32, #tpu.memory_space<vmem>>, vector<8x1xf32>
    %30 = vector.broadcast %29 : vector<8x1xf32> to vector<8x128xf32>
    %31 = arith.addf %28, %30 : vector<8x128xf32>
    %c0_20 = arith.constant 0 : index
    %c0_21 = arith.constant 0 : index
    %32 = vector.load %arg2[%c0_20, %c0_21] : memref<128x512xf32, #tpu.memory_space<vmem>>, vector<128x512xf32>
    %cst_22 = arith.constant dense<0.000000e+00> : vector<8x512xf32>
    %33 = tpu.matmul %31, %32, %cst_22 {dimension_numbers = #tpu.dot_dimension_numbers<[1], [0], [0], [1], [0, 0, 1, 1], [], []>} : vector<8x128xf32>, vector<128x512xf32>, vector<8x512xf32> -> vector<8x512xf32>
    %c0_23 = arith.constant 0 : index
    %c0_24 = arith.constant 0 : index
    %34 = vector.load %arg3[%c0_23, %c0_24] : memref<512x2xf32, #tpu.memory_space<vmem>>, vector<512x2xf32>
    %cst_25 = arith.constant dense<0.000000e+00> : vector<8x2xf32>
    %35 = tpu.matmul %7, %34, %cst_25 {dimension_numbers = #tpu.dot_dimension_numbers<[1], [0], [0], [1], [0, 0, 1, 1], [], []>} : vector<8x512xf32>, vector<512x2xf32>, vector<8x2xf32> -> vector<8x2xf32>
    %cst_26 = arith.constant dense<0.000000e+00> : vector<8x2xf32>
    %36 = tpu.matmul %33, %34, %cst_26 {dimension_numbers = #tpu.dot_dimension_numbers<[1], [0], [0], [1], [0, 0, 1, 1], [], []>} : vector<8x512xf32>, vector<512x2xf32>, vector<8x2xf32> -> vector<8x2xf32>
    %37 = arith.addf %35, %36 : vector<8x2xf32>
    %c0_27 = arith.constant 0 : index
    %c0_28 = arith.constant 0 : index
    %38 = vector.load %arg11[%c0_27, %c0_28] : memref<32x8xf32, #tpu.memory_space<vmem>>, vector<32x8xf32>
    %cst_29 = arith.constant dense<0.000000e+00> : vector<32x2xf32>
    %39 = tpu.matmul %38, %37, %cst_29 {dimension_numbers = #tpu.dot_dimension_numbers<[1], [0], [0], [1], [0, 0, 1, 1], [], []>} : vector<32x8xf32>, vector<8x2xf32>, vector<32x2xf32> -> vector<32x2xf32>
    %c0_30 = arith.constant 0 : index
    %c0_31 = arith.constant 0 : index
    %40 = vector.load %arg12[%c0_30, %c0_31] : memref<32x1xf32, #tpu.memory_space<vmem>>, vector<32x1xf32>
    %41 = vector.broadcast %40 : vector<32x1xf32> to vector<32x2xf32>
    %42 = arith.addf %39, %41 : vector<32x2xf32>
    %cst_32 = arith.constant 0.000000e+00 : f32
    %43 = vector.broadcast %cst_32 : f32 to vector<32x2xf32>
    %44 = arith.maximumf %42, %43 : vector<32x2xf32>
    %c0_33 = arith.constant 0 : index
    %c0_34 = arith.constant 0 : index
    %45 = vector.load %arg13[%c0_33, %c0_34] : memref<16x32xf32, #tpu.memory_space<vmem>>, vector<16x32xf32>
    %cst_35 = arith.constant dense<0.000000e+00> : vector<16x2xf32>
    %46 = tpu.matmul %45, %44, %cst_35 {dimension_numbers = #tpu.dot_dimension_numbers<[1], [0], [0], [1], [0, 0, 1, 1], [], []>} : vector<16x32xf32>, vector<32x2xf32>, vector<16x2xf32> -> vector<16x2xf32>
    %c0_36 = arith.constant 0 : index
    %c0_37 = arith.constant 0 : index
    %47 = vector.load %arg14[%c0_36, %c0_37] : memref<16x1xf32, #tpu.memory_space<vmem>>, vector<16x1xf32>
    %48 = vector.broadcast %47 : vector<16x1xf32> to vector<16x2xf32>
    %49 = arith.addf %46, %48 : vector<16x2xf32>
    %50 = vector.extract_strided_slice %49 {offsets = [0, 0], sizes = [8, 2], strides = [1, 1]} : vector<16x2xf32> to vector<8x2xf32>
    %51 = vector.extract_strided_slice %49 {offsets = [8, 0], sizes = [8, 2], strides = [1, 1]} : vector<16x2xf32> to vector<8x2xf32>
    %52 = arith.maximumf %50, %51 : vector<8x2xf32>
    %53 = arith.subf %50, %52 : vector<8x2xf32>
    %54 = math.exp %53 : vector<8x2xf32>
    %55 = arith.subf %51, %52 : vector<8x2xf32>
    %56 = math.exp %55 : vector<8x2xf32>
    %57 = arith.addf %54, %56 : vector<8x2xf32>
    %58 = tpu.reciprocal %57 {approx = true} : vector<8x2xf32> -> vector<8x2xf32>
    %59 = arith.mulf %54, %58 : vector<8x2xf32>
    %c0_38 = arith.constant 0 : index
    %c0_39 = arith.constant 0 : index
    %60 = vector.load %arg4[%c0_38, %c0_39] : memref<2x512xf32, #tpu.memory_space<vmem>>, vector<2x512xf32>
    %cst_40 = arith.constant dense<0.000000e+00> : vector<8x512xf32>
    %61 = tpu.matmul %59, %60, %cst_40 {dimension_numbers = #tpu.dot_dimension_numbers<[1], [0], [0], [1], [0, 0, 1, 1], [], []>} : vector<8x2xf32>, vector<2x512xf32>, vector<8x512xf32> -> vector<8x512xf32>
    %62 = arith.mulf %61, %7 : vector<8x512xf32>
    %cst_41 = arith.constant 1.000000e+00 : f32
    %63 = vector.broadcast %cst_41 : f32 to vector<8x512xf32>
    %64 = arith.subf %63, %61 : vector<8x512xf32>
    %65 = arith.mulf %64, %33 : vector<8x512xf32>
    %66 = arith.addf %62, %65 : vector<8x512xf32>
    %cst_42 = arith.constant dense<0.000000e+00> : vector<8x2xf32>
    %67 = tpu.matmul %66, %34, %cst_42 {dimension_numbers = #tpu.dot_dimension_numbers<[1], [0], [0], [1], [0, 0, 1, 1], [], []>} : vector<8x512xf32>, vector<512x2xf32>, vector<8x2xf32> -> vector<8x2xf32>
    %c0_43 = arith.constant 0 : index
    %c0_44 = arith.constant 0 : index
    %68 = vector.load %arg15[%c0_43, %c0_44] : memref<5x8xf32, #tpu.memory_space<vmem>>, vector<5x8xf32>
    %c0_45 = arith.constant 0 : index
    %c0_46 = arith.constant 0 : index
    %69 = vector.load %arg16[%c0_45, %c0_46] : memref<5x1xf32, #tpu.memory_space<vmem>>, vector<5x1xf32>
    %cst_47 = arith.constant dense<0.000000e+00> : vector<5x2xf32>
    %70 = tpu.matmul %68, %35, %cst_47 {dimension_numbers = #tpu.dot_dimension_numbers<[1], [0], [0], [1], [0, 0, 1, 1], [], []>} : vector<5x8xf32>, vector<8x2xf32>, vector<5x2xf32> -> vector<5x2xf32>
    %71 = vector.broadcast %69 : vector<5x1xf32> to vector<5x2xf32>
    %72 = arith.addf %70, %71 : vector<5x2xf32>
    %c0_48 = arith.constant 0 : index
    %c0_49 = arith.constant 0 : index
    %73 = vector.load %arg17[%c0_48, %c0_49] : memref<5x2xf32, #tpu.memory_space<vmem>>, vector<5x2xf32>
    tpu.vector_store %arg17[%c0_48, %c0_49], %72 {strides = array<i32>} : memref<5x2xf32, #tpu.memory_space<vmem>>, vector<5x2xf32>,
    %cst_50 = arith.constant dense<0.000000e+00> : vector<5x2xf32>
    %74 = tpu.matmul %68, %36, %cst_50 {dimension_numbers = #tpu.dot_dimension_numbers<[1], [0], [0], [1], [0, 0, 1, 1], [], []>} : vector<5x8xf32>, vector<8x2xf32>, vector<5x2xf32> -> vector<5x2xf32>
    %75 = vector.broadcast %69 : vector<5x1xf32> to vector<5x2xf32>
    %76 = arith.addf %74, %75 : vector<5x2xf32>
    %c0_51 = arith.constant 0 : index
    %c0_52 = arith.constant 0 : index
    %77 = vector.load %arg18[%c0_51, %c0_52] : memref<5x2xf32, #tpu.memory_space<vmem>>, vector<5x2xf32>
    tpu.vector_store %arg18[%c0_51, %c0_52], %76 {strides = array<i32>} : memref<5x2xf32, #tpu.memory_space<vmem>>, vector<5x2xf32>,
    %cst_53 = arith.constant dense<0.000000e+00> : vector<5x2xf32>
    %78 = tpu.matmul %68, %67, %cst_53 {dimension_numbers = #tpu.dot_dimension_numbers<[1], [0], [0], [1], [0, 0, 1, 1], [], []>} : vector<5x8xf32>, vector<8x2xf32>, vector<5x2xf32> -> vector<5x2xf32>
    %79 = vector.broadcast %69 : vector<5x1xf32> to vector<5x2xf32>
    %80 = arith.addf %78, %79 : vector<5x2xf32>
    %c0_54 = arith.constant 0 : index
    %c0_55 = arith.constant 0 : index
    %81 = vector.load %arg19[%c0_54, %c0_55] : memref<5x2xf32, #tpu.memory_space<vmem>>, vector<5x2xf32>
    tpu.vector_store %arg19[%c0_54, %c0_55], %80 {strides = array<i32>} : memref<5x2xf32, #tpu.memory_space<vmem>>, vector<5x2xf32>,
    return
  }
}

</mosaic_0001>

<llo_original>
// kernel: _lambda_.1
$region0: #{_lambda_.1}
  #allocation0 [shape = 'u32[]', space=smem, size = 0x4, offset = 0x4, fixed_abs, tag = 'smem constant byte address 0x4 - core index']
  #allocation1 [shape = 'u32[144,128]{1,0:T(1,128)}', space=vmem, size = 0x12000, scoped, tag = 'internal scratch']
  %s0 = inlined_call_operand.vmem [shape: f32[27,512], index: 0, kind: input, shape index: {}]
  %s1 = inlined_call_operand.hbm [shape: f32[512,1152], index: 1, kind: input, shape index: {}]
  %s2 = inlined_call_operand.vmem [shape: f32[128,512], index: 2, kind: input, shape index: {}]
  %s3 = inlined_call_operand.vmem [shape: f32[512,2], index: 3, kind: input, shape index: {}]
  %s4 = inlined_call_operand.hbm [shape: f32[2,512], index: 4, kind: input, shape index: {}]
  %s5 = inlined_call_operand.hbm [shape: f32[8,27], index: 5, kind: input, shape index: {}]
  %s6 = inlined_call_operand.hbm [shape: f32[8,1], index: 6, kind: input, shape index: {}]
  %s7 = inlined_call_operand.hbm [shape: f32[16,72], index: 7, kind: input, shape index: {}]
  %s8 = inlined_call_operand.hbm [shape: f32[16,1], index: 8, kind: input, shape index: {}]
  %s9 = inlined_call_operand.hbm [shape: f32[8,16], index: 9, kind: input, shape index: {}]
  %s10 = inlined_call_operand.hbm [shape: f32[8,1], index: 10, kind: input, shape index: {}]
  %s11 = inlined_call_operand.hbm [shape: f32[32,8], index: 11, kind: input, shape index: {}]
  %s12 = inlined_call_operand.hbm [shape: f32[32,1], index: 12, kind: input, shape index: {}]
  %s13 = inlined_call_operand.hbm [shape: f32[16,32], index: 13, kind: input, shape index: {}]
  %s14 = inlined_call_operand.hbm [shape: f32[16,1], index: 14, kind: input, shape index: {}]
  %s15 = inlined_call_operand.hbm [shape: f32[5,8], index: 15, kind: input, shape index: {}]
  %s16 = inlined_call_operand.hbm [shape: f32[5,1], index: 16, kind: input, shape index: {}]
  %s17 = inlined_call_operand.vmem [shape: f32[5,2], index: 17, kind: output, shape index: {0}]
  %s18 = inlined_call_operand.vmem [shape: f32[5,2], index: 18, kind: output, shape index: {1}]
  %s19 = inlined_call_operand.vmem [shape: f32[5,2], index: 19, kind: output, shape index: {2}]
  %20 = xla_tuple %s17, %s18, %s19
  %s21 = sld [smem:[#allocation0]]
  $region150: #{_lambda_.1} parent=0
    _
  %s23 = ssub.s32 1, %s21
  %s24 = scalar_select 0, %s23, %s21
  $region1: #{_lambda_.1} parent=0
    #allocation2 [shape = 'u8[2359296]{0}', space=vmem, size = 0x240000, scoped, tag = 'input window, operand 1, single buffered']
    #allocation3 [shape = 's32[1]{0}', space=sflag, size = 0x4, scoped, tag = 'scoped memory for _lambda_.1']
    #allocation4 [shape = 'u8[4096]{0}', space=vmem, size = 0x1000, scoped, tag = 'input window, operand 4, single buffered']
    #allocation5 [shape = 's32[1]{0}', space=sflag, size = 0x4, scoped, tag = 'scoped memory for _lambda_.1']
    #allocation6 [shape = 'u8[4096]{0}', space=vmem, size = 0x1000, scoped, tag = 'input window, operand 5, single buffered']
    #allocation7 [shape = 'u8[4096]{0}', space=vmem, size = 0x1000, scoped, tag = 'input window, operand 6, single buffered']
    #allocation8 [shape = 's32[1]{0}', space=sflag, size = 0x4, scoped, tag = 'scoped memory for _lambda_.1']
    #allocation9 [shape = 'u8[8192]{0}', space=vmem, size = 0x2000, scoped, tag = 'input window, operand 7, single buffered']
    #allocation10 [shape = 'u8[8192]{0}', space=vmem, size = 0x2000, scoped, tag = 'input window, operand 8, single buffered']
    #allocation11 [shape = 's32[1]{0}', space=sflag, size = 0x4, scoped, tag = 'scoped memory for _lambda_.1']
    #allocation12 [shape = 'u8[4096]{0}', space=vmem, size = 0x1000, scoped, tag = 'input window, operand 9, single buffered']
    #allocation13 [shape = 'u8[4096]{0}', space=vmem, size = 0x1000, scoped, tag = 'input window, operand 10, single buffered']
    #allocation14 [shape = 's32[1]{0}', space=sflag, size = 0x4, scoped, tag = 'scoped memory for _lambda_.1']
    #allocation15 [shape = 'u8[16384]{0}', space=vmem, size = 0x4000, scoped, tag = 'input window, operand 11, single buffered']
    #allocation16 [shape = 'u8[16384]{0}', space=vmem, size = 0x4000, scoped, tag = 'input window, operand 12, single buffered']
    #allocation17 [shape = 's32[1]{0}', space=sflag, size = 0x4, scoped, tag = 'scoped memory for _lambda_.1']
    #allocation18 [shape = 'u8[8192]{0}', space=vmem, size = 0x2000, scoped, tag = 'input window, operand 13, single buffered']
    #allocation19 [shape = 'u8[8192]{0}', space=vmem, size = 0x2000, scoped, tag = 'input window, operand 14, single buffered']
    #allocation20 [shape = 's32[1]{0}', space=sflag, size = 0x4, scoped, tag = 'scoped memory for _lambda_.1']
    #allocation21 [shape = 'u8[4096]{0}', space=vmem, size = 0x1000, scoped, tag = 'input window, operand 15, single buffered']
    #allocation22 [shape = 'u8[4096]{0}', space=vmem, size = 0x1000, scoped, tag = 'input window, operand 16, single buffered']
    #allocation23 [shape = 's32[1]{0}', space=sflag, size = 0x4, scoped, tag = 'scoped memory for _lambda_.1']
    %25 = vsyncpa [#allocation3], 0
    %26 = vsyncpa [#allocation5], 0
    %27 = vsyncpa [#allocation8], 0
    %28 = vsyncpa [#allocation11], 0
    %29 = vsyncpa [#allocation14], 0
    %30 = vsyncpa [#allocation17], 0
    %31 = vsyncpa [#allocation20], 0
    %32 = vsyncpa [#allocation23], 0
    // Predicated region
    $region2: #{_lambda_.1} parent=1 // pred_check
      _
    $region3: #{_lambda_.1} parent=1 // pred_check_branch
      %34 = sbr.rel (0) target = $region5
    $region4: #{_lambda_.1} parent=1 // pred_region
      _
    $region5: #{_lambda_.1} parent=1 // pred_fallthru
      _
    // Predicated region
    $region6: #{_lambda_.1} parent=1 // pred_check
      _
    $region7: #{_lambda_.1} parent=1 // pred_check_branch
      %36 = sbr.rel (0) target = $region9
    $region8: #{_lambda_.1} parent=1 // pred_region
      %s38 = ssub.s32 73728, 73728
      %39 = vsyncadd [#allocation3], %s38
      %s40 = sshll.u32 [#allocation2], 4
      %s41 = int_to_ptr.vmem [resolvable:$true] %s40
      %46 = dma.hbm_to_vmem [thread:$0]  %s1, 73728, %s41, [#allocation3], 1152, 1152, 72
    $region9: #{_lambda_.1} parent=1 // pred_fallthru
      _
    // Predicated region
    $region10: #{_lambda_.1} parent=1 // pred_check
      _
    $region11: #{_lambda_.1} parent=1 // pred_check_branch
      %48 = sbr.rel (0) target = $region13
    $region12: #{_lambda_.1} parent=1 // pred_region
      _
    $region13: #{_lambda_.1} parent=1 // pred_fallthru
      _
    // Predicated region
    $region14: #{_lambda_.1} parent=1 // pred_check
      _
    $region15: #{_lambda_.1} parent=1 // pred_check_branch
      %50 = sbr.rel (0) target = $region17
    $region16: #{_lambda_.1} parent=1 // pred_region
      _
    $region17: #{_lambda_.1} parent=1 // pred_fallthru
      _
    // Predicated region
    $region18: #{_lambda_.1} parent=1 // pred_check
      _
    $region19: #{_lambda_.1} parent=1 // pred_check_branch
      %52 = sbr.rel (0) target = $region21
    $region20: #{_lambda_.1} parent=1 // pred_region
      %s54 = ssub.s32 128, 128
      %55 = vsyncadd [#allocation5], %s54
      %s57 = sshll.u32 [#allocation4], 4
      %s58 = int_to_ptr.vmem [resolvable:$true] %s57
      %60 = dma.hbm_to_vmem [thread:$0]  %s4, 128, %s58, [#allocation5]
    $region21: #{_lambda_.1} parent=1 // pred_fallthru
      _
    // Predicated region
    $region22: #{_lambda_.1} parent=1 // pred_check
      _
    $region23: #{_lambda_.1} parent=1 // pred_check_branch
      %62 = sbr.rel (0) target = $region25
    $region24: #{_lambda_.1} parent=1 // pred_region
      %s64 = ssub.s32 128, 128
      %65 = vsyncadd [#allocation5], %s64
      %s67 = sshll.u32 [#allocation6], 4
      %s68 = int_to_ptr.vmem [resolvable:$true] %s67
      %70 = dma.hbm_to_vmem [thread:$0]  %s5, 128, %s68, [#allocation5]
    $region25: #{_lambda_.1} parent=1 // pred_fallthru
      _
    // Predicated region
    $region26: #{_lambda_.1} parent=1 // pred_check
      _
    $region27: #{_lambda_.1} parent=1 // pred_check_branch
      %72 = sbr.rel (0) target = $region29
    $region28: #{_lambda_.1} parent=1 // pred_region
      %s74 = ssub.s32 128, 128
      %75 = vsyncadd [#allocation8], %s74
      %s77 = sshll.u32 [#allocation7], 4
      %s78 = int_to_ptr.vmem [resolvable:$true] %s77
      %80 = dma.hbm_to_vmem [thread:$0]  %s6, 128, %s78, [#allocation8]
    $region29: #{_lambda_.1} parent=1 // pred_fallthru
      _
    // Predicated region
    $region30: #{_lambda_.1} parent=1 // pred_check
      _
    $region31: #{_lambda_.1} parent=1 // pred_check_branch
      %82 = sbr.rel (0) target = $region33
    $region32: #{_lambda_.1} parent=1 // pred_region
      %s84 = ssub.s32 256, 256
      %85 = vsyncadd [#allocation8], %s84
      %s86 = sshll.u32 [#allocation9], 4
      %s87 = int_to_ptr.vmem [resolvable:$true] %s86
      %92 = dma.hbm_to_vmem [thread:$0]  %s7, 256, %s87, [#allocation8], 128, 128, 8
    $region33: #{_lambda_.1} parent=1 // pred_fallthru
      _
    // Predicated region
    $region34: #{_lambda_.1} parent=1 // pred_check
      _
    $region35: #{_lambda_.1} parent=1 // pred_check_branch
      %94 = sbr.rel (0) target = $region37
    $region36: #{_lambda_.1} parent=1 // pred_region
      %s96 = ssub.s32 256, 256
      %97 = vsyncadd [#allocation11], %s96
      %s98 = sshll.u32 [#allocation10], 4
      %s99 = int_to_ptr.vmem [resolvable:$true] %s98
      %104 = dma.hbm_to_vmem [thread:$0]  %s8, 256, %s99, [#allocation11], 128, 128, 8
    $region37: #{_lambda_.1} parent=1 // pred_fallthru
      _
    // Predicated region
    $region38: #{_lambda_.1} parent=1 // pred_check
      _
    $region39: #{_lambda_.1} parent=1 // pred_check_branch
      %106 = sbr.rel (0) target = $region41
    $region40: #{_lambda_.1} parent=1 // pred_region
      %s108 = ssub.s32 128, 128
      %109 = vsyncadd [#allocation11], %s108
      %s111 = sshll.u32 [#allocation12], 4
      %s112 = int_to_ptr.vmem [resolvable:$true] %s111
      %114 = dma.hbm_to_vmem [thread:$0]  %s9, 128, %s112, [#allocation11]
    $region41: #{_lambda_.1} parent=1 // pred_fallthru
      _
    // Predicated region
    $region42: #{_lambda_.1} parent=1 // pred_check
      _
    $region43: #{_lambda_.1} parent=1 // pred_check_branch
      %116 = sbr.rel (0) target = $region45
    $region44: #{_lambda_.1} parent=1 // pred_region
      %s118 = ssub.s32 128, 128
      %119 = vsyncadd [#allocation14], %s118
      %s121 = sshll.u32 [#allocation13], 4
      %s122 = int_to_ptr.vmem [resolvable:$true] %s121
      %124 = dma.hbm_to_vmem [thread:$0]  %s10, 128, %s122, [#allocation14]
    $region45: #{_lambda_.1} parent=1 // pred_fallthru
      _
    // Predicated region
    $region46: #{_lambda_.1} parent=1 // pred_check
      _
    $region47: #{_lambda_.1} parent=1 // pred_check_branch
      %126 = sbr.rel (0) target = $region49
    $region48: #{_lambda_.1} parent=1 // pred_region
      %s128 = ssub.s32 512, 512
      %129 = vsyncadd [#allocation14], %s128
      %s130 = sshll.u32 [#allocation15], 4
      %s131 = int_to_ptr.vmem [resolvable:$true] %s130
      %136 = dma.hbm_to_vmem [thread:$0]  %s11, 512, %s131, [#allocation14], 128, 128, 8
    $region49: #{_lambda_.1} parent=1 // pred_fallthru
      _
    // Predicated region
    $region50: #{_lambda_.1} parent=1 // pred_check
      _
    $region51: #{_lambda_.1} parent=1 // pred_check_branch
      %138 = sbr.rel (0) target = $region53
    $region52: #{_lambda_.1} parent=1 // pred_region
      %s140 = ssub.s32 512, 512
      %141 = vsyncadd [#allocation17], %s140
      %s142 = sshll.u32 [#allocation16], 4
      %s143 = int_to_ptr.vmem [resolvable:$true] %s142
      %148 = dma.hbm_to_vmem [thread:$0]  %s12, 512, %s143, [#allocation17], 128, 128, 8
    $region53: #{_lambda_.1} parent=1 // pred_fallthru
      _
    // Predicated region
    $region54: #{_lambda_.1} parent=1 // pred_check
      _
    $region55: #{_lambda_.1} parent=1 // pred_check_branch
      %150 = sbr.rel (0) target = $region57
    $region56: #{_lambda_.1} parent=1 // pred_region
      %s152 = ssub.s32 256, 256
      %153 = vsyncadd [#allocation17], %s152
      %s154 = sshll.u32 [#allocation18], 4
      %s155 = int_to_ptr.vmem [resolvable:$true] %s154
      %160 = dma.hbm_to_vmem [thread:$0]  %s13, 256, %s155, [#allocation17], 128, 128, 8
    $region57: #{_lambda_.1} parent=1 // pred_fallthru
      _
    // Predicated region
    $region58: #{_lambda_.1} parent=1 // pred_check
      _
    $region59: #{_lambda_.1} parent=1 // pred_check_branch
      %162 = sbr.rel (0) target = $region61
    $region60: #{_lambda_.1} parent=1 // pred_region
      %s164 = ssub.s32 256, 256
      %165 = vsyncadd [#allocation20], %s164
      %s166 = sshll.u32 [#allocation19], 4
      %s167 = int_to_ptr.vmem [resolvable:$true] %s166
      %172 = dma.hbm_to_vmem [thread:$0]  %s14, 256, %s167, [#allocation20], 128, 128, 8
    $region61: #{_lambda_.1} parent=1 // pred_fallthru
      _
    // Predicated region
    $region62: #{_lambda_.1} parent=1 // pred_check
      _
    $region63: #{_lambda_.1} parent=1 // pred_check_branch
      %174 = sbr.rel (0) target = $region65
    $region64: #{_lambda_.1} parent=1 // pred_region
      %s176 = ssub.s32 128, 128
      %177 = vsyncadd [#allocation20], %s176
      %s179 = sshll.u32 [#allocation21], 4
      %s180 = int_to_ptr.vmem [resolvable:$true] %s179
      %182 = dma.hbm_to_vmem [thread:$0]  %s15, 128, %s180, [#allocation20]
    $region65: #{_lambda_.1} parent=1 // pred_fallthru
      _
    // Predicated region
    $region66: #{_lambda_.1} parent=1 // pred_check
      _
    $region67: #{_lambda_.1} parent=1 // pred_check_branch
      %184 = sbr.rel (0) target = $region69
    $region68: #{_lambda_.1} parent=1 // pred_region
      %s186 = ssub.s32 128, 128
      %187 = vsyncadd [#allocation23], %s186
      %s189 = sshll.u32 [#allocation22], 4
      %s190 = int_to_ptr.vmem [resolvable:$true] %s189
      %192 = dma.hbm_to_vmem [thread:$0]  %s16, 128, %s190, [#allocation23]
    $region69: #{_lambda_.1} parent=1 // pred_fallthru
      _
    // Predicated region
    $region70: #{_lambda_.1} parent=1 // pred_check
      _
    $region71: #{_lambda_.1} parent=1 // pred_check_branch
      %194 = sbr.rel (0) target = $region73
    $region72: #{_lambda_.1} parent=1 // pred_region
      %195 = dma.done [#allocation3], 73728
    $region73: #{_lambda_.1} parent=1 // pred_fallthru
      _
    // Predicated region
    $region74: #{_lambda_.1} parent=1 // pred_check
      _
    $region75: #{_lambda_.1} parent=1 // pred_check_branch
      %197 = sbr.rel (0) target = $region77
    $region76: #{_lambda_.1} parent=1 // pred_region
      %198 = dma.done [#allocation5], 128
    $region77: #{_lambda_.1} parent=1 // pred_fallthru
      _
    // Predicated region
    $region78: #{_lambda_.1} parent=1 // pred_check
      _
    $region79: #{_lambda_.1} parent=1 // pred_check_branch
      %200 = sbr.rel (0) target = $region81
    $region80: #{_lambda_.1} parent=1 // pred_region
      %201 = dma.done [#allocation5], 128
    $region81: #{_lambda_.1} parent=1 // pred_fallthru
      _
    // Predicated region
    $region82: #{_lambda_.1} parent=1 // pred_check
      _
    $region83: #{_lambda_.1} parent=1 // pred_check_branch
      %203 = sbr.rel (0) target = $region85
    $region84: #{_lambda_.1} parent=1 // pred_region
      %204 = dma.done [#allocation8], 128
    $region85: #{_lambda_.1} parent=1 // pred_fallthru
      _
    // Predicated region
    $region86: #{_lambda_.1} parent=1 // pred_check
      _
    $region87: #{_lambda_.1} parent=1 // pred_check_branch
      %206 = sbr.rel (0) target = $region89
    $region88: #{_lambda_.1} parent=1 // pred_region
      %207 = dma.done [#allocation8], 256
    $region89: #{_lambda_.1} parent=1 // pred_fallthru
      _
    // Predicated region
    $region90: #{_lambda_.1} parent=1 // pred_check
      _
    $region91: #{_lambda_.1} parent=1 // pred_check_branch
      %209 = sbr.rel (0) target = $region93
    $region92: #{_lambda_.1} parent=1 // pred_region
      %210 = dma.done [#allocation11], 256
    $region93: #{_lambda_.1} parent=1 // pred_fallthru
      _
    // Predicated region
    $region94: #{_lambda_.1} parent=1 // pred_check
      _
    $region95: #{_lambda_.1} parent=1 // pred_check_branch
      %212 = sbr.rel (0) target = $region97
    $region96: #{_lambda_.1} parent=1 // pred_region
      %213 = dma.done [#allocation11], 128
    $region97: #{_lambda_.1} parent=1 // pred_fallthru
      _
    // Predicated region
    $region98: #{_lambda_.1} parent=1 // pred_check
      _
    $region99: #{_lambda_.1} parent=1 // pred_check_branch
      %215 = sbr.rel (0) target = $region101
    $region100: #{_lambda_.1} parent=1 // pred_region
      %216 = dma.done [#allocation14], 128
    $region101: #{_lambda_.1} parent=1 // pred_fallthru
      _
    // Predicated region
    $region102: #{_lambda_.1} parent=1 // pred_check
      _
    $region103: #{_lambda_.1} parent=1 // pred_check_branch
      %218 = sbr.rel (0) target = $region105
    $region104: #{_lambda_.1} parent=1 // pred_region
      %219 = dma.done [#allocation14], 512
    $region105: #{_lambda_.1} parent=1 // pred_fallthru
      _
    // Predicated region
    $region106: #{_lambda_.1} parent=1 // pred_check
      _
    $region107: #{_lambda_.1} parent=1 // pred_check_branch
      %221 = sbr.rel (0) target = $region109
    $region108: #{_lambda_.1} parent=1 // pred_region
      %222 = dma.done [#allocation17], 512
    $region109: #{_lambda_.1} parent=1 // pred_fallthru
      _
    // Predicated region
    $region110: #{_lambda_.1} parent=1 // pred_check
      _
    $region111: #{_lambda_.1} parent=1 // pred_check_branch
      %224 = sbr.rel (0) target = $region113
    $region112: #{_lambda_.1} parent=1 // pred_region
      %225 = dma.done [#allocation17], 256
    $region113: #{_lambda_.1} parent=1 // pred_fallthru
      _
    // Predicated region
    $region114: #{_lambda_.1} parent=1 // pred_check
      _
    $region115: #{_lambda_.1} parent=1 // pred_check_branch
      %227 = sbr.rel (0) target = $region117
    $region116: #{_lambda_.1} parent=1 // pred_region
      %228 = dma.done [#allocation20], 256
    $region117: #{_lambda_.1} parent=1 // pred_fallthru
      _
    // Predicated region
    $region118: #{_lambda_.1} parent=1 // pred_check
      _
    $region119: #{_lambda_.1} parent=1 // pred_check_branch
      %230 = sbr.rel (0) target = $region121
    $region120: #{_lambda_.1} parent=1 // pred_region
      %231 = dma.done [#allocation20], 128
    $region121: #{_lambda_.1} parent=1 // pred_fallthru
      _
    // Predicated region
    $region122: #{_lambda_.1} parent=1 // pred_check
      _
    $region123: #{_lambda_.1} parent=1 // pred_check_branch
      %233 = sbr.rel (0) target = $region125
    $region124: #{_lambda_.1} parent=1 // pred_region
      %234 = dma.done [#allocation23], 128
    $region125: #{_lambda_.1} parent=1 // pred_fallthru
      _
    %v235 = vld [vmem:[#allocation6] sm:$0xff]
    %v236 = vld [vmem:[%s0] sm:$0xff]
    %v237 = vld [vmem:[%s0 + $0x8] sm:$0xff]
    %v238 = vld [vmem:[%s0 + $0x10] sm:$0xff]
    %v239 = vld [vmem:[%s0 + $0x18] sm:$0xff]
    %v240 = vld [vmem:[%s0 + $0x20] sm:$0xff]
    %v241 = vld [vmem:[%s0 + $0x28] sm:$0xff]
    %v242 = vld [vmem:[%s0 + $0x30] sm:$0xff]
    %v243 = vld [vmem:[%s0 + $0x38] sm:$0xff]
    %v244 = vld [vmem:[%s0 + $0x40] sm:$0xff]
    %v245 = vld [vmem:[%s0 + $0x48] sm:$0xff]
    %v246 = vld [vmem:[%s0 + $0x50] sm:$0xff]
    %v247 = vld [vmem:[%s0 + $0x58] sm:$0xff]
    %v248 = vld [vmem:[%s0 + $0x60] sm:$0x7]
    %v249 = vld [vmem:[%s0 + $0x68] sm:$0x7]
    %v250 = vld [vmem:[%s0 + $0x70] sm:$0x7]
    %v251 = vld [vmem:[%s0 + $0x78] sm:$0x7]
    %v252 = vld [vmem:[#allocation7] sm:$0xff]
    %254 = vset.pattern.permute.xlu0 0
    %255 = vperm.xlu0 %254, %v252
    %v256 = vpop.permute.xlu0 %255
    %vm258 = vcmask 220160
    %v260 = vsel %vm258, %v235, 0
    %vm262 = vcmask 1042432
    %v264 = vsel %vm262, %v248, 0
    %v267 = vsel %vm262, %v249, 0
    %v270 = vsel %vm262, %v250, 0
    %v273 = vsel %vm262, %v251, 0
    %275 = vmatprep.subr.mxu0 0.0
    %276 = vmatpush1.msra.mxu0 0.0
    %277 = vmatprep.subr.mxu0 0.0
    %278 = vmatpush1.msra.mxu0 0.0
    %279 = vmatprep.subr.mxu0 0.0
    %280 = vmatpush1.msra.mxu0 0.0
    %281 = vmatprep.subr.mxu0 0.0
    %282 = vmatpush1.msra.mxu0 0.0
    %283 = vmatprep.subr.mxu0 0.0
    %284 = vmatpush1.msra.mxu0 0.0
    %285 = vmatprep.subr.mxu0 0.0
    %286 = vmatpush1.msra.mxu0 0.0
    %287 = vmatprep.subr.mxu0 0.0
    %288 = vmatpush1.msra.mxu0 0.0
    %289 = vmatprep.subr.mxu0 0.0
    %290 = vmatpush1.msra.mxu0 0.0
    %291 = vmatprep.subr.mxu0 0.0
    %292 = vmatpush1.msra.mxu0 0.0
    %293 = vmatprep.subr.mxu0 0.0
    %294 = vmatpush1.msra.mxu0 0.0
    %295 = vmatprep.subr.mxu0 0.0
    %296 = vmatpush1.msra.mxu0 0.0
    %297 = vmatprep.subr.mxu0 0.0
    %298 = vmatpush1.msra.mxu0 0.0
    %299 = vmatprep.subr.mxu0 %v267
    %300 = vmatpush1.msra.mxu0 %v264
    %301 = vmatprep.subr.mxu0 %v245
    %302 = vmatpush1.msra.mxu0 %v244
    %303 = vmatprep.subr.mxu0 %v241
    %304 = vmatpush1.msra.mxu0 %v240
    %305 = vmatprep.subr.mxu0 %v237
    %306 = vmatpush1.msra.mxu0 %v236
    %307 = vmatprep.subr.mxu0 0.0
    %308 = vmatpush2.msra.mxu0 0.0
    %309 = vmatprep.subr.mxu0 0.0
    %310 = vmatpush2.msra.mxu0 0.0
    %311 = vmatprep.subr.mxu0 0.0
    %312 = vmatpush2.msra.mxu0 0.0
    %313 = vmatprep.subr.mxu0 0.0
    %314 = vmatpush2.msra.mxu0 0.0
    %315 = vmatprep.subr.mxu0 0.0
    %316 = vmatpush2.msra.mxu0 0.0
    %317 = vmatprep.subr.mxu0 0.0
    %318 = vmatpush2.msra.mxu0 0.0
    %319 = vmatprep.subr.mxu0 0.0
    %320 = vmatpush2.msra.mxu0 0.0
    %321 = vmatprep.subr.mxu0 0.0
    %322 = vmatpush2.msra.mxu0 0.0
    %323 = vmatprep.subr.mxu0 0.0
    %324 = vmatpush2.msra.mxu0 0.0
    %325 = vmatprep.subr.mxu0 0.0
    %326 = vmatpush2.msra.mxu0 0.0
    %327 = vmatprep.subr.mxu0 0.0
    %328 = vmatpush2.msra.mxu0 0.0
    %329 = vmatprep.subr.mxu0 0.0
    %330 = vmatpush2.msra.mxu0 0.0
    %331 = vmatprep.subr.mxu0 0.0
    %332 = vmatpush2.msra.mxu0 0.0
    %333 = vmatprep.subr.mxu0 0.0
    %334 = vmatpush2.msra.mxu0 0.0
    %335 = vmatprep.subr.mxu0 0.0
    %336 = vmatpush2.msra.mxu0 0.0
    %337 = vmatprep.subr.mxu0 0.0
    %338 = vmatpush2.msra.mxu0 0.0
    %339 = vmatprep.mubr.f32.mxu0 0.0
    %340 = vmatmul.mubr.f32.gmra.mxu0 %v260
    %v341 = vpop.f32.mrf.mxu0
    %v342 = vadd.f32 %v256, %v341
    %v343 = vpop.f32.mrf.mxu0
    %v344 = vadd.f32 %v256, %v343
    %345 = vdwg.mxu0
    %346 = vmatprep.subr.mxu0 0.0
    %347 = vmatpush1.msra.mxu0 0.0
    %348 = vmatprep.subr.mxu0 0.0
    %349 = vmatpush1.msra.mxu0 0.0
    %350 = vmatprep.subr.mxu0 0.0
    %351 = vmatpush1.msra.mxu0 0.0
    %352 = vmatprep.subr.mxu0 0.0
    %353 = vmatpush1.msra.mxu0 0.0
    %354 = vmatprep.subr.mxu0 0.0
    %355 = vmatpush1.msra.mxu0 0.0
    %356 = vmatprep.subr.mxu0 0.0
    %357 = vmatpush1.msra.mxu0 0.0
    %358 = vmatprep.subr.mxu0 0.0
    %359 = vmatpush1.msra.mxu0 0.0
    %360 = vmatprep.subr.mxu0 0.0
    %361 = vmatpush1.msra.mxu0 0.0
    %362 = vmatprep.subr.mxu0 0.0
    %363 = vmatpush1.msra.mxu0 0.0
    %364 = vmatprep.subr.mxu0 0.0
    %365 = vmatpush1.msra.mxu0 0.0
    %366 = vmatprep.subr.mxu0 0.0
    %367 = vmatpush1.msra.mxu0 0.0
    %368 = vmatprep.subr.mxu0 0.0
    %369 = vmatpush1.msra.mxu0 0.0
    %370 = vmatprep.subr.mxu0 %v273
    %371 = vmatpush1.msra.mxu0 %v270
    %372 = vmatprep.subr.mxu0 %v247
    %373 = vmatpush1.msra.mxu0 %v246
    %374 = vmatprep.subr.mxu0 %v243
    %375 = vmatpush1.msra.mxu0 %v242
    %376 = vmatprep.subr.mxu0 %v239
    %377 = vmatpush1.msra.mxu0 %v238
    %378 = vmatprep.subr.mxu0 0.0
    %379 = vmatpush2.msra.mxu0 0.0
    %380 = vmatprep.subr.mxu0 0.0
    %381 = vmatpush2.msra.mxu0 0.0
    %382 = vmatprep.subr.mxu0 0.0
    %383 = vmatpush2.msra.mxu0 0.0
    %384 = vmatprep.subr.mxu0 0.0
    %385 = vmatpush2.msra.mxu0 0.0
    %386 = vmatprep.subr.mxu0 0.0
    %387 = vmatpush2.msra.mxu0 0.0
    %388 = vmatprep.subr.mxu0 0.0
    %389 = vmatpush2.msra.mxu0 0.0
    %390 = vmatprep.subr.mxu0 0.0
    %391 = vmatpush2.msra.mxu0 0.0
    %392 = vmatprep.subr.mxu0 0.0
    %393 = vmatpush2.msra.mxu0 0.0
    %394 = vmatprep.subr.mxu0 0.0
    %395 = vmatpush2.msra.mxu0 0.0
    %396 = vmatprep.subr.mxu0 0.0
    %397 = vmatpush2.msra.mxu0 0.0
    %398 = vmatprep.subr.mxu0 0.0
    %399 = vmatpush2.msra.mxu0 0.0
    %400 = vmatprep.subr.mxu0 0.0
    %401 = vmatpush2.msra.mxu0 0.0
    %402 = vmatprep.subr.mxu0 0.0
    %403 = vmatpush2.msra.mxu0 0.0
    %404 = vmatprep.subr.mxu0 0.0
    %405 = vmatpush2.msra.mxu0 0.0
    %406 = vmatprep.subr.mxu0 0.0
    %407 = vmatpush2.msra.mxu0 0.0
    %408 = vmatprep.subr.mxu0 0.0
    %409 = vmatpush2.msra.mxu0 0.0
    %410 = vmatprep.mubr.f32.mxu0 0.0
    %411 = vmatmul.mubr.f32.gmra.mxu0 %v260
    %v412 = vpop.f32.mrf.mxu0
    %v413 = vadd.f32 %v256, %v412
    %v414 = vpop.f32.mrf.mxu0
    %v415 = vadd.f32 %v256, %v414
    %416 = vdwg.mxu0
    %v417 = vmax.f32 %v342, 0.0
    %v418 = vmax.f32 %v344, 0.0
    %v419 = vmax.f32 %v413, 0.0
    %v420 = vmax.f32 %v415, 0.0
    %v421 = vld [vmem:[#allocation2] sm:$0xff]
    %v422 = vld [vmem:[#allocation2 + $0x8] sm:$0xff]
    %v423 = vld [vmem:[#allocation2 + $0x10] sm:$0xff]
    %v424 = vld [vmem:[#allocation2 + $0x18] sm:$0xff]
    %v425 = vld [vmem:[#allocation2 + $0x20] sm:$0xff]
    %v426 = vld [vmem:[#allocation2 + $0x28] sm:$0xff]
    %v427 = vld [vmem:[#allocation2 + $0x30] sm:$0xff]
    %v428 = vld [vmem:[#allocation2 + $0x38] sm:$0xff]
    %v429 = vld [vmem:[#allocation2 + $0x40] sm:$0xff]
    %v430 = vld [vmem:[#allocation2 + $0x48] sm:$0xff]
    %v431 = vld [vmem:[#allocation2 + $0x50] sm:$0xff]
    %v432 = vld [vmem:[#allocation2 + $0x58] sm:$0xff]
    %v433 = vld [vmem:[#allocation2 + $0x60] sm:$0xff]
    %v434 = vld [vmem:[#allocation2 + $0x68] sm:$0xff]
    %v435 = vld [vmem:[#allocation2 + $0x70] sm:$0xff]
    %v436 = vld [vmem:[#allocation2 + $0x78] sm:$0xff]
    %v437 = vld [vmem:[#allocation2 + $0x80] sm:$0xff]
    %v438 = vld [vmem:[#allocation2 + $0x88] sm:$0xff]
    %v439 = vld [vmem:[#allocation2 + $0x90] sm:$0xff]
    %v440 = vld [vmem:[#allocation2 + $0x98] sm:$0xff]
    %v441 = vld [vmem:[#allocation2 + $0xa0] sm:$0xff]
    %v442 = vld [vmem:[#allocation2 + $0xa8] sm:$0xff]
    %v443 = vld [vmem:[#allocation2 + $0xb0] sm:$0xff]
    %v444 = vld [vmem:[#allocation2 + $0xb8] sm:$0xff]
    %v445 = vld [vmem:[#allocation2 + $0xc0] sm:$0xff]
    %v446 = vld [vmem:[#allocation2 + $0xc8] sm:$0xff]
    %v447 = vld [vmem:[#allocation2 + $0xd0] sm:$0xff]
    %v448 = vld [vmem:[#allocation2 + $0xd8] sm:$0xff]
    %v449 = vld [vmem:[#allocation2 + $0xe0] sm:$0xff]
    %v450 = vld [vmem:[#allocation2 + $0xe8] sm:$0xff]
    %v451 = vld [vmem:[#allocation2 + $0xf0] sm:$0xff]
    %v452 = vld [vmem:[#allocation2 + $0xf8] sm:$0xff]
    %v453 = vld [vmem:[#allocation2 + $0x100] sm:$0xff]
    %v454 = vld [vmem:[#allocation2 + $0x108] sm:$0xff]
    %v455 = vld [vmem:[#allocation2 + $0x110] sm:$0xff]
    %v456 = vld [vmem:[#allocation2 + $0x118] sm:$0xff]
    %v457 = vld [vmem:[#allocation2 + $0x120] sm:$0xff]
    %v458 = vld [vmem:[#allocation2 + $0x128] sm:$0xff]
    %v459 = vld [vmem:[#allocation2 + $0x130] sm:$0xff]
    %v460 = vld [vmem:[#allocation2 + $0x138] sm:$0xff]
    %v461 = vld [vmem:[#allocation2 + $0x140] sm:$0xff]
    %v462 = vld [vmem:[#allocation2 + $0x148] sm:$0xff]
    %v463 = vld [vmem:[#allocation2 + $0x150] sm:$0xff]
    %v464 = vld [vmem:[#allocation2 + $0x158] sm:$0xff]
    %v465 = vld [vmem:[#allocation2 + $0x160] sm:$0xff]
    %v466 = vld [vmem:[#allocation2 + $0x168] sm:$0xff]
    %v467 = vld [vmem:[#allocation2 + $0x170] sm:$0xff]
    %v468 = vld [vmem:[#allocation2 + $0x178] sm:$0xff]
    %v469 = vld [vmem:[#allocation2 + $0x180] sm:$0xff]
    %v470 = vld [vmem:[#allocation2 + $0x188] sm:$0xff]
    %v471 = vld [vmem:[#allocation2 + $0x190] sm:$0xff]
    %v472 = vld [vmem:[#allocation2 + $0x198] sm:$0xff]
    %v473 = vld [vmem:[#allocation2 + $0x1a0] sm:$0xff]
    %v474 = vld [vmem:[#allocation2 + $0x1a8] sm:$0xff]
    %v475 = vld [vmem:[#allocation2 + $0x1b0] sm:$0xff]
    %v476 = vld [vmem:[#allocation2 + $0x1b8] sm:$0xff]
    %v477 = vld [vmem:[#allocation2 + $0x1c0] sm:$0xff]
    %v478 = vld [vmem:[#allocation2 + $0x1c8] sm:$0xff]
    %v479 = vld [vmem:[#allocation2 + $0x1d0] sm:$0xff]
    %v480 = vld [vmem:[#allocation2 + $0x1d8] sm:$0xff]
    %v481 = vld [vmem:[#allocation2 + $0x1e0] sm:$0xff]
    %v482 = vld [vmem:[#allocation2 + $0x1e8] sm:$0xff]
    %v483 = vld [vmem:[#allocation2 + $0x1f0] sm:$0xff]
    %v484 = vld [vmem:[#allocation2 + $0x1f8] sm:$0xff]
    %v485 = vld [vmem:[#allocation2 + $0x200] sm:$0xff]
    %v486 = vld [vmem:[#allocation2 + $0x208] sm:$0xff]
    %v487 = vld [vmem:[#allocation2 + $0x210] sm:$0xff]
    %v488 = vld [vmem:[#allocation2 + $0x218] sm:$0xff]
    %v489 = vld [vmem:[#allocation2 + $0x220] sm:$0xff]
    %v490 = vld [vmem:[#allocation2 + $0x228] sm:$0xff]
    %v491 = vld [vmem:[#allocation2 + $0x230] sm:$0xff]
    %v492 = vld [vmem:[#allocation2 + $0x238] sm:$0xff]
    %v493 = vld [vmem:[#allocation2 + $0x240] sm:$0xff]
    %v494 = vld [vmem:[#allocation2 + $0x248] sm:$0xff]
    %v495 = vld [vmem:[#allocation2 + $0x250] sm:$0xff]
    %v496 = vld [vmem:[#allocation2 + $0x258] sm:$0xff]
    %v497 = vld [vmem:[#allocation2 + $0x260] sm:$0xff]
    %v498 = vld [vmem:[#allocation2 + $0x268] sm:$0xff]
    %v499 = vld [vmem:[#allocation2 + $0x270] sm:$0xff]
    %v500 = vld [vmem:[#allocation2 + $0x278] sm:$0xff]
    %v501 = vld [vmem:[#allocation2 + $0x280] sm:$0xff]
    %v502 = vld [vmem:[#allocation2 + $0x288] sm:$0xff]
    %v503 = vld [vmem:[#allocation2 + $0x290] sm:$0xff]
    %v504 = vld [vmem:[#allocation2 + $0x298] sm:$0xff]
    %v505 = vld [vmem:[#allocation2 + $0x2a0] sm:$0xff]
    %v506 = vld [vmem:[#allocation2 + $0x2a8] sm:$0xff]
    %v507 = vld [vmem:[#allocation2 + $0x2b0] sm:$0xff]
    %v508 = vld [vmem:[#allocation2 + $0x2b8] sm:$0xff]
    %v509 = vld [vmem:[#allocation2 + $0x2c0] sm:$0xff]
    %v510 = vld [vmem:[#allocation2 + $0x2c8] sm:$0xff]
    %v511 = vld [vmem:[#allocation2 + $0x2d0] sm:$0xff]
    %v512 = vld [vmem:[#allocation2 + $0x2d8] sm:$0xff]
    %v513 = vld [vmem:[#allocation2 + $0x2e0] sm:$0xff]
    %v514 = vld [vmem:[#allocation2 + $0x2e8] sm:$0xff]
    %v515 = vld [vmem:[#allocation2 + $0x2f0] sm:$0xff]
    %v516 = vld [vmem:[#allocation2 + $0x2f8] sm:$0xff]
    %v517 = vld [vmem:[#allocation2 + $0x300] sm:$0xff]
    %v518 = vld [vmem:[#allocation2 + $0x308] sm:$0xff]
    %v519 = vld [vmem:[#allocation2 + $0x310] sm:$0xff]
    %v520 = vld [vmem:[#allocation2 + $0x318] sm:$0xff]
    %v521 = vld [vmem:[#allocation2 + $0x320] sm:$0xff]
    %v522 = vld [vmem:[#allocation2 + $0x328] sm:$0xff]
    %v523 = vld [vmem:[#allocation2 + $0x330] sm:$0xff]
    %v524 = vld [vmem:[#allocation2 + $0x338] sm:$0xff]
    %v525 = vld [vmem:[#allocation2 + $0x340] sm:$0xff]
    %v526 = vld [vmem:[#allocation2 + $0x348] sm:$0xff]
    %v527 = vld [vmem:[#allocation2 + $0x350] sm:$0xff]
    %v528 = vld [vmem:[#allocation2 + $0x358] sm:$0xff]
    %v529 = vld [vmem:[#allocation2 + $0x360] sm:$0xff]
    %v530 = vld [vmem:[#allocation2 + $0x368] sm:$0xff]
    %v531 = vld [vmem:[#allocation2 + $0x370] sm:$0xff]
    %v532 = vld [vmem:[#allocation2 + $0x378] sm:$0xff]
    %v533 = vld [vmem:[#allocation2 + $0x380] sm:$0xff]
    %v534 = vld [vmem:[#allocation2 + $0x388] sm:$0xff]
    %v535 = vld [vmem:[#allocation2 + $0x390] sm:$0xff]
    %v536 = vld [vmem:[#allocation2 + $0x398] sm:$0xff]
    %v537 = vld [vmem:[#allocation2 + $0x3a0] sm:$0xff]
    %v538 = vld [vmem:[#allocation2 + $0x3a8] sm:$0xff]
    %v539 = vld [vmem:[#allocation2 + $0x3b0] sm:$0xff]
    %v540 = vld [vmem:[#allocation2 + $0x3b8] sm:$0xff]
    %v541 = vld [vmem:[#allocation2 + $0x3c0] sm:$0xff]
    %v542 = vld [vmem:[#allocation2 + $0x3c8] sm:$0xff]
    %v543 = vld [vmem:[#allocation2 + $0x3d0] sm:$0xff]
    %v544 = vld [vmem:[#allocation2 + $0x3d8] sm:$0xff]
    %v545 = vld [vmem:[#allocation2 + $0x3e0] sm:$0xff]
    %v546 = vld [vmem:[#allocation2 + $0x3e8] sm:$0xff]
    %v547 = vld [vmem:[#allocation2 + $0x3f0] sm:$0xff]
    %v548 = vld [vmem:[#allocation2 + $0x3f8] sm:$0xff]
    %v549 = vld [vmem:[#allocation2 + $0x400] sm:$0xff]
    %v550 = vld [vmem:[#allocation2 + $0x408] sm:$0xff]
    %v551 = vld [vmem:[#allocation2 + $0x410] sm:$0xff]
    %v552 = vld [vmem:[#allocation2 + $0x418] sm:$0xff]
    %v553 = vld [vmem:[#allocation2 + $0x420] sm:$0xff]
    %v554 = vld [vmem:[#allocation2 + $0x428] sm:$0xff]
    %v555 = vld [vmem:[#allocation2 + $0x430] sm:$0xff]
    %v556 = vld [vmem:[#allocation2 + $0x438] sm:$0xff]
    %v557 = vld [vmem:[#allocation2 + $0x440] sm:$0xff]
    %v558 = vld [vmem:[#allocation2 + $0x448] sm:$0xff]
    %v559 = vld [vmem:[#allocation2 + $0x450] sm:$0xff]
    %v560 = vld [vmem:[#allocation2 + $0x458] sm:$0xff]
    %v561 = vld [vmem:[#allocation2 + $0x460] sm:$0xff]
    %v562 = vld [vmem:[#allocation2 + $0x468] sm:$0xff]
    %v563 = vld [vmem:[#allocation2 + $0x470] sm:$0xff]
    %v564 = vld [vmem:[#allocation2 + $0x478] sm:$0xff]
    %v565 = vld [vmem:[#allocation2 + $0x480] sm:$0xff]
    %v566 = vld [vmem:[#allocation2 + $0x488] sm:$0xff]
    %v567 = vld [vmem:[#allocation2 + $0x490] sm:$0xff]
    %v568 = vld [vmem:[#allocation2 + $0x498] sm:$0xff]
    %v569 = vld [vmem:[#allocation2 + $0x4a0] sm:$0xff]
    %v570 = vld [vmem:[#allocation2 + $0x4a8] sm:$0xff]
    %v571 = vld [vmem:[#allocation2 + $0x4b0] sm:$0xff]
    %v572 = vld [vmem:[#allocation2 + $0x4b8] sm:$0xff]
    %v573 = vld [vmem:[#allocation2 + $0x4c0] sm:$0xff]
    %v574 = vld [vmem:[#allocation2 + $0x4c8] sm:$0xff]
    %v575 = vld [vmem:[#allocation2 + $0x4d0] sm:$0xff]
    %v576 = vld [vmem:[#allocation2 + $0x4d8] sm:$0xff]
    %v577 = vld [vmem:[#allocation2 + $0x4e0] sm:$0xff]
    %v578 = vld [vmem:[#allocation2 + $0x4e8] sm:$0xff]
    %v579 = vld [vmem:[#allocation2 + $0x4f0] sm:$0xff]
    %v580 = vld [vmem:[#allocation2 + $0x4f8] sm:$0xff]
    %v581 = vld [vmem:[#allocation2 + $0x500] sm:$0xff]
    %v582 = vld [vmem:[#allocation2 + $0x508] sm:$0xff]
    %v583 = vld [vmem:[#allocation2 + $0x510] sm:$0xff]
    %v584 = vld [vmem:[#allocation2 + $0x518] sm:$0xff]
    %v585 = vld [vmem:[#allocation2 + $0x520] sm:$0xff]
    %v586 = vld [vmem:[#allocation2 + $0x528] sm:$0xff]
    %v587 = vld [vmem:[#allocation2 + $0x530] sm:$0xff]
    %v588 = vld [vmem:[#allocation2 + $0x538] sm:$0xff]
    %v589 = vld [vmem:[#allocation2 + $0x540] sm:$0xff]
    %v590 = vld [vmem:[#allocation2 + $0x548] sm:$0xff]
    %v591 = vld [vmem:[#allocation2 + $0x550] sm:$0xff]
    %v592 = vld [vmem:[#allocation2 + $0x558] sm:$0xff]
    %v593 = vld [vmem:[#allocation2 + $0x560] sm:$0xff]
    %v594 = vld [vmem:[#allocation2 + $0x568] sm:$0xff]
    %v595 = vld [vmem:[#allocation2 + $0x570] sm:$0xff]
    %v596 = vld [vmem:[#allocation2 + $0x578] sm:$0xff]
    %v597 = vld [vmem:[#allocation2 + $0x580] sm:$0xff]
    %v598 = vld [vmem:[#allocation2 + $0x588] sm:$0xff]
    %v599 = vld [vmem:[#allocation2 + $0x590] sm:$0xff]
    %v600 = vld [vmem:[#allocation2 + $0x598] sm:$0xff]
    %v601 = vld [vmem:[#allocation2 + $0x5a0] sm:$0xff]
    %v602 = vld [vmem:[#allocation2 + $0x5a8] sm:$0xff]
    %v603 = vld [vmem:[#allocation2 + $0x5b0] sm:$0xff]
    %v604 = vld [vmem:[#allocation2 + $0x5b8] sm:$0xff]
    %v605 = vld [vmem:[#allocation2 + $0x5c0] sm:$0xff]
    %v606 = vld [vmem:[#allocation2 + $0x5c8] sm:$0xff]
    %v607 = vld [vmem:[#allocation2 + $0x5d0] sm:$0xff]
    %v608 = vld [vmem:[#allocation2 + $0x5d8] sm:$0xff]
    %v609 = vld [vmem:[#allocation2 + $0x5e0] sm:$0xff]
    %v610 = vld [vmem:[#allocation2 + $0x5e8] sm:$0xff]
    %v611 = vld [vmem:[#allocation2 + $0x5f0] sm:$0xff]
    %v612 = vld [vmem:[#allocation2 + $0x5f8] sm:$0xff]
    %v613 = vld [vmem:[#allocation2 + $0x600] sm:$0xff]
    %v614 = vld [vmem:[#allocation2 + $0x608] sm:$0xff]
    %v615 = vld [vmem:[#allocation2 + $0x610] sm:$0xff]
    %v616 = vld [vmem:[#allocation2 + $0x618] sm:$0xff]
    %v617 = vld [vmem:[#allocation2 + $0x620] sm:$0xff]
    %v618 = vld [vmem:[#allocation2 + $0x628] sm:$0xff]
    %v619 = vld [vmem:[#allocation2 + $0x630] sm:$0xff]
    %v620 = vld [vmem:[#allocation2 + $0x638] sm:$0xff]
    %v621 = vld [vmem:[#allocation2 + $0x640] sm:$0xff]
    %v622 = vld [vmem:[#allocation2 + $0x648] sm:$0xff]
    %v623 = vld [vmem:[#allocation2 + $0x650] sm:$0xff]
    %v624 = vld [vmem:[#allocation2 + $0x658] sm:$0xff]
    %v625 = vld [vmem:[#allocation2 + $0x660] sm:$0xff]
    %v626 = vld [vmem:[#allocation2 + $0x668] sm:$0xff]
    %v627 = vld [vmem:[#allocation2 + $0x670] sm:$0xff]
    %v628 = vld [vmem:[#allocation2 + $0x678] sm:$0xff]
    %v629 = vld [vmem:[#allocation2 + $0x680] sm:$0xff]
    %v630 = vld [vmem:[#allocation2 + $0x688] sm:$0xff]
    %v631 = vld [vmem:[#allocation2 + $0x690] sm:$0xff]
    %v632 = vld [vmem:[#allocation2 + $0x698] sm:$0xff]
    %v633 = vld [vmem:[#allocation2 + $0x6a0] sm:$0xff]
    %v634 = vld [vmem:[#allocation2 + $0x6a8] sm:$0xff]
    %v635 = vld [vmem:[#allocation2 + $0x6b0] sm:$0xff]
    %v636 = vld [vmem:[#allocation2 + $0x6b8] sm:$0xff]
    %v637 = vld [vmem:[#allocation2 + $0x6c0] sm:$0xff]
    %v638 = vld [vmem:[#allocation2 + $0x6c8] sm:$0xff]
    %v639 = vld [vmem:[#allocation2 + $0x6d0] sm:$0xff]
    %v640 = vld [vmem:[#allocation2 + $0x6d8] sm:$0xff]
    %v641 = vld [vmem:[#allocation2 + $0x6e0] sm:$0xff]
    %v642 = vld [vmem:[#allocation2 + $0x6e8] sm:$0xff]
    %v643 = vld [vmem:[#allocation2 + $0x6f0] sm:$0xff]
    %v644 = vld [vmem:[#allocation2 + $0x6f8] sm:$0xff]
    %v645 = vld [vmem:[#allocation2 + $0x700] sm:$0xff]
    %v646 = vld [vmem:[#allocation2 + $0x708] sm:$0xff]
    %v647 = vld [vmem:[#allocation2 + $0x710] sm:$0xff]
    %v648 = vld [vmem:[#allocation2 + $0x718] sm:$0xff]
    %v649 = vld [vmem:[#allocation2 + $0x720] sm:$0xff]
    %v650 = vld [vmem:[#allocation2 + $0x728] sm:$0xff]
    %v651 = vld [vmem:[#allocation2 + $0x730] sm:$0xff]
    %v652 = vld [vmem:[#allocation2 + $0x738] sm:$0xff]
    %v653 = vld [vmem:[#allocation2 + $0x740] sm:$0xff]
    %v654 = vld [vmem:[#allocation2 + $0x748] sm:$0xff]
    %v655 = vld [vmem:[#allocation2 + $0x750] sm:$0xff]
    %v656 = vld [vmem:[#allocation2 + $0x758] sm:$0xff]
    %v657 = vld [vmem:[#allocation2 + $0x760] sm:$0xff]
    %v658 = vld [vmem:[#allocation2 + $0x768] sm:$0xff]
    %v659 = vld [vmem:[#allocation2 + $0x770] sm:$0xff]
    %v660 = vld [vmem:[#allocation2 + $0x778] sm:$0xff]
    %v661 = vld [vmem:[#allocation2 + $0x780] sm:$0xff]
    %v662 = vld [vmem:[#allocation2 + $0x788] sm:$0xff]
    %v663 = vld [vmem:[#allocation2 + $0x790] sm:$0xff]
    %v664 = vld [vmem:[#allocation2 + $0x798] sm:$0xff]
    %v665 = vld [vmem:[#allocation2 + $0x7a0] sm:$0xff]
    %v666 = vld [vmem:[#allocation2 + $0x7a8] sm:$0xff]
    %v667 = vld [vmem:[#allocation2 + $0x7b0] sm:$0xff]
    %v668 = vld [vmem:[#allocation2 + $0x7b8] sm:$0xff]
    %v669 = vld [vmem:[#allocation2 + $0x7c0] sm:$0xff]
    %v670 = vld [vmem:[#allocation2 + $0x7c8] sm:$0xff]
    %v671 = vld [vmem:[#allocation2 + $0x7d0] sm:$0xff]
    %v672 = vld [vmem:[#allocation2 + $0x7d8] sm:$0xff]
    %v673 = vld [vmem:[#allocation2 + $0x7e0] sm:$0xff]
    %v674 = vld [vmem:[#allocation2 + $0x7e8] sm:$0xff]
    %v675 = vld [vmem:[#allocation2 + $0x7f0] sm:$0xff]
    %v676 = vld [vmem:[#allocation2 + $0x7f8] sm:$0xff]
    %v677 = vld [vmem:[#allocation2 + $0x800] sm:$0xff]
    %v678 = vld [vmem:[#allocation2 + $0x808] sm:$0xff]
    %v679 = vld [vmem:[#allocation2 + $0x810] sm:$0xff]
    %v680 = vld [vmem:[#allocation2 + $0x818] sm:$0xff]
    %v681 = vld [vmem:[#allocation2 + $0x820] sm:$0xff]
    %v682 = vld [vmem:[#allocation2 + $0x828] sm:$0xff]
    %v683 = vld [vmem:[#allocation2 + $0x830] sm:$0xff]
    %v684 = vld [vmem:[#allocation2 + $0x838] sm:$0xff]
    %v685 = vld [vmem:[#allocation2 + $0x840] sm:$0xff]
    %v686 = vld [vmem:[#allocation2 + $0x848] sm:$0xff]
    %v687 = vld [vmem:[#allocation2 + $0x850] sm:$0xff]
    %v688 = vld [vmem:[#allocation2 + $0x858] sm:$0xff]
    %v689 = vld [vmem:[#allocation2 + $0x860] sm:$0xff]
    %v690 = vld [vmem:[#allocation2 + $0x868] sm:$0xff]
    %v691 = vld [vmem:[#allocation2 + $0x870] sm:$0xff]
    %v692 = vld [vmem:[#allocation2 + $0x878] sm:$0xff]
    %v693 = vld [vmem:[#allocation2 + $0x880] sm:$0xff]
    %v694 = vld [vmem:[#allocation2 + $0x888] sm:$0xff]
    %v695 = vld [vmem:[#allocation2 + $0x890] sm:$0xff]
    %v696 = vld [vmem:[#allocation2 + $0x898] sm:$0xff]
    %v697 = vld [vmem:[#allocation2 + $0x8a0] sm:$0xff]
    %v698 = vld [vmem:[#allocation2 + $0x8a8] sm:$0xff]
    %v699 = vld [vmem:[#allocation2 + $0x8b0] sm:$0xff]
    %v700 = vld [vmem:[#allocation2 + $0x8b8] sm:$0xff]
    %v701 = vld [vmem:[#allocation2 + $0x8c0] sm:$0xff]
    %v702 = vld [vmem:[#allocation2 + $0x8c8] sm:$0xff]
    %v703 = vld [vmem:[#allocation2 + $0x8d0] sm:$0xff]
    %v704 = vld [vmem:[#allocation2 + $0x8d8] sm:$0xff]
    %v705 = vld [vmem:[#allocation2 + $0x8e0] sm:$0xff]
    %v706 = vld [vmem:[#allocation2 + $0x8e8] sm:$0xff]
    %v707 = vld [vmem:[#allocation2 + $0x8f0] sm:$0xff]
    %v708 = vld [vmem:[#allocation2 + $0x8f8] sm:$0xff]
    %v709 = vld [vmem:[#allocation2 + $0x900] sm:$0xff]
    %v710 = vld [vmem:[#allocation2 + $0x908] sm:$0xff]
    %v711 = vld [vmem:[#allocation2 + $0x910] sm:$0xff]
    %v712 = vld [vmem:[#allocation2 + $0x918] sm:$0xff]
    %v713 = vld [vmem:[#allocation2 + $0x920] sm:$0xff]
    %v714 = vld [vmem:[#allocation2 + $0x928] sm:$0xff]
    %v715 = vld [vmem:[#allocation2 + $0x930] sm:$0xff]
    %v716 = vld [vmem:[#allocation2 + $0x938] sm:$0xff]
    %v717 = vld [vmem:[#allocation2 + $0x940] sm:$0xff]
    %v718 = vld [vmem:[#allocation2 + $0x948] sm:$0xff]
    %v719 = vld [vmem:[#allocation2 + $0x950] sm:$0xff]
    %v720 = vld [vmem:[#allocation2 + $0x958] sm:$0xff]
    %v721 = vld [vmem:[#allocation2 + $0x960] sm:$0xff]
    %v722 = vld [vmem:[#allocation2 + $0x968] sm:$0xff]
    %v723 = vld [vmem:[#allocation2 + $0x970] sm:$0xff]
    %v724 = vld [vmem:[#allocation2 + $0x978] sm:$0xff]
    %v725 = vld [vmem:[#allocation2 + $0x980] sm:$0xff]
    %v726 = vld [vmem:[#allocation2 + $0x988] sm:$0xff]
    %v727 = vld [vmem:[#allocation2 + $0x990] sm:$0xff]
    %v728 = vld [vmem:[#allocation2 + $0x998] sm:$0xff]
    %v729 = vld [vmem:[#allocation2 + $0x9a0] sm:$0xff]
    %v730 = vld [vmem:[#allocation2 + $0x9a8] sm:$0xff]
    %v731 = vld [vmem:[#allocation2 + $0x9b0] sm:$0xff]
    %v732 = vld [vmem:[#allocation2 + $0x9b8] sm:$0xff]
    %v733 = vld [vmem:[#allocation2 + $0x9c0] sm:$0xff]
    %v734 = vld [vmem:[#allocation2 + $0x9c8] sm:$0xff]
    %v735 = vld [vmem:[#allocation2 + $0x9d0] sm:$0xff]
    %v736 = vld [vmem:[#allocation2 + $0x9d8] sm:$0xff]
    %v737 = vld [vmem:[#allocation2 + $0x9e0] sm:$0xff]
    %v738 = vld [vmem:[#allocation2 + $0x9e8] sm:$0xff]
    %v739 = vld [vmem:[#allocation2 + $0x9f0] sm:$0xff]
    %v740 = vld [vmem:[#allocation2 + $0x9f8] sm:$0xff]
    %v741 = vld [vmem:[#allocation2 + $0xa00] sm:$0xff]
    %v742 = vld [vmem:[#allocation2 + $0xa08] sm:$0xff]
    %v743 = vld [vmem:[#allocation2 + $0xa10] sm:$0xff]
    %v744 = vld [vmem:[#allocation2 + $0xa18] sm:$0xff]
    %v745 = vld [vmem:[#allocation2 + $0xa20] sm:$0xff]
    %v746 = vld [vmem:[#allocation2 + $0xa28] sm:$0xff]
    %v747 = vld [vmem:[#allocation2 + $0xa30] sm:$0xff]
    %v748 = vld [vmem:[#allocation2 + $0xa38] sm:$0xff]
    %v749 = vld [vmem:[#allocation2 + $0xa40] sm:$0xff]
    %v750 = vld [vmem:[#allocation2 + $0xa48] sm:$0xff]
    %v751 = vld [vmem:[#allocation2 + $0xa50] sm:$0xff]
    %v752 = vld [vmem:[#allocation2 + $0xa58] sm:$0xff]
    %v753 = vld [vmem:[#allocation2 + $0xa60] sm:$0xff]
    %v754 = vld [vmem:[#allocation2 + $0xa68] sm:$0xff]
    %v755 = vld [vmem:[#allocation2 + $0xa70] sm:$0xff]
    %v756 = vld [vmem:[#allocation2 + $0xa78] sm:$0xff]
    %v757 = vld [vmem:[#allocation2 + $0xa80] sm:$0xff]
    %v758 = vld [vmem:[#allocation2 + $0xa88] sm:$0xff]
    %v759 = vld [vmem:[#allocation2 + $0xa90] sm:$0xff]
    %v760 = vld [vmem:[#allocation2 + $0xa98] sm:$0xff]
    %v761 = vld [vmem:[#allocation2 + $0xaa0] sm:$0xff]
    %v762 = vld [vmem:[#allocation2 + $0xaa8] sm:$0xff]
    %v763 = vld [vmem:[#allocation2 + $0xab0] sm:$0xff]
    %v764 = vld [vmem:[#allocation2 + $0xab8] sm:$0xff]
    %v765 = vld [vmem:[#allocation2 + $0xac0] sm:$0xff]
    %v766 = vld [vmem:[#allocation2 + $0xac8] sm:$0xff]
    %v767 = vld [vmem:[#allocation2 + $0xad0] sm:$0xff]
    %v768 = vld [vmem:[#allocation2 + $0xad8] sm:$0xff]
    %v769 = vld [vmem:[#allocation2 + $0xae0] sm:$0xff]
    %v770 = vld [vmem:[#allocation2 + $0xae8] sm:$0xff]
    %v771 = vld [vmem:[#allocation2 + $0xaf0] sm:$0xff]
    %v772 = vld [vmem:[#allocation2 + $0xaf8] sm:$0xff]
    %v773 = vld [vmem:[#allocation2 + $0xb00] sm:$0xff]
    %v774 = vld [vmem:[#allocation2 + $0xb08] sm:$0xff]
    %v775 = vld [vmem:[#allocation2 + $0xb10] sm:$0xff]
    %v776 = vld [vmem:[#allocation2 + $0xb18] sm:$0xff]
    %v777 = vld [vmem:[#allocation2 + $0xb20] sm:$0xff]
    %v778 = vld [vmem:[#allocation2 + $0xb28] sm:$0xff]
    %v779 = vld [vmem:[#allocation2 + $0xb30] sm:$0xff]
    %v780 = vld [vmem:[#allocation2 + $0xb38] sm:$0xff]
    %v781 = vld [vmem:[#allocation2 + $0xb40] sm:$0xff]
    %v782 = vld [vmem:[#allocation2 + $0xb48] sm:$0xff]
    %v783 = vld [vmem:[#allocation2 + $0xb50] sm:$0xff]
    %v784 = vld [vmem:[#allocation2 + $0xb58] sm:$0xff]
    %v785 = vld [vmem:[#allocation2 + $0xb60] sm:$0xff]
    %v786 = vld [vmem:[#allocation2 + $0xb68] sm:$0xff]
    %v787 = vld [vmem:[#allocation2 + $0xb70] sm:$0xff]
    %v788 = vld [vmem:[#allocation2 + $0xb78] sm:$0xff]
    %v789 = vld [vmem:[#allocation2 + $0xb80] sm:$0xff]
    %v790 = vld [vmem:[#allocation2 + $0xb88] sm:$0xff]
    %v791 = vld [vmem:[#allocation2 + $0xb90] sm:$0xff]
    %v792 = vld [vmem:[#allocation2 + $0xb98] sm:$0xff]
    %v793 = vld [vmem:[#allocation2 + $0xba0] sm:$0xff]
    %v794 = vld [vmem:[#allocation2 + $0xba8] sm:$0xff]
    %v795 = vld [vmem:[#allocation2 + $0xbb0] sm:$0xff]
    %v796 = vld [vmem:[#allocation2 + $0xbb8] sm:$0xff]
    %v797 = vld [vmem:[#allocation2 + $0xbc0] sm:$0xff]
    %v798 = vld [vmem:[#allocation2 + $0xbc8] sm:$0xff]
    %v799 = vld [vmem:[#allocation2 + $0xbd0] sm:$0xff]
    %v800 = vld [vmem:[#allocation2 + $0xbd8] sm:$0xff]
    %v801 = vld [vmem:[#allocation2 + $0xbe0] sm:$0xff]
    %v802 = vld [vmem:[#allocation2 + $0xbe8] sm:$0xff]
    %v803 = vld [vmem:[#allocation2 + $0xbf0] sm:$0xff]
    %v804 = vld [vmem:[#allocation2 + $0xbf8] sm:$0xff]
    %v805 = vld [vmem:[#allocation2 + $0xc00] sm:$0xff]
    %v806 = vld [vmem:[#allocation2 + $0xc08] sm:$0xff]
    %v807 = vld [vmem:[#allocation2 + $0xc10] sm:$0xff]
    %v808 = vld [vmem:[#allocation2 + $0xc18] sm:$0xff]
    %v809 = vld [vmem:[#allocation2 + $0xc20] sm:$0xff]
    %v810 = vld [vmem:[#allocation2 + $0xc28] sm:$0xff]
    %v811 = vld [vmem:[#allocation2 + $0xc30] sm:$0xff]
    %v812 = vld [vmem:[#allocation2 + $0xc38] sm:$0xff]
    %v813 = vld [vmem:[#allocation2 + $0xc40] sm:$0xff]
    %v814 = vld [vmem:[#allocation2 + $0xc48] sm:$0xff]
    %v815 = vld [vmem:[#allocation2 + $0xc50] sm:$0xff]
    %v816 = vld [vmem:[#allocation2 + $0xc58] sm:$0xff]
    %v817 = vld [vmem:[#allocation2 + $0xc60] sm:$0xff]
    %v818 = vld [vmem:[#allocation2 + $0xc68] sm:$0xff]
    %v819 = vld [vmem:[#allocation2 + $0xc70] sm:$0xff]
    %v820 = vld [vmem:[#allocation2 + $0xc78] sm:$0xff]
    %v821 = vld [vmem:[#allocation2 + $0xc80] sm:$0xff]
    %v822 = vld [vmem:[#allocation2 + $0xc88] sm:$0xff]
    %v823 = vld [vmem:[#allocation2 + $0xc90] sm:$0xff]
    %v824 = vld [vmem:[#allocation2 + $0xc98] sm:$0xff]
    %v825 = vld [vmem:[#allocation2 + $0xca0] sm:$0xff]
    %v826 = vld [vmem:[#allocation2 + $0xca8] sm:$0xff]
    %v827 = vld [vmem:[#allocation2 + $0xcb0] sm:$0xff]
    %v828 = vld [vmem:[#allocation2 + $0xcb8] sm:$0xff]
    %v829 = vld [vmem:[#allocation2 + $0xcc0] sm:$0xff]
    %v830 = vld [vmem:[#allocation2 + $0xcc8] sm:$0xff]
    %v831 = vld [vmem:[#allocation2 + $0xcd0] sm:$0xff]
    %v832 = vld [vmem:[#allocation2 + $0xcd8] sm:$0xff]
    %v833 = vld [vmem:[#allocation2 + $0xce0] sm:$0xff]
    %v834 = vld [vmem:[#allocation2 + $0xce8] sm:$0xff]
    %v835 = vld [vmem:[#allocation2 + $0xcf0] sm:$0xff]
    %v836 = vld [vmem:[#allocation2 + $0xcf8] sm:$0xff]
    %v837 = vld [vmem:[#allocation2 + $0xd00] sm:$0xff]
    %v838 = vld [vmem:[#allocation2 + $0xd08] sm:$0xff]
    %v839 = vld [vmem:[#allocation2 + $0xd10] sm:$0xff]
    %v840 = vld [vmem:[#allocation2 + $0xd18] sm:$0xff]
    %v841 = vld [vmem:[#allocation2 + $0xd20] sm:$0xff]
    %v842 = vld [vmem:[#allocation2 + $0xd28] sm:$0xff]
    %v843 = vld [vmem:[#allocation2 + $0xd30] sm:$0xff]
    %v844 = vld [vmem:[#allocation2 + $0xd38] sm:$0xff]
    %v845 = vld [vmem:[#allocation2 + $0xd40] sm:$0xff]
    %v846 = vld [vmem:[#allocation2 + $0xd48] sm:$0xff]
    %v847 = vld [vmem:[#allocation2 + $0xd50] sm:$0xff]
    %v848 = vld [vmem:[#allocation2 + $0xd58] sm:$0xff]
    %v849 = vld [vmem:[#allocation2 + $0xd60] sm:$0xff]
    %v850 = vld [vmem:[#allocation2 + $0xd68] sm:$0xff]
    %v851 = vld [vmem:[#allocation2 + $0xd70] sm:$0xff]
    %v852 = vld [vmem:[#allocation2 + $0xd78] sm:$0xff]
    %v853 = vld [vmem:[#allocation2 + $0xd80] sm:$0xff]
    %v854 = vld [vmem:[#allocation2 + $0xd88] sm:$0xff]
    %v855 = vld [vmem:[#allocation2 + $0xd90] sm:$0xff]
    %v856 = vld [vmem:[#allocation2 + $0xd98] sm:$0xff]
    %v857 = vld [vmem:[#allocation2 + $0xda0] sm:$0xff]
    %v858 = vld [vmem:[#allocation2 + $0xda8] sm:$0xff]
    %v859 = vld [vmem:[#allocation2 + $0xdb0] sm:$0xff]
    %v860 = vld [vmem:[#allocation2 + $0xdb8] sm:$0xff]
    %v861 = vld [vmem:[#allocation2 + $0xdc0] sm:$0xff]
    %v862 = vld [vmem:[#allocation2 + $0xdc8] sm:$0xff]
    %v863 = vld [vmem:[#allocation2 + $0xdd0] sm:$0xff]
    %v864 = vld [vmem:[#allocation2 + $0xdd8] sm:$0xff]
    %v865 = vld [vmem:[#allocation2 + $0xde0] sm:$0xff]
    %v866 = vld [vmem:[#allocation2 + $0xde8] sm:$0xff]
    %v867 = vld [vmem:[#allocation2 + $0xdf0] sm:$0xff]
    %v868 = vld [vmem:[#allocation2 + $0xdf8] sm:$0xff]
    %v869 = vld [vmem:[#allocation2 + $0xe00] sm:$0xff]
    %v870 = vld [vmem:[#allocation2 + $0xe08] sm:$0xff]
    %v871 = vld [vmem:[#allocation2 + $0xe10] sm:$0xff]
    %v872 = vld [vmem:[#allocation2 + $0xe18] sm:$0xff]
    %v873 = vld [vmem:[#allocation2 + $0xe20] sm:$0xff]
    %v874 = vld [vmem:[#allocation2 + $0xe28] sm:$0xff]
    %v875 = vld [vmem:[#allocation2 + $0xe30] sm:$0xff]
    %v876 = vld [vmem:[#allocation2 + $0xe38] sm:$0xff]
    %v877 = vld [vmem:[#allocation2 + $0xe40] sm:$0xff]
    %v878 = vld [vmem:[#allocation2 + $0xe48] sm:$0xff]
    %v879 = vld [vmem:[#allocation2 + $0xe50] sm:$0xff]
    %v880 = vld [vmem:[#allocation2 + $0xe58] sm:$0xff]
    %v881 = vld [vmem:[#allocation2 + $0xe60] sm:$0xff]
    %v882 = vld [vmem:[#allocation2 + $0xe68] sm:$0xff]
    %v883 = vld [vmem:[#allocation2 + $0xe70] sm:$0xff]
    %v884 = vld [vmem:[#allocation2 + $0xe78] sm:$0xff]
    %v885 = vld [vmem:[#allocation2 + $0xe80] sm:$0xff]
    %v886 = vld [vmem:[#allocation2 + $0xe88] sm:$0xff]
    %v887 = vld [vmem:[#allocation2 + $0xe90] sm:$0xff]
    %v888 = vld [vmem:[#allocation2 + $0xe98] sm:$0xff]
    %v889 = vld [vmem:[#allocation2 + $0xea0] sm:$0xff]
    %v890 = vld [vmem:[#allocation2 + $0xea8] sm:$0xff]
    %v891 = vld [vmem:[#allocation2 + $0xeb0] sm:$0xff]
    %v892 = vld [vmem:[#allocation2 + $0xeb8] sm:$0xff]
    %v893 = vld [vmem:[#allocation2 + $0xec0] sm:$0xff]
    %v894 = vld [vmem:[#allocation2 + $0xec8] sm:$0xff]
    %v895 = vld [vmem:[#allocation2 + $0xed0] sm:$0xff]
    %v896 = vld [vmem:[#allocation2 + $0xed8] sm:$0xff]
    %v897 = vld [vmem:[#allocation2 + $0xee0] sm:$0xff]
    %v898 = vld [vmem:[#allocation2 + $0xee8] sm:$0xff]
    %v899 = vld [vmem:[#allocation2 + $0xef0] sm:$0xff]
    %v900 = vld [vmem:[#allocation2 + $0xef8] sm:$0xff]
    %v901 = vld [vmem:[#allocation2 + $0xf00] sm:$0xff]
    %v902 = vld [vmem:[#allocation2 + $0xf08] sm:$0xff]
    %v903 = vld [vmem:[#allocation2 + $0xf10] sm:$0xff]
    %v904 = vld [vmem:[#allocation2 + $0xf18] sm:$0xff]
    %v905 = vld [vmem:[#allocation2 + $0xf20] sm:$0xff]
    %v906 = vld [vmem:[#allocation2 + $0xf28] sm:$0xff]
    %v907 = vld [vmem:[#allocation2 + $0xf30] sm:$0xff]
    %v908 = vld [vmem:[#allocation2 + $0xf38] sm:$0xff]
    %v909 = vld [vmem:[#allocation2 + $0xf40] sm:$0xff]
    %v910 = vld [vmem:[#allocation2 + $0xf48] sm:$0xff]
    %v911 = vld [vmem:[#allocation2 + $0xf50] sm:$0xff]
    %v912 = vld [vmem:[#allocation2 + $0xf58] sm:$0xff]
    %v913 = vld [vmem:[#allocation2 + $0xf60] sm:$0xff]
    %v914 = vld [vmem:[#allocation2 + $0xf68] sm:$0xff]
    %v915 = vld [vmem:[#allocation2 + $0xf70] sm:$0xff]
    %v916 = vld [vmem:[#allocation2 + $0xf78] sm:$0xff]
    %v917 = vld [vmem:[#allocation2 + $0xf80] sm:$0xff]
    %v918 = vld [vmem:[#allocation2 + $0xf88] sm:$0xff]
    %v919 = vld [vmem:[#allocation2 + $0xf90] sm:$0xff]
    %v920 = vld [vmem:[#allocation2 + $0xf98] sm:$0xff]
    %v921 = vld [vmem:[#allocation2 + $0xfa0] sm:$0xff]
    %v922 = vld [vmem:[#allocation2 + $0xfa8] sm:$0xff]
    %v923 = vld [vmem:[#allocation2 + $0xfb0] sm:$0xff]
    %v924 = vld [vmem:[#allocation2 + $0xfb8] sm:$0xff]
    %v925 = vld [vmem:[#allocation2 + $0xfc0] sm:$0xff]
    %v926 = vld [vmem:[#allocation2 + $0xfc8] sm:$0xff]
    %v927 = vld [vmem:[#allocation2 + $0xfd0] sm:$0xff]
    %v928 = vld [vmem:[#allocation2 + $0xfd8] sm:$0xff]
    %v929 = vld [vmem:[#allocation2 + $0xfe0] sm:$0xff]
    %v930 = vld [vmem:[#allocation2 + $0xfe8] sm:$0xff]
    %v931 = vld [vmem:[#allocation2 + $0xff0] sm:$0xff]
    %v932 = vld [vmem:[#allocation2 + $0xff8] sm:$0xff]
    %v933 = vld [vmem:[#allocation2 + $0x1000] sm:$0xff]
    %v934 = vld [vmem:[#allocation2 + $0x1008] sm:$0xff]
    %v935 = vld [vmem:[#allocation2 + $0x1010] sm:$0xff]
    %v936 = vld [vmem:[#allocation2 + $0x1018] sm:$0xff]
    %v937 = vld [vmem:[#allocation2 + $0x1020] sm:$0xff]
    %v938 = vld [vmem:[#allocation2 + $0x1028] sm:$0xff]
    %v939 = vld [vmem:[#allocation2 + $0x1030] sm:$0xff]
    %v940 = vld [vmem:[#allocation2 + $0x1038] sm:$0xff]
    %v941 = vld [vmem:[#allocation2 + $0x1040] sm:$0xff]
    %v942 = vld [vmem:[#allocation2 + $0x1048] sm:$0xff]
    %v943 = vld [vmem:[#allocation2 + $0x1050] sm:$0xff]
    %v944 = vld [vmem:[#allocation2 + $0x1058] sm:$0xff]
    %v945 = vld [vmem:[#allocation2 + $0x1060] sm:$0xff]
    %v946 = vld [vmem:[#allocation2 + $0x1068] sm:$0xff]
    %v947 = vld [vmem:[#allocation2 + $0x1070] sm:$0xff]
    %v948 = vld [vmem:[#allocation2 + $0x1078] sm:$0xff]
    %v949 = vld [vmem:[#allocation2 + $0x1080] sm:$0xff]
    %v950 = vld [vmem:[#allocation2 + $0x1088] sm:$0xff]
    %v951 = vld [vmem:[#allocation2 + $0x1090] sm:$0xff]
    %v952 = vld [vmem:[#allocation2 + $0x1098] sm:$0xff]
    %v953 = vld [vmem:[#allocation2 + $0x10a0] sm:$0xff]
    %v954 = vld [vmem:[#allocation2 + $0x10a8] sm:$0xff]
    %v955 = vld [vmem:[#allocation2 + $0x10b0] sm:$0xff]
    %v956 = vld [vmem:[#allocation2 + $0x10b8] sm:$0xff]
    %v957 = vld [vmem:[#allocation2 + $0x10c0] sm:$0xff]
    %v958 = vld [vmem:[#allocation2 + $0x10c8] sm:$0xff]
    %v959 = vld [vmem:[#allocation2 + $0x10d0] sm:$0xff]
    %v960 = vld [vmem:[#allocation2 + $0x10d8] sm:$0xff]
    %v961 = vld [vmem:[#allocation2 + $0x10e0] sm:$0xff]
    %v962 = vld [vmem:[#allocation2 + $0x10e8] sm:$0xff]
    %v963 = vld [vmem:[#allocation2 + $0x10f0] sm:$0xff]
    %v964 = vld [vmem:[#allocation2 + $0x10f8] sm:$0xff]
    %v965 = vld [vmem:[#allocation2 + $0x1100] sm:$0xff]
    %v966 = vld [vmem:[#allocation2 + $0x1108] sm:$0xff]
    %v967 = vld [vmem:[#allocation2 + $0x1110] sm:$0xff]
    %v968 = vld [vmem:[#allocation2 + $0x1118] sm:$0xff]
    %v969 = vld [vmem:[#allocation2 + $0x1120] sm:$0xff]
    %v970 = vld [vmem:[#allocation2 + $0x1128] sm:$0xff]
    %v971 = vld [vmem:[#allocation2 + $0x1130] sm:$0xff]
    %v972 = vld [vmem:[#allocation2 + $0x1138] sm:$0xff]
    %v973 = vld [vmem:[#allocation2 + $0x1140] sm:$0xff]
    %v974 = vld [vmem:[#allocation2 + $0x1148] sm:$0xff]
    %v975 = vld [vmem:[#allocation2 + $0x1150] sm:$0xff]
    %v976 = vld [vmem:[#allocation2 + $0x1158] sm:$0xff]
    %v977 = vld [vmem:[#allocation2 + $0x1160] sm:$0xff]
    %v978 = vld [vmem:[#allocation2 + $0x1168] sm:$0xff]
    %v979 = vld [vmem:[#allocation2 + $0x1170] sm:$0xff]
    %v980 = vld [vmem:[#allocation2 + $0x1178] sm:$0xff]
    %v981 = vld [vmem:[#allocation2 + $0x1180] sm:$0xff]
    %v982 = vld [vmem:[#allocation2 + $0x1188] sm:$0xff]
    %v983 = vld [vmem:[#allocation2 + $0x1190] sm:$0xff]
    %v984 = vld [vmem:[#allocation2 + $0x1198] sm:$0xff]
    %v985 = vld [vmem:[#allocation2 + $0x11a0] sm:$0xff]
    %v986 = vld [vmem:[#allocation2 + $0x11a8] sm:$0xff]
    %v987 = vld [vmem:[#allocation2 + $0x11b0] sm:$0xff]
    %v988 = vld [vmem:[#allocation2 + $0x11b8] sm:$0xff]
    %v989 = vld [vmem:[#allocation2 + $0x11c0] sm:$0xff]
    %v990 = vld [vmem:[#allocation2 + $0x11c8] sm:$0xff]
    %v991 = vld [vmem:[#allocation2 + $0x11d0] sm:$0xff]
    %v992 = vld [vmem:[#allocation2 + $0x11d8] sm:$0xff]
    %v993 = vld [vmem:[#allocation2 + $0x11e0] sm:$0xff]
    %v994 = vld [vmem:[#allocation2 + $0x11e8] sm:$0xff]
    %v995 = vld [vmem:[#allocation2 + $0x11f0] sm:$0xff]
    %v996 = vld [vmem:[#allocation2 + $0x11f8] sm:$0xff]
    %997 = vmatprep.subr.mxu0 %v557
    %998 = vmatpush1.msra.mxu0 %v556
    %999 = vmatprep.subr.mxu0 %v548
    %1000 = vmatpush1.msra.mxu0 %v547
    %1001 = vmatprep.subr.mxu0 %v539
    %1002 = vmatpush1.msra.mxu0 %v538
    %1003 = vmatprep.subr.mxu0 %v530
    %1004 = vmatpush1.msra.mxu0 %v529
    %1005 = vmatprep.subr.mxu0 %v521
    %1006 = vmatpush1.msra.mxu0 %v520
    %1007 = vmatprep.subr.mxu0 %v512
    %1008 = vmatpush1.msra.mxu0 %v511
    %1009 = vmatprep.subr.mxu0 %v503
    %1010 = vmatpush1.msra.mxu0 %v502
    %1011 = vmatprep.subr.mxu0 %v494
    %1012 = vmatpush1.msra.mxu0 %v493
    %1013 = vmatprep.subr.mxu0 %v485
    %1014 = vmatpush1.msra.mxu0 %v484
    %1015 = vmatprep.subr.mxu0 %v476
    %1016 = vmatpush1.msra.mxu0 %v475
    %1017 = vmatprep.subr.mxu0 %v467
    %1018 = vmatpush1.msra.mxu0 %v466
    %1019 = vmatprep.subr.mxu0 %v458
    %1020 = vmatpush1.msra.mxu0 %v457
    %1021 = vmatprep.subr.mxu0 %v449
    %1022 = vmatpush1.msra.mxu0 %v448
    %1023 = vmatprep.subr.mxu0 %v440
    %1024 = vmatpush1.msra.mxu0 %v439
    %1025 = vmatprep.subr.mxu0 %v431
    %1026 = vmatpush1.msra.mxu0 %v430
    %1027 = vmatprep.subr.mxu0 %v422
    %1028 = vmatpush1.msra.mxu0 %v421
    %1029 = vmatprep.subr.mxu0 %v701
    %1030 = vmatpush2.msra.mxu0 %v700
    %1031 = vmatprep.subr.mxu0 %v692
    %1032 = vmatpush2.msra.mxu0 %v691
    %1033 = vmatprep.subr.mxu0 %v683
    %1034 = vmatpush2.msra.mxu0 %v682
    %1035 = vmatprep.subr.mxu0 %v674
    %1036 = vmatpush2.msra.mxu0 %v673
    %1037 = vmatprep.subr.mxu0 %v665
    %1038 = vmatpush2.msra.mxu0 %v664
    %1039 = vmatprep.subr.mxu0 %v656
    %1040 = vmatpush2.msra.mxu0 %v655
    %1041 = vmatprep.subr.mxu0 %v647
    %1042 = vmatpush2.msra.mxu0 %v646
    %1043 = vmatprep.subr.mxu0 %v638
    %1044 = vmatpush2.msra.mxu0 %v637
    %1045 = vmatprep.subr.mxu0 %v629
    %1046 = vmatpush2.msra.mxu0 %v628
    %1047 = vmatprep.subr.mxu0 %v620
    %1048 = vmatpush2.msra.mxu0 %v619
    %1049 = vmatprep.subr.mxu0 %v611
    %1050 = vmatpush2.msra.mxu0 %v610
    %1051 = vmatprep.subr.mxu0 %v602
    %1052 = vmatpush2.msra.mxu0 %v601
    %1053 = vmatprep.subr.mxu0 %v593
    %1054 = vmatpush2.msra.mxu0 %v592
    %1055 = vmatprep.subr.mxu0 %v584
    %1056 = vmatpush2.msra.mxu0 %v583
    %1057 = vmatprep.subr.mxu0 %v575
    %1058 = vmatpush2.msra.mxu0 %v574
    %1059 = vmatprep.subr.mxu0 %v566
    %1060 = vmatpush2.msra.mxu0 %v565
    %1061 = vmatprep.mubr.f32.mxu0 %v418
    %1062 = vmatmul.mubr.f32.gmra.mxu0 %v417
    %v1063 = vpop.f32.mrf.mxu0
    %v1064 = vadd.f32 0.0, %v1063
    %v1065 = vpop.f32.mrf.mxu0
    %v1066 = vadd.f32 0.0, %v1065
    %1067 = vdwg.mxu0
    %1068 = vmatprep.subr.mxu0 %v845
    %1069 = vmatpush1.msra.mxu0 %v844
    %1070 = vmatprep.subr.mxu0 %v836
    %1071 = vmatpush1.msra.mxu0 %v835
    %1072 = vmatprep.subr.mxu0 %v827
    %1073 = vmatpush1.msra.mxu0 %v826
    %1074 = vmatprep.subr.mxu0 %v818
    %1075 = vmatpush1.msra.mxu0 %v817
    %1076 = vmatprep.subr.mxu0 %v809
    %1077 = vmatpush1.msra.mxu0 %v808
    %1078 = vmatprep.subr.mxu0 %v800
    %1079 = vmatpush1.msra.mxu0 %v799
    %1080 = vmatprep.subr.mxu0 %v791
    %1081 = vmatpush1.msra.mxu0 %v790
    %1082 = vmatprep.subr.mxu0 %v782
    %1083 = vmatpush1.msra.mxu0 %v781
    %1084 = vmatprep.subr.mxu0 %v773
    %1085 = vmatpush1.msra.mxu0 %v772
    %1086 = vmatprep.subr.mxu0 %v764
    %1087 = vmatpush1.msra.mxu0 %v763
    %1088 = vmatprep.subr.mxu0 %v755
    %1089 = vmatpush1.msra.mxu0 %v754
    %1090 = vmatprep.subr.mxu0 %v746
    %1091 = vmatpush1.msra.mxu0 %v745
    %1092 = vmatprep.subr.mxu0 %v737
    %1093 = vmatpush1.msra.mxu0 %v736
    %1094 = vmatprep.subr.mxu0 %v728
    %1095 = vmatpush1.msra.mxu0 %v727
    %1096 = vmatprep.subr.mxu0 %v719
    %1097 = vmatpush1.msra.mxu0 %v718
    %1098 = vmatprep.subr.mxu0 %v710
    %1099 = vmatpush1.msra.mxu0 %v709
    %1100 = vmatprep.subr.mxu0 %v989
    %1101 = vmatpush2.msra.mxu0 %v988
    %1102 = vmatprep.subr.mxu0 %v980
    %1103 = vmatpush2.msra.mxu0 %v979
    %1104 = vmatprep.subr.mxu0 %v971
    %1105 = vmatpush2.msra.mxu0 %v970
    %1106 = vmatprep.subr.mxu0 %v962
    %1107 = vmatpush2.msra.mxu0 %v961
    %1108 = vmatprep.subr.mxu0 %v953
    %1109 = vmatpush2.msra.mxu0 %v952
    %1110 = vmatprep.subr.mxu0 %v944
    %1111 = vmatpush2.msra.mxu0 %v943
    %1112 = vmatprep.subr.mxu0 %v935
    %1113 = vmatpush2.msra.mxu0 %v934
    %1114 = vmatprep.subr.mxu0 %v926
    %1115 = vmatpush2.msra.mxu0 %v925
    %1116 = vmatprep.subr.mxu0 %v917
    %1117 = vmatpush2.msra.mxu0 %v916
    %1118 = vmatprep.subr.mxu0 %v908
    %1119 = vmatpush2.msra.mxu0 %v907
    %1120 = vmatprep.subr.mxu0 %v899
    %1121 = vmatpush2.msra.mxu0 %v898
    %1122 = vmatprep.subr.mxu0 %v890
    %1123 = vmatpush2.msra.mxu0 %v889
    %1124 = vmatprep.subr.mxu0 %v881
    %1125 = vmatpush2.msra.mxu0 %v880
    %1126 = vmatprep.subr.mxu0 %v872
    %1127 = vmatpush2.msra.mxu0 %v871
    %1128 = vmatprep.subr.mxu0 %v863
    %1129 = vmatpush2.msra.mxu0 %v862
    %1130 = vmatprep.subr.mxu0 %v854
    %1131 = vmatpush2.msra.mxu0 %v853
    %1132 = vmatprep.mubr.f32.mxu0 %v420
    %1133 = vmatmul.mubr.f32.gmra.mxu0 %v419
    %v1134 = vpop.f32.mrf.mxu0
    %v1135 = vadd.f32 %v1064, %v1134
    %v1136 = vpop.f32.mrf.mxu0
    %v1137 = vadd.f32 %v1066, %v1136
    %1138 = vdwg.mxu0
    %1139 = vmatprep.subr.mxu0 %v559
    %1140 = vmatpush1.msra.mxu0 %v558
    %1141 = vmatprep.subr.mxu0 %v550
    %1142 = vmatpush1.msra.mxu0 %v549
    %1143 = vmatprep.subr.mxu0 %v541
    %1144 = vmatpush1.msra.mxu0 %v540
    %1145 = vmatprep.subr.mxu0 %v532
    %1146 = vmatpush1.msra.mxu0 %v531
    %1147 = vmatprep.subr.mxu0 %v523
    %1148 = vmatpush1.msra.mxu0 %v522
    %1149 = vmatprep.subr.mxu0 %v514
    %1150 = vmatpush1.msra.mxu0 %v513
    %1151 = vmatprep.subr.mxu0 %v505
    %1152 = vmatpush1.msra.mxu0 %v504
    %1153 = vmatprep.subr.mxu0 %v496
    %1154 = vmatpush1.msra.mxu0 %v495
    %1155 = vmatprep.subr.mxu0 %v487
    %1156 = vmatpush1.msra.mxu0 %v486
    %1157 = vmatprep.subr.mxu0 %v478
    %1158 = vmatpush1.msra.mxu0 %v477
    %1159 = vmatprep.subr.mxu0 %v469
    %1160 = vmatpush1.msra.mxu0 %v468
    %1161 = vmatprep.subr.mxu0 %v460
    %1162 = vmatpush1.msra.mxu0 %v459
    %1163 = vmatprep.subr.mxu0 %v451
    %1164 = vmatpush1.msra.mxu0 %v450
    %1165 = vmatprep.subr.mxu0 %v442
    %1166 = vmatpush1.msra.mxu0 %v441
    %1167 = vmatprep.subr.mxu0 %v433
    %1168 = vmatpush1.msra.mxu0 %v432
    %1169 = vmatprep.subr.mxu0 %v424
    %1170 = vmatpush1.msra.mxu0 %v423
    %1171 = vmatprep.subr.mxu0 %v703
    %1172 = vmatpush2.msra.mxu0 %v702
    %1173 = vmatprep.subr.mxu0 %v694
    %1174 = vmatpush2.msra.mxu0 %v693
    %1175 = vmatprep.subr.mxu0 %v685
    %1176 = vmatpush2.msra.mxu0 %v684
    %1177 = vmatprep.subr.mxu0 %v676
    %1178 = vmatpush2.msra.mxu0 %v675
    %1179 = vmatprep.subr.mxu0 %v667
    %1180 = vmatpush2.msra.mxu0 %v666
    %1181 = vmatprep.subr.mxu0 %v658
    %1182 = vmatpush2.msra.mxu0 %v657
    %1183 = vmatprep.subr.mxu0 %v649
    %1184 = vmatpush2.msra.mxu0 %v648
    %1185 = vmatprep.subr.mxu0 %v640
    %1186 = vmatpush2.msra.mxu0 %v639
    %1187 = vmatprep.subr.mxu0 %v631
    %1188 = vmatpush2.msra.mxu0 %v630
    %1189 = vmatprep.subr.mxu0 %v622
    %1190 = vmatpush2.msra.mxu0 %v621
    %1191 = vmatprep.subr.mxu0 %v613
    %1192 = vmatpush2.msra.mxu0 %v612
    %1193 = vmatprep.subr.mxu0 %v604
    %1194 = vmatpush2.msra.mxu0 %v603
    %1195 = vmatprep.subr.mxu0 %v595
    %1196 = vmatpush2.msra.mxu0 %v594
    %1197 = vmatprep.subr.mxu0 %v586
    %1198 = vmatpush2.msra.mxu0 %v585
    %1199 = vmatprep.subr.mxu0 %v577
    %1200 = vmatpush2.msra.mxu0 %v576
    %1201 = vmatprep.subr.mxu0 %v568
    %1202 = vmatpush2.msra.mxu0 %v567
    %1203 = vmatprep.mubr.f32.mxu0 %v418
    %1204 = vmatmul.mubr.f32.gmra.mxu0 %v417
    %v1205 = vpop.f32.mrf.mxu0
    %v1206 = vadd.f32 0.0, %v1205
    %v1207 = vpop.f32.mrf.mxu0
    %v1208 = vadd.f32 0.0, %v1207
    %1209 = vdwg.mxu0
    %1210 = vmatprep.subr.mxu0 %v847
    %1211 = vmatpush1.msra.mxu0 %v846
    %1212 = vmatprep.subr.mxu0 %v838
    %1213 = vmatpush1.msra.mxu0 %v837
    %1214 = vmatprep.subr.mxu0 %v829
    %1215 = vmatpush1.msra.mxu0 %v828
    %1216 = vmatprep.subr.mxu0 %v820
    %1217 = vmatpush1.msra.mxu0 %v819
    %1218 = vmatprep.subr.mxu0 %v811
    %1219 = vmatpush1.msra.mxu0 %v810
    %1220 = vmatprep.subr.mxu0 %v802
    %1221 = vmatpush1.msra.mxu0 %v801
    %1222 = vmatprep.subr.mxu0 %v793
    %1223 = vmatpush1.msra.mxu0 %v792
    %1224 = vmatprep.subr.mxu0 %v784
    %1225 = vmatpush1.msra.mxu0 %v783
    %1226 = vmatprep.subr.mxu0 %v775
    %1227 = vmatpush1.msra.mxu0 %v774
    %1228 = vmatprep.subr.mxu0 %v766
    %1229 = vmatpush1.msra.mxu0 %v765
    %1230 = vmatprep.subr.mxu0 %v757
    %1231 = vmatpush1.msra.mxu0 %v756
    %1232 = vmatprep.subr.mxu0 %v748
    %1233 = vmatpush1.msra.mxu0 %v747
    %1234 = vmatprep.subr.mxu0 %v739
    %1235 = vmatpush1.msra.mxu0 %v738
    %1236 = vmatprep.subr.mxu0 %v730
    %1237 = vmatpush1.msra.mxu0 %v729
    %1238 = vmatprep.subr.mxu0 %v721
    %1239 = vmatpush1.msra.mxu0 %v720
    %1240 = vmatprep.subr.mxu0 %v712
    %1241 = vmatpush1.msra.mxu0 %v711
    %1242 = vmatprep.subr.mxu0 %v991
    %1243 = vmatpush2.msra.mxu0 %v990
    %1244 = vmatprep.subr.mxu0 %v982
    %1245 = vmatpush2.msra.mxu0 %v981
    %1246 = vmatprep.subr.mxu0 %v973
    %1247 = vmatpush2.msra.mxu0 %v972
    %1248 = vmatprep.subr.mxu0 %v964
    %1249 = vmatpush2.msra.mxu0 %v963
    %1250 = vmatprep.subr.mxu0 %v955
    %1251 = vmatpush2.msra.mxu0 %v954
    %1252 = vmatprep.subr.mxu0 %v946
    %1253 = vmatpush2.msra.mxu0 %v945
    %1254 = vmatprep.subr.mxu0 %v937
    %1255 = vmatpush2.msra.mxu0 %v936
    %1256 = vmatprep.subr.mxu0 %v928
    %1257 = vmatpush2.msra.mxu0 %v927
    %1258 = vmatprep.subr.mxu0 %v919
    %1259 = vmatpush2.msra.mxu0 %v918
    %1260 = vmatprep.subr.mxu0 %v910
    %1261 = vmatpush2.msra.mxu0 %v909
    %1262 = vmatprep.subr.mxu0 %v901
    %1263 = vmatpush2.msra.mxu0 %v900
    %1264 = vmatprep.subr.mxu0 %v892
    %1265 = vmatpush2.msra.mxu0 %v891
    %1266 = vmatprep.subr.mxu0 %v883
    %1267 = vmatpush2.msra.mxu0 %v882
    %1268 = vmatprep.subr.mxu0 %v874
    %1269 = vmatpush2.msra.mxu0 %v873
    %1270 = vmatprep.subr.mxu0 %v865
    %1271 = vmatpush2.msra.mxu0 %v864
    %1272 = vmatprep.subr.mxu0 %v856
    %1273 = vmatpush2.msra.mxu0 %v855
    %1274 = vmatprep.mubr.f32.mxu0 %v420
    %1275 = vmatmul.mubr.f32.gmra.mxu0 %v419
    %v1276 = vpop.f32.mrf.mxu0
    %v1277 = vadd.f32 %v1206, %v1276
    %v1278 = vpop.f32.mrf.mxu0
    %v1279 = vadd.f32 %v1208, %v1278
    %1280 = vdwg.mxu0
    %1281 = vmatprep.subr.mxu0 %v561
    %1282 = vmatpush1.msra.mxu0 %v560
    %1283 = vmatprep.subr.mxu0 %v552
    %1284 = vmatpush1.msra.mxu0 %v551
    %1285 = vmatprep.subr.mxu0 %v543
    %1286 = vmatpush1.msra.mxu0 %v542
    %1287 = vmatprep.subr.mxu0 %v534
    %1288 = vmatpush1.msra.mxu0 %v533
    %1289 = vmatprep.subr.mxu0 %v525
    %1290 = vmatpush1.msra.mxu0 %v524
    %1291 = vmatprep.subr.mxu0 %v516
    %1292 = vmatpush1.msra.mxu0 %v515
    %1293 = vmatprep.subr.mxu0 %v507
    %1294 = vmatpush1.msra.mxu0 %v506
    %1295 = vmatprep.subr.mxu0 %v498
    %1296 = vmatpush1.msra.mxu0 %v497
    %1297 = vmatprep.subr.mxu0 %v489
    %1298 = vmatpush1.msra.mxu0 %v488
    %1299 = vmatprep.subr.mxu0 %v480
    %1300 = vmatpush1.msra.mxu0 %v479
    %1301 = vmatprep.subr.mxu0 %v471
    %1302 = vmatpush1.msra.mxu0 %v470
    %1303 = vmatprep.subr.mxu0 %v462
    %1304 = vmatpush1.msra.mxu0 %v461
    %1305 = vmatprep.subr.mxu0 %v453
    %1306 = vmatpush1.msra.mxu0 %v452
    %1307 = vmatprep.subr.mxu0 %v444
    %1308 = vmatpush1.msra.mxu0 %v443
    %1309 = vmatprep.subr.mxu0 %v435
    %1310 = vmatpush1.msra.mxu0 %v434
    %1311 = vmatprep.subr.mxu0 %v426
    %1312 = vmatpush1.msra.mxu0 %v425
    %1313 = vmatprep.subr.mxu0 %v705
    %1314 = vmatpush2.msra.mxu0 %v704
    %1315 = vmatprep.subr.mxu0 %v696
    %1316 = vmatpush2.msra.mxu0 %v695
    %1317 = vmatprep.subr.mxu0 %v687
    %1318 = vmatpush2.msra.mxu0 %v686
    %1319 = vmatprep.subr.mxu0 %v678
    %1320 = vmatpush2.msra.mxu0 %v677
    %1321 = vmatprep.subr.mxu0 %v669
    %1322 = vmatpush2.msra.mxu0 %v668
    %1323 = vmatprep.subr.mxu0 %v660
    %1324 = vmatpush2.msra.mxu0 %v659
    %1325 = vmatprep.subr.mxu0 %v651
    %1326 = vmatpush2.msra.mxu0 %v650
    %1327 = vmatprep.subr.mxu0 %v642
    %1328 = vmatpush2.msra.mxu0 %v641
    %1329 = vmatprep.subr.mxu0 %v633
    %1330 = vmatpush2.msra.mxu0 %v632
    %1331 = vmatprep.subr.mxu0 %v624
    %1332 = vmatpush2.msra.mxu0 %v623
    %1333 = vmatprep.subr.mxu0 %v615
    %1334 = vmatpush2.msra.mxu0 %v614
    %1335 = vmatprep.subr.mxu0 %v606
    %1336 = vmatpush2.msra.mxu0 %v605
    %1337 = vmatprep.subr.mxu0 %v597
    %1338 = vmatpush2.msra.mxu0 %v596
    %1339 = vmatprep.subr.mxu0 %v588
    %1340 = vmatpush2.msra.mxu0 %v587
    %1341 = vmatprep.subr.mxu0 %v579
    %1342 = vmatpush2.msra.mxu0 %v578
    %1343 = vmatprep.subr.mxu0 %v570
    %1344 = vmatpush2.msra.mxu0 %v569
    %1345 = vmatprep.mubr.f32.mxu0 %v418
    %1346 = vmatmul.mubr.f32.gmra.mxu0 %v417
    %v1347 = vpop.f32.mrf.mxu0
    %v1348 = vadd.f32 0.0, %v1347
    %v1349 = vpop.f32.mrf.mxu0
    %v1350 = vadd.f32 0.0, %v1349
    %1351 = vdwg.mxu0
    %1352 = vmatprep.subr.mxu0 %v849
    %1353 = vmatpush1.msra.mxu0 %v848
    %1354 = vmatprep.subr.mxu0 %v840
    %1355 = vmatpush1.msra.mxu0 %v839
    %1356 = vmatprep.subr.mxu0 %v831
    %1357 = vmatpush1.msra.mxu0 %v830
    %1358 = vmatprep.subr.mxu0 %v822
    %1359 = vmatpush1.msra.mxu0 %v821
    %1360 = vmatprep.subr.mxu0 %v813
    %1361 = vmatpush1.msra.mxu0 %v812
    %1362 = vmatprep.subr.mxu0 %v804
    %1363 = vmatpush1.msra.mxu0 %v803
    %1364 = vmatprep.subr.mxu0 %v795
    %1365 = vmatpush1.msra.mxu0 %v794
    %1366 = vmatprep.subr.mxu0 %v786
    %1367 = vmatpush1.msra.mxu0 %v785
    %1368 = vmatprep.subr.mxu0 %v777
    %1369 = vmatpush1.msra.mxu0 %v776
    %1370 = vmatprep.subr.mxu0 %v768
    %1371 = vmatpush1.msra.mxu0 %v767
    %1372 = vmatprep.subr.mxu0 %v759
    %1373 = vmatpush1.msra.mxu0 %v758
    %1374 = vmatprep.subr.mxu0 %v750
    %1375 = vmatpush1.msra.mxu0 %v749
    %1376 = vmatprep.subr.mxu0 %v741
    %1377 = vmatpush1.msra.mxu0 %v740
    %1378 = vmatprep.subr.mxu0 %v732
    %1379 = vmatpush1.msra.mxu0 %v731
    %1380 = vmatprep.subr.mxu0 %v723
    %1381 = vmatpush1.msra.mxu0 %v722
    %1382 = vmatprep.subr.mxu0 %v714
    %1383 = vmatpush1.msra.mxu0 %v713
    %1384 = vmatprep.subr.mxu0 %v993
    %1385 = vmatpush2.msra.mxu0 %v992
    %1386 = vmatprep.subr.mxu0 %v984
    %1387 = vmatpush2.msra.mxu0 %v983
    %1388 = vmatprep.subr.mxu0 %v975
    %1389 = vmatpush2.msra.mxu0 %v974
    %1390 = vmatprep.subr.mxu0 %v966
    %1391 = vmatpush2.msra.mxu0 %v965
    %1392 = vmatprep.subr.mxu0 %v957
    %1393 = vmatpush2.msra.mxu0 %v956
    %1394 = vmatprep.subr.mxu0 %v948
    %1395 = vmatpush2.msra.mxu0 %v947
    %1396 = vmatprep.subr.mxu0 %v939
    %1397 = vmatpush2.msra.mxu0 %v938
    %1398 = vmatprep.subr.mxu0 %v930
    %1399 = vmatpush2.msra.mxu0 %v929
    %1400 = vmatprep.subr.mxu0 %v921
    %1401 = vmatpush2.msra.mxu0 %v920
    %1402 = vmatprep.subr.mxu0 %v912
    %1403 = vmatpush2.msra.mxu0 %v911
    %1404 = vmatprep.subr.mxu0 %v903
    %1405 = vmatpush2.msra.mxu0 %v902
    %1406 = vmatprep.subr.mxu0 %v894
    %1407 = vmatpush2.msra.mxu0 %v893
    %1408 = vmatprep.subr.mxu0 %v885
    %1409 = vmatpush2.msra.mxu0 %v884
    %1410 = vmatprep.subr.mxu0 %v876
    %1411 = vmatpush2.msra.mxu0 %v875
    %1412 = vmatprep.subr.mxu0 %v867
    %1413 = vmatpush2.msra.mxu0 %v866
    %1414 = vmatprep.subr.mxu0 %v858
    %1415 = vmatpush2.msra.mxu0 %v857
    %1416 = vmatprep.mubr.f32.mxu0 %v420
    %1417 = vmatmul.mubr.f32.gmra.mxu0 %v419
    %v1418 = vpop.f32.mrf.mxu0
    %v1419 = vadd.f32 %v1348, %v1418
    %v1420 = vpop.f32.mrf.mxu0
    %v1421 = vadd.f32 %v1350, %v1420
    %1422 = vdwg.mxu0
    %1423 = vmatprep.subr.mxu0 %v563
    %1424 = vmatpush1.msra.mxu0 %v562
    %1425 = vmatprep.subr.mxu0 %v554
    %1426 = vmatpush1.msra.mxu0 %v553
    %1427 = vmatprep.subr.mxu0 %v545
    %1428 = vmatpush1.msra.mxu0 %v544
    %1429 = vmatprep.subr.mxu0 %v536
    %1430 = vmatpush1.msra.mxu0 %v535
    %1431 = vmatprep.subr.mxu0 %v527
    %1432 = vmatpush1.msra.mxu0 %v526
    %1433 = vmatprep.subr.mxu0 %v518
    %1434 = vmatpush1.msra.mxu0 %v517
    %1435 = vmatprep.subr.mxu0 %v509
    %1436 = vmatpush1.msra.mxu0 %v508
    %1437 = vmatprep.subr.mxu0 %v500
    %1438 = vmatpush1.msra.mxu0 %v499
    %1439 = vmatprep.subr.mxu0 %v491
    %1440 = vmatpush1.msra.mxu0 %v490
    %1441 = vmatprep.subr.mxu0 %v482
    %1442 = vmatpush1.msra.mxu0 %v481
    %1443 = vmatprep.subr.mxu0 %v473
    %1444 = vmatpush1.msra.mxu0 %v472
    %1445 = vmatprep.subr.mxu0 %v464
    %1446 = vmatpush1.msra.mxu0 %v463
    %1447 = vmatprep.subr.mxu0 %v455
    %1448 = vmatpush1.msra.mxu0 %v454
    %1449 = vmatprep.subr.mxu0 %v446
    %1450 = vmatpush1.msra.mxu0 %v445
    %1451 = vmatprep.subr.mxu0 %v437
    %1452 = vmatpush1.msra.mxu0 %v436
    %1453 = vmatprep.subr.mxu0 %v428
    %1454 = vmatpush1.msra.mxu0 %v427
    %1455 = vmatprep.subr.mxu0 %v707
    %1456 = vmatpush2.msra.mxu0 %v706
    %1457 = vmatprep.subr.mxu0 %v698
    %1458 = vmatpush2.msra.mxu0 %v697
    %1459 = vmatprep.subr.mxu0 %v689
    %1460 = vmatpush2.msra.mxu0 %v688
    %1461 = vmatprep.subr.mxu0 %v680
    %1462 = vmatpush2.msra.mxu0 %v679
    %1463 = vmatprep.subr.mxu0 %v671
    %1464 = vmatpush2.msra.mxu0 %v670
    %1465 = vmatprep.subr.mxu0 %v662
    %1466 = vmatpush2.msra.mxu0 %v661
    %1467 = vmatprep.subr.mxu0 %v653
    %1468 = vmatpush2.msra.mxu0 %v652
    %1469 = vmatprep.subr.mxu0 %v644
    %1470 = vmatpush2.msra.mxu0 %v643
    %1471 = vmatprep.subr.mxu0 %v635
    %1472 = vmatpush2.msra.mxu0 %v634
    %1473 = vmatprep.subr.mxu0 %v626
    %1474 = vmatpush2.msra.mxu0 %v625
    %1475 = vmatprep.subr.mxu0 %v617
    %1476 = vmatpush2.msra.mxu0 %v616
    %1477 = vmatprep.subr.mxu0 %v608
    %1478 = vmatpush2.msra.mxu0 %v607
    %1479 = vmatprep.subr.mxu0 %v599
    %1480 = vmatpush2.msra.mxu0 %v598
    %1481 = vmatprep.subr.mxu0 %v590
    %1482 = vmatpush2.msra.mxu0 %v589
    %1483 = vmatprep.subr.mxu0 %v581
    %1484 = vmatpush2.msra.mxu0 %v580
    %1485 = vmatprep.subr.mxu0 %v572
    %1486 = vmatpush2.msra.mxu0 %v571
    %1487 = vmatprep.mubr.f32.mxu0 %v418
    %1488 = vmatmul.mubr.f32.gmra.mxu0 %v417
    %v1489 = vpop.f32.mrf.mxu0
    %v1490 = vadd.f32 0.0, %v1489
    %v1491 = vpop.f32.mrf.mxu0
    %v1492 = vadd.f32 0.0, %v1491
    %1493 = vdwg.mxu0
    %1494 = vmatprep.subr.mxu0 %v851
    %1495 = vmatpush1.msra.mxu0 %v850
    %1496 = vmatprep.subr.mxu0 %v842
    %1497 = vmatpush1.msra.mxu0 %v841
    %1498 = vmatprep.subr.mxu0 %v833
    %1499 = vmatpush1.msra.mxu0 %v832
    %1500 = vmatprep.subr.mxu0 %v824
    %1501 = vmatpush1.msra.mxu0 %v823
    %1502 = vmatprep.subr.mxu0 %v815
    %1503 = vmatpush1.msra.mxu0 %v814
    %1504 = vmatprep.subr.mxu0 %v806
    %1505 = vmatpush1.msra.mxu0 %v805
    %1506 = vmatprep.subr.mxu0 %v797
    %1507 = vmatpush1.msra.mxu0 %v796
    %1508 = vmatprep.subr.mxu0 %v788
    %1509 = vmatpush1.msra.mxu0 %v787
    %1510 = vmatprep.subr.mxu0 %v779
    %1511 = vmatpush1.msra.mxu0 %v778
    %1512 = vmatprep.subr.mxu0 %v770
    %1513 = vmatpush1.msra.mxu0 %v769
    %1514 = vmatprep.subr.mxu0 %v761
    %1515 = vmatpush1.msra.mxu0 %v760
    %1516 = vmatprep.subr.mxu0 %v752
    %1517 = vmatpush1.msra.mxu0 %v751
    %1518 = vmatprep.subr.mxu0 %v743
    %1519 = vmatpush1.msra.mxu0 %v742
    %1520 = vmatprep.subr.mxu0 %v734
    %1521 = vmatpush1.msra.mxu0 %v733
    %1522 = vmatprep.subr.mxu0 %v725
    %1523 = vmatpush1.msra.mxu0 %v724
    %1524 = vmatprep.subr.mxu0 %v716
    %1525 = vmatpush1.msra.mxu0 %v715
    %1526 = vmatprep.subr.mxu0 %v995
    %1527 = vmatpush2.msra.mxu0 %v994
    %1528 = vmatprep.subr.mxu0 %v986
    %1529 = vmatpush2.msra.mxu0 %v985
    %1530 = vmatprep.subr.mxu0 %v977
    %1531 = vmatpush2.msra.mxu0 %v976
    %1532 = vmatprep.subr.mxu0 %v968
    %1533 = vmatpush2.msra.mxu0 %v967
    %1534 = vmatprep.subr.mxu0 %v959
    %1535 = vmatpush2.msra.mxu0 %v958
    %1536 = vmatprep.subr.mxu0 %v950
    %1537 = vmatpush2.msra.mxu0 %v949
    %1538 = vmatprep.subr.mxu0 %v941
    %1539 = vmatpush2.msra.mxu0 %v940
    %1540 = vmatprep.subr.mxu0 %v932
    %1541 = vmatpush2.msra.mxu0 %v931
    %1542 = vmatprep.subr.mxu0 %v923
    %1543 = vmatpush2.msra.mxu0 %v922
    %1544 = vmatprep.subr.mxu0 %v914
    %1545 = vmatpush2.msra.mxu0 %v913
    %1546 = vmatprep.subr.mxu0 %v905
    %1547 = vmatpush2.msra.mxu0 %v904
    %1548 = vmatprep.subr.mxu0 %v896
    %1549 = vmatpush2.msra.mxu0 %v895
    %1550 = vmatprep.subr.mxu0 %v887
    %1551 = vmatpush2.msra.mxu0 %v886
    %1552 = vmatprep.subr.mxu0 %v878
    %1553 = vmatpush2.msra.mxu0 %v877
    %1554 = vmatprep.subr.mxu0 %v869
    %1555 = vmatpush2.msra.mxu0 %v868
    %1556 = vmatprep.subr.mxu0 %v860
    %1557 = vmatpush2.msra.mxu0 %v859
    %1558 = vmatprep.mubr.f32.mxu0 %v420
    %1559 = vmatmul.mubr.f32.gmra.mxu0 %v419
    %v1560 = vpop.f32.mrf.mxu0
    %v1561 = vadd.f32 %v1490, %v1560
    %v1562 = vpop.f32.mrf.mxu0
    %v1563 = vadd.f32 %v1492, %v1562
    %1564 = vdwg.mxu0
    %1565 = vmatprep.subr.mxu0 0.0
    %1566 = vmatpush1.msra.mxu0 %v564
    %1567 = vmatprep.subr.mxu0 0.0
    %1568 = vmatpush1.msra.mxu0 %v555
    %1569 = vmatprep.subr.mxu0 0.0
    %1570 = vmatpush1.msra.mxu0 %v546
    %1571 = vmatprep.subr.mxu0 0.0
    %1572 = vmatpush1.msra.mxu0 %v537
    %1573 = vmatprep.subr.mxu0 0.0
    %1574 = vmatpush1.msra.mxu0 %v528
    %1575 = vmatprep.subr.mxu0 0.0
    %1576 = vmatpush1.msra.mxu0 %v519
    %1577 = vmatprep.subr.mxu0 0.0
    %1578 = vmatpush1.msra.mxu0 %v510
    %1579 = vmatprep.subr.mxu0 0.0
    %1580 = vmatpush1.msra.mxu0 %v501
    %1581 = vmatprep.subr.mxu0 0.0
    %1582 = vmatpush1.msra.mxu0 %v492
    %1583 = vmatprep.subr.mxu0 0.0
    %1584 = vmatpush1.msra.mxu0 %v483
    %1585 = vmatprep.subr.mxu0 0.0
    %1586 = vmatpush1.msra.mxu0 %v474
    %1587 = vmatprep.subr.mxu0 0.0
    %1588 = vmatpush1.msra.mxu0 %v465
    %1589 = vmatprep.subr.mxu0 0.0
    %1590 = vmatpush1.msra.mxu0 %v456
    %1591 = vmatprep.subr.mxu0 0.0
    %1592 = vmatpush1.msra.mxu0 %v447
    %1593 = vmatprep.subr.mxu0 0.0
    %1594 = vmatpush1.msra.mxu0 %v438
    %1595 = vmatprep.subr.mxu0 0.0
    %1596 = vmatpush1.msra.mxu0 %v429
    %1597 = vmatprep.subr.mxu0 0.0
    %1598 = vmatpush2.msra.mxu0 %v708
    %1599 = vmatprep.subr.mxu0 0.0
    %1600 = vmatpush2.msra.mxu0 %v699
    %1601 = vmatprep.subr.mxu0 0.0
    %1602 = vmatpush2.msra.mxu0 %v690
    %1603 = vmatprep.subr.mxu0 0.0
    %1604 = vmatpush2.msra.mxu0 %v681
    %1605 = vmatprep.subr.mxu0 0.0
    %1606 = vmatpush2.msra.mxu0 %v672
    %1607 = vmatprep.subr.mxu0 0.0
    %1608 = vmatpush2.msra.mxu0 %v663
    %1609 = vmatprep.subr.mxu0 0.0
    %1610 = vmatpush2.msra.mxu0 %v654
    %1611 = vmatprep.subr.mxu0 0.0
    %1612 = vmatpush2.msra.mxu0 %v645
    %1613 = vmatprep.subr.mxu0 0.0
    %1614 = vmatpush2.msra.mxu0 %v636
    %1615 = vmatprep.subr.mxu0 0.0
    %1616 = vmatpush2.msra.mxu0 %v627
    %1617 = vmatprep.subr.mxu0 0.0
    %1618 = vmatpush2.msra.mxu0 %v618
    %1619 = vmatprep.subr.mxu0 0.0
    %1620 = vmatpush2.msra.mxu0 %v609
    %1621 = vmatprep.subr.mxu0 0.0
    %1622 = vmatpush2.msra.mxu0 %v600
    %1623 = vmatprep.subr.mxu0 0.0
    %1624 = vmatpush2.msra.mxu0 %v591
    %1625 = vmatprep.subr.mxu0 0.0
    %1626 = vmatpush2.msra.mxu0 %v582
    %1627 = vmatprep.subr.mxu0 0.0
    %1628 = vmatpush2.msra.mxu0 %v573
    %1629 = vmatprep.mubr.f32.mxu0 %v418
    %1630 = vmatmul.mubr.f32.gmra.mxu0 %v417
    %v1631 = vpop.f32.mrf.mxu0
    %v1632 = vadd.f32 0.0, %v1631
    %v1633 = vpop.f32.mrf.mxu0
    %1634 = vdwg.mxu0
    %1635 = vmatprep.subr.mxu0 0.0
    %1636 = vmatpush1.msra.mxu0 %v852
    %1637 = vmatprep.subr.mxu0 0.0
    %1638 = vmatpush1.msra.mxu0 %v843
    %1639 = vmatprep.subr.mxu0 0.0
    %1640 = vmatpush1.msra.mxu0 %v834
    %1641 = vmatprep.subr.mxu0 0.0
    %1642 = vmatpush1.msra.mxu0 %v825
    %1643 = vmatprep.subr.mxu0 0.0
    %1644 = vmatpush1.msra.mxu0 %v816
    %1645 = vmatprep.subr.mxu0 0.0
    %1646 = vmatpush1.msra.mxu0 %v807
    %1647 = vmatprep.subr.mxu0 0.0
    %1648 = vmatpush1.msra.mxu0 %v798
    %1649 = vmatprep.subr.mxu0 0.0
    %1650 = vmatpush1.msra.mxu0 %v789
    %1651 = vmatprep.subr.mxu0 0.0
    %1652 = vmatpush1.msra.mxu0 %v780
    %1653 = vmatprep.subr.mxu0 0.0
    %1654 = vmatpush1.msra.mxu0 %v771
    %1655 = vmatprep.subr.mxu0 0.0
    %1656 = vmatpush1.msra.mxu0 %v762
    %1657 = vmatprep.subr.mxu0 0.0
    %1658 = vmatpush1.msra.mxu0 %v753
    %1659 = vmatprep.subr.mxu0 0.0
    %1660 = vmatpush1.msra.mxu0 %v744
    %1661 = vmatprep.subr.mxu0 0.0
    %1662 = vmatpush1.msra.mxu0 %v735
    %1663 = vmatprep.subr.mxu0 0.0
    %1664 = vmatpush1.msra.mxu0 %v726
    %1665 = vmatprep.subr.mxu0 0.0
    %1666 = vmatpush1.msra.mxu0 %v717
    %1667 = vmatprep.subr.mxu0 0.0
    %1668 = vmatpush2.msra.mxu0 %v996
    %1669 = vmatprep.subr.mxu0 0.0
    %1670 = vmatpush2.msra.mxu0 %v987
    %1671 = vmatprep.subr.mxu0 0.0
    %1672 = vmatpush2.msra.mxu0 %v978
    %1673 = vmatprep.subr.mxu0 0.0
    %1674 = vmatpush2.msra.mxu0 %v969
    %1675 = vmatprep.subr.mxu0 0.0
    %1676 = vmatpush2.msra.mxu0 %v960
    %1677 = vmatprep.subr.mxu0 0.0
    %1678 = vmatpush2.msra.mxu0 %v951
    %1679 = vmatprep.subr.mxu0 0.0
    %1680 = vmatpush2.msra.mxu0 %v942
    %1681 = vmatprep.subr.mxu0 0.0
    %1682 = vmatpush2.msra.mxu0 %v933
    %1683 = vmatprep.subr.mxu0 0.0
    %1684 = vmatpush2.msra.mxu0 %v924
    %1685 = vmatprep.subr.mxu0 0.0
    %1686 = vmatpush2.msra.mxu0 %v915
    %1687 = vmatprep.subr.mxu0 0.0
    %1688 = vmatpush2.msra.mxu0 %v906
    %1689 = vmatprep.subr.mxu0 0.0
    %1690 = vmatpush2.msra.mxu0 %v897
    %1691 = vmatprep.subr.mxu0 0.0
    %1692 = vmatpush2.msra.mxu0 %v888
    %1693 = vmatprep.subr.mxu0 0.0
    %1694 = vmatpush2.msra.mxu0 %v879
    %1695 = vmatprep.subr.mxu0 0.0
    %1696 = vmatpush2.msra.mxu0 %v870
    %1697 = vmatprep.subr.mxu0 0.0
    %1698 = vmatpush2.msra.mxu0 %v861
    %1699 = vmatprep.mubr.f32.mxu0 %v420
    %1700 = vmatmul.mubr.f32.gmra.mxu0 %v419
    %v1701 = vpop.f32.mrf.mxu0
    %v1702 = vadd.f32 %v1632, %v1701
    %v1703 = vpop.f32.mrf.mxu0
    %1704 = vdwg.mxu0
    %v1705 = vld [vmem:[#allocation9] sm:$0xff]
    %v1706 = vld [vmem:[#allocation9 + $0x8] sm:$0xff]
    %v1707 = vld [vmem:[#allocation10] sm:$0xff]
    %v1708 = vld [vmem:[#allocation10 + $0x8] sm:$0xff]
    %1710 = vset.pattern.permute.xlu0 0
    %1711 = vperm.xlu0 %1710, %v1707
    %v1712 = vpop.permute.xlu0 %1711
    %1715 = vset.pattern.permute.xlu0 0
    %1716 = vperm.xlu0 %1715, %v1708
    %v1717 = vpop.permute.xlu0 %1716
    %vm1719 = vcmask 588800
    %v1721 = vsel %vm1719, %v1705, 0
    %v1724 = vsel %vm1719, %v1706, 0
    %1726 = vmatprep.subr.mxu0 0.0
    %1727 = vmatpush1.msra.mxu0 0.0
    %1728 = vmatprep.subr.mxu0 0.0
    %1729 = vmatpush1.msra.mxu0 0.0
    %1730 = vmatprep.subr.mxu0 0.0
    %1731 = vmatpush1.msra.mxu0 0.0
    %1732 = vmatprep.subr.mxu0 0.0
    %1733 = vmatpush1.msra.mxu0 0.0
    %1734 = vmatprep.subr.mxu0 0.0
    %1735 = vmatpush1.msra.mxu0 0.0
    %1736 = vmatprep.subr.mxu0 0.0
    %1737 = vmatpush1.msra.mxu0 0.0
    %1738 = vmatprep.subr.mxu0 0.0
    %1739 = vmatpush1.msra.mxu0 0.0
    %1740 = vmatprep.subr.mxu0 0.0
    %1741 = vmatpush1.msra.mxu0 %v1702
    %1742 = vmatprep.subr.mxu0 0.0
    %1743 = vmatpush1.msra.mxu0 %v1563
    %1744 = vmatprep.subr.mxu0 0.0
    %1745 = vmatpush1.msra.mxu0 %v1561
    %1746 = vmatprep.subr.mxu0 0.0
    %1747 = vmatpush1.msra.mxu0 %v1421
    %1748 = vmatprep.subr.mxu0 0.0
    %1749 = vmatpush1.msra.mxu0 %v1419
    %1750 = vmatprep.subr.mxu0 0.0
    %1751 = vmatpush1.msra.mxu0 %v1279
    %1752 = vmatprep.subr.mxu0 0.0
    %1753 = vmatpush1.msra.mxu0 %v1277
    %1754 = vmatprep.subr.mxu0 0.0
    %1755 = vmatpush1.msra.mxu0 %v1137
    %1756 = vmatprep.subr.mxu0 0.0
    %1757 = vmatpush1.msra.mxu0 %v1135
    %1758 = vmatprep.subr.mxu0 0.0
    %1759 = vmatpush2.msra.mxu0 0.0
    %1760 = vmatprep.subr.mxu0 0.0
    %1761 = vmatpush2.msra.mxu0 0.0
    %1762 = vmatprep.subr.mxu0 0.0
    %1763 = vmatpush2.msra.mxu0 0.0
    %1764 = vmatprep.subr.mxu0 0.0
    %1765 = vmatpush2.msra.mxu0 0.0
    %1766 = vmatprep.subr.mxu0 0.0
    %1767 = vmatpush2.msra.mxu0 0.0
    %1768 = vmatprep.subr.mxu0 0.0
    %1769 = vmatpush2.msra.mxu0 0.0
    %1770 = vmatprep.subr.mxu0 0.0
    %1771 = vmatpush2.msra.mxu0 0.0
    %1772 = vmatprep.subr.mxu0 0.0
    %1773 = vmatpush2.msra.mxu0 0.0
    %1774 = vmatprep.subr.mxu0 0.0
    %1775 = vmatpush2.msra.mxu0 0.0
    %1776 = vmatprep.subr.mxu0 0.0
    %1777 = vmatpush2.msra.mxu0 0.0
    %1778 = vmatprep.subr.mxu0 0.0
    %1779 = vmatpush2.msra.mxu0 0.0
    %1780 = vmatprep.subr.mxu0 0.0
    %1781 = vmatpush2.msra.mxu0 0.0
    %1782 = vmatprep.subr.mxu0 0.0
    %1783 = vmatpush2.msra.mxu0 0.0
    %1784 = vmatprep.subr.mxu0 0.0
    %1785 = vmatpush2.msra.mxu0 0.0
    %1786 = vmatprep.subr.mxu0 0.0
    %1787 = vmatpush2.msra.mxu0 0.0
    %1788 = vmatprep.subr.mxu0 0.0
    %1789 = vmatpush2.msra.mxu0 0.0
    %1790 = vmatprep.mubr.f32.mxu0 0.0
    %1791 = vmatmul.mubr.f32.gmra.mxu0 %v1721
    %v1792 = vpop.f32.mrf.mxu0
    %v1793 = vadd.f32 %v1712, %v1792
    %v1794 = vpop.f32.mrf.mxu0
    %1795 = vmatprep.mubr.f32.mxu0 0.0
    %1796 = vmatmul.mubr.f32.gmra.mxu0 %v1724
    %v1797 = vpop.f32.mrf.mxu0
    %v1798 = vadd.f32 %v1717, %v1797
    %v1799 = vpop.f32.mrf.mxu0
    %1800 = vdwg.mxu0
    %v1801 = vmax.f32 %v1793, 0.0
    %v1802 = vmax.f32 %v1798, 0.0
    %v1803 = vld [vmem:[#allocation12] sm:$0xff]
    %v1804 = vld [vmem:[#allocation13] sm:$0xff]
    %1806 = vset.pattern.permute.xlu0 0
    %1807 = vperm.xlu0 %1806, %v1804
    %v1808 = vpop.permute.xlu0 %1807
    %vm1810 = vcmask 130048
    %v1812 = vsel %vm1810, %v1803, 0
    %1814 = vmatprep.subr.mxu0 0.0
    %1815 = vmatpush1.msra.mxu0 0.0
    %1816 = vmatprep.subr.mxu0 0.0
    %1817 = vmatpush1.msra.mxu0 0.0
    %1818 = vmatprep.subr.mxu0 0.0
    %1819 = vmatpush1.msra.mxu0 0.0
    %1820 = vmatprep.subr.mxu0 0.0
    %1821 = vmatpush1.msra.mxu0 0.0
    %1822 = vmatprep.subr.mxu0 0.0
    %1823 = vmatpush1.msra.mxu0 0.0
    %1824 = vmatprep.subr.mxu0 0.0
    %1825 = vmatpush1.msra.mxu0 0.0
    %1826 = vmatprep.subr.mxu0 0.0
    %1827 = vmatpush1.msra.mxu0 0.0
    %1828 = vmatprep.subr.mxu0 0.0
    %1829 = vmatpush1.msra.mxu0 0.0
    %1830 = vmatprep.subr.mxu0 0.0
    %1831 = vmatpush1.msra.mxu0 0.0
    %1832 = vmatprep.subr.mxu0 0.0
    %1833 = vmatpush1.msra.mxu0 0.0
    %1834 = vmatprep.subr.mxu0 0.0
    %1835 = vmatpush1.msra.mxu0 0.0
    %1836 = vmatprep.subr.mxu0 0.0
    %1837 = vmatpush1.msra.mxu0 0.0
    %1838 = vmatprep.subr.mxu0 0.0
    %1839 = vmatpush1.msra.mxu0 0.0
    %1840 = vmatprep.subr.mxu0 0.0
    %1841 = vmatpush1.msra.mxu0 0.0
    %1842 = vmatprep.subr.mxu0 0.0
    %1843 = vmatpush1.msra.mxu0 %v1802
    %1844 = vmatprep.subr.mxu0 0.0
    %1845 = vmatpush1.msra.mxu0 %v1801
    %1846 = vmatprep.subr.mxu0 0.0
    %1847 = vmatpush2.msra.mxu0 0.0
    %1848 = vmatprep.subr.mxu0 0.0
    %1849 = vmatpush2.msra.mxu0 0.0
    %1850 = vmatprep.subr.mxu0 0.0
    %1851 = vmatpush2.msra.mxu0 0.0
    %1852 = vmatprep.subr.mxu0 0.0
    %1853 = vmatpush2.msra.mxu0 0.0
    %1854 = vmatprep.subr.mxu0 0.0
    %1855 = vmatpush2.msra.mxu0 0.0
    %1856 = vmatprep.subr.mxu0 0.0
    %1857 = vmatpush2.msra.mxu0 0.0
    %1858 = vmatprep.subr.mxu0 0.0
    %1859 = vmatpush2.msra.mxu0 0.0
    %1860 = vmatprep.subr.mxu0 0.0
    %1861 = vmatpush2.msra.mxu0 0.0
    %1862 = vmatprep.subr.mxu0 0.0
    %1863 = vmatpush2.msra.mxu0 0.0
    %1864 = vmatprep.subr.mxu0 0.0
    %1865 = vmatpush2.msra.mxu0 0.0
    %1866 = vmatprep.subr.mxu0 0.0
    %1867 = vmatpush2.msra.mxu0 0.0
    %1868 = vmatprep.subr.mxu0 0.0
    %1869 = vmatpush2.msra.mxu0 0.0
    %1870 = vmatprep.subr.mxu0 0.0
    %1871 = vmatpush2.msra.mxu0 0.0
    %1872 = vmatprep.subr.mxu0 0.0
    %1873 = vmatpush2.msra.mxu0 0.0
    %1874 = vmatprep.subr.mxu0 0.0
    %1875 = vmatpush2.msra.mxu0 0.0
    %1876 = vmatprep.subr.mxu0 0.0
    %1877 = vmatpush2.msra.mxu0 0.0
    %1878 = vmatprep.mubr.f32.mxu0 0.0
    %1879 = vmatmul.mubr.f32.gmra.mxu0 %v1812
    %v1880 = vpop.f32.mrf.mxu0
    %v1881 = vadd.f32 %v1808, %v1880
    %v1882 = vpop.f32.mrf.mxu0
    %1883 = vdwg.mxu0
    %v1884 = vld [vmem:[%s2] sm:$0xff]
    %v1885 = vld [vmem:[%s2 + $0x8] sm:$0xff]
    %v1886 = vld [vmem:[%s2 + $0x10] sm:$0xff]
    %v1887 = vld [vmem:[%s2 + $0x18] sm:$0xff]
    %v1888 = vld [vmem:[%s2 + $0x20] sm:$0xff]
    %v1889 = vld [vmem:[%s2 + $0x28] sm:$0xff]
    %v1890 = vld [vmem:[%s2 + $0x30] sm:$0xff]
    %v1891 = vld [vmem:[%s2 + $0x38] sm:$0xff]
    %v1892 = vld [vmem:[%s2 + $0x40] sm:$0xff]
    %v1893 = vld [vmem:[%s2 + $0x48] sm:$0xff]
    %v1894 = vld [vmem:[%s2 + $0x50] sm:$0xff]
    %v1895 = vld [vmem:[%s2 + $0x58] sm:$0xff]
    %v1896 = vld [vmem:[%s2 + $0x60] sm:$0xff]
    %v1897 = vld [vmem:[%s2 + $0x68] sm:$0xff]
    %v1898 = vld [vmem:[%s2 + $0x70] sm:$0xff]
    %v1899 = vld [vmem:[%s2 + $0x78] sm:$0xff]
    %v1900 = vld [vmem:[%s2 + $0x80] sm:$0xff]
    %v1901 = vld [vmem:[%s2 + $0x88] sm:$0xff]
    %v1902 = vld [vmem:[%s2 + $0x90] sm:$0xff]
    %v1903 = vld [vmem:[%s2 + $0x98] sm:$0xff]
    %v1904 = vld [vmem:[%s2 + $0xa0] sm:$0xff]
    %v1905 = vld [vmem:[%s2 + $0xa8] sm:$0xff]
    %v1906 = vld [vmem:[%s2 + $0xb0] sm:$0xff]
    %v1907 = vld [vmem:[%s2 + $0xb8] sm:$0xff]
    %v1908 = vld [vmem:[%s2 + $0xc0] sm:$0xff]
    %v1909 = vld [vmem:[%s2 + $0xc8] sm:$0xff]
    %v1910 = vld [vmem:[%s2 + $0xd0] sm:$0xff]
    %v1911 = vld [vmem:[%s2 + $0xd8] sm:$0xff]
    %v1912 = vld [vmem:[%s2 + $0xe0] sm:$0xff]
    %v1913 = vld [vmem:[%s2 + $0xe8] sm:$0xff]
    %v1914 = vld [vmem:[%s2 + $0xf0] sm:$0xff]
    %v1915 = vld [vmem:[%s2 + $0xf8] sm:$0xff]
    %v1916 = vld [vmem:[%s2 + $0x100] sm:$0xff]
    %v1917 = vld [vmem:[%s2 + $0x108] sm:$0xff]
    %v1918 = vld [vmem:[%s2 + $0x110] sm:$0xff]
    %v1919 = vld [vmem:[%s2 + $0x118] sm:$0xff]
    %v1920 = vld [vmem:[%s2 + $0x120] sm:$0xff]
    %v1921 = vld [vmem:[%s2 + $0x128] sm:$0xff]
    %v1922 = vld [vmem:[%s2 + $0x130] sm:$0xff]
    %v1923 = vld [vmem:[%s2 + $0x138] sm:$0xff]
    %v1924 = vld [vmem:[%s2 + $0x140] sm:$0xff]
    %v1925 = vld [vmem:[%s2 + $0x148] sm:$0xff]
    %v1926 = vld [vmem:[%s2 + $0x150] sm:$0xff]
    %v1927 = vld [vmem:[%s2 + $0x158] sm:$0xff]
    %v1928 = vld [vmem:[%s2 + $0x160] sm:$0xff]
    %v1929 = vld [vmem:[%s2 + $0x168] sm:$0xff]
    %v1930 = vld [vmem:[%s2 + $0x170] sm:$0xff]
    %v1931 = vld [vmem:[%s2 + $0x178] sm:$0xff]
    %v1932 = vld [vmem:[%s2 + $0x180] sm:$0xff]
    %v1933 = vld [vmem:[%s2 + $0x188] sm:$0xff]
    %v1934 = vld [vmem:[%s2 + $0x190] sm:$0xff]
    %v1935 = vld [vmem:[%s2 + $0x198] sm:$0xff]
    %v1936 = vld [vmem:[%s2 + $0x1a0] sm:$0xff]
    %v1937 = vld [vmem:[%s2 + $0x1a8] sm:$0xff]
    %v1938 = vld [vmem:[%s2 + $0x1b0] sm:$0xff]
    %v1939 = vld [vmem:[%s2 + $0x1b8] sm:$0xff]
    %v1940 = vld [vmem:[%s2 + $0x1c0] sm:$0xff]
    %v1941 = vld [vmem:[%s2 + $0x1c8] sm:$0xff]
    %v1942 = vld [vmem:[%s2 + $0x1d0] sm:$0xff]
    %v1943 = vld [vmem:[%s2 + $0x1d8] sm:$0xff]
    %v1944 = vld [vmem:[%s2 + $0x1e0] sm:$0xff]
    %v1945 = vld [vmem:[%s2 + $0x1e8] sm:$0xff]
    %v1946 = vld [vmem:[%s2 + $0x1f0] sm:$0xff]
    %v1947 = vld [vmem:[%s2 + $0x1f8] sm:$0xff]
    %1948 = vmatprep.subr.mxu0 %v1945
    %1949 = vmatpush1.msra.mxu0 %v1944
    %1950 = vmatprep.subr.mxu0 %v1941
    %1951 = vmatpush1.msra.mxu0 %v1940
    %1952 = vmatprep.subr.mxu0 %v1937
    %1953 = vmatpush1.msra.mxu0 %v1936
    %1954 = vmatprep.subr.mxu0 %v1933
    %1955 = vmatpush1.msra.mxu0 %v1932
    %1956 = vmatprep.subr.mxu0 %v1929
    %1957 = vmatpush1.msra.mxu0 %v1928
    %1958 = vmatprep.subr.mxu0 %v1925
    %1959 = vmatpush1.msra.mxu0 %v1924
    %1960 = vmatprep.subr.mxu0 %v1921
    %1961 = vmatpush1.msra.mxu0 %v1920
    %1962 = vmatprep.subr.mxu0 %v1917
    %1963 = vmatpush1.msra.mxu0 %v1916
    %1964 = vmatprep.subr.mxu0 %v1913
    %1965 = vmatpush1.msra.mxu0 %v1912
    %1966 = vmatprep.subr.mxu0 %v1909
    %1967 = vmatpush1.msra.mxu0 %v1908
    %1968 = vmatprep.subr.mxu0 %v1905
    %1969 = vmatpush1.msra.mxu0 %v1904
    %1970 = vmatprep.subr.mxu0 %v1901
    %1971 = vmatpush1.msra.mxu0 %v1900
    %1972 = vmatprep.subr.mxu0 %v1897
    %1973 = vmatpush1.msra.mxu0 %v1896
    %1974 = vmatprep.subr.mxu0 %v1893
    %1975 = vmatpush1.msra.mxu0 %v1892
    %1976 = vmatprep.subr.mxu0 %v1889
    %1977 = vmatpush1.msra.mxu0 %v1888
    %1978 = vmatprep.subr.mxu0 %v1885
    %1979 = vmatpush1.msra.mxu0 %v1884
    %1980 = vmatprep.subr.mxu0 0.0
    %1981 = vmatpush2.msra.mxu0 0.0
    %1982 = vmatprep.subr.mxu0 0.0
    %1983 = vmatpush2.msra.mxu0 0.0
    %1984 = vmatprep.subr.mxu0 0.0
    %1985 = vmatpush2.msra.mxu0 0.0
    %1986 = vmatprep.subr.mxu0 0.0
    %1987 = vmatpush2.msra.mxu0 0.0
    %1988 = vmatprep.subr.mxu0 0.0
    %1989 = vmatpush2.msra.mxu0 0.0
    %1990 = vmatprep.subr.mxu0 0.0
    %1991 = vmatpush2.msra.mxu0 0.0
    %1992 = vmatprep.subr.mxu0 0.0
    %1993 = vmatpush2.msra.mxu0 0.0
    %1994 = vmatprep.subr.mxu0 0.0
    %1995 = vmatpush2.msra.mxu0 0.0
    %1996 = vmatprep.subr.mxu0 0.0
    %1997 = vmatpush2.msra.mxu0 0.0
    %1998 = vmatprep.subr.mxu0 0.0
    %1999 = vmatpush2.msra.mxu0 0.0
    %2000 = vmatprep.subr.mxu0 0.0
    %2001 = vmatpush2.msra.mxu0 0.0
    %2002 = vmatprep.subr.mxu0 0.0
    %2003 = vmatpush2.msra.mxu0 0.0
    %2004 = vmatprep.subr.mxu0 0.0
    %2005 = vmatpush2.msra.mxu0 0.0
    %2006 = vmatprep.subr.mxu0 0.0
    %2007 = vmatpush2.msra.mxu0 0.0
    %2008 = vmatprep.subr.mxu0 0.0
    %2009 = vmatpush2.msra.mxu0 0.0
    %2010 = vmatprep.subr.mxu0 0.0
    %2011 = vmatpush2.msra.mxu0 0.0
    %2012 = vmatprep.mubr.f32.mxu0 0.0
    %2013 = vmatmul.mubr.f32.gmra.mxu0 %v1881
    %v2014 = vpop.f32.mrf.mxu0
    %v2015 = vadd.f32 0.0, %v2014
    %v2016 = vpop.f32.mrf.mxu0
    %v2017 = vadd.f32 0.0, %v2016
    %2018 = vdwg.mxu0
    %2019 = vmatprep.subr.mxu0 %v1947
    %2020 = vmatpush1.msra.mxu0 %v1946
    %2021 = vmatprep.subr.mxu0 %v1943
    %2022 = vmatpush1.msra.mxu0 %v1942
    %2023 = vmatprep.subr.mxu0 %v1939
    %2024 = vmatpush1.msra.mxu0 %v1938
    %2025 = vmatprep.subr.mxu0 %v1935
    %2026 = vmatpush1.msra.mxu0 %v1934
    %2027 = vmatprep.subr.mxu0 %v1931
    %2028 = vmatpush1.msra.mxu0 %v1930
    %2029 = vmatprep.subr.mxu0 %v1927
    %2030 = vmatpush1.msra.mxu0 %v1926
    %2031 = vmatprep.subr.mxu0 %v1923
    %2032 = vmatpush1.msra.mxu0 %v1922
    %2033 = vmatprep.subr.mxu0 %v1919
    %2034 = vmatpush1.msra.mxu0 %v1918
    %2035 = vmatprep.subr.mxu0 %v1915
    %2036 = vmatpush1.msra.mxu0 %v1914
    %2037 = vmatprep.subr.mxu0 %v1911
    %2038 = vmatpush1.msra.mxu0 %v1910
    %2039 = vmatprep.subr.mxu0 %v1907
    %2040 = vmatpush1.msra.mxu0 %v1906
    %2041 = vmatprep.subr.mxu0 %v1903
    %2042 = vmatpush1.msra.mxu0 %v1902
    %2043 = vmatprep.subr.mxu0 %v1899
    %2044 = vmatpush1.msra.mxu0 %v1898
    %2045 = vmatprep.subr.mxu0 %v1895
    %2046 = vmatpush1.msra.mxu0 %v1894
    %2047 = vmatprep.subr.mxu0 %v1891
    %2048 = vmatpush1.msra.mxu0 %v1890
    %2049 = vmatprep.subr.mxu0 %v1887
    %2050 = vmatpush1.msra.mxu0 %v1886
    %2051 = vmatprep.subr.mxu0 0.0
    %2052 = vmatpush2.msra.mxu0 0.0
    %2053 = vmatprep.subr.mxu0 0.0
    %2054 = vmatpush2.msra.mxu0 0.0
    %2055 = vmatprep.subr.mxu0 0.0
    %2056 = vmatpush2.msra.mxu0 0.0
    %2057 = vmatprep.subr.mxu0 0.0
    %2058 = vmatpush2.msra.mxu0 0.0
    %2059 = vmatprep.subr.mxu0 0.0
    %2060 = vmatpush2.msra.mxu0 0.0
    %2061 = vmatprep.subr.mxu0 0.0
    %2062 = vmatpush2.msra.mxu0 0.0
    %2063 = vmatprep.subr.mxu0 0.0
    %2064 = vmatpush2.msra.mxu0 0.0
    %2065 = vmatprep.subr.mxu0 0.0
    %2066 = vmatpush2.msra.mxu0 0.0
    %2067 = vmatprep.subr.mxu0 0.0
    %2068 = vmatpush2.msra.mxu0 0.0
    %2069 = vmatprep.subr.mxu0 0.0
    %2070 = vmatpush2.msra.mxu0 0.0
    %2071 = vmatprep.subr.mxu0 0.0
    %2072 = vmatpush2.msra.mxu0 0.0
    %2073 = vmatprep.subr.mxu0 0.0
    %2074 = vmatpush2.msra.mxu0 0.0
    %2075 = vmatprep.subr.mxu0 0.0
    %2076 = vmatpush2.msra.mxu0 0.0
    %2077 = vmatprep.subr.mxu0 0.0
    %2078 = vmatpush2.msra.mxu0 0.0
    %2079 = vmatprep.subr.mxu0 0.0
    %2080 = vmatpush2.msra.mxu0 0.0
    %2081 = vmatprep.subr.mxu0 0.0
    %2082 = vmatpush2.msra.mxu0 0.0
    %2083 = vmatprep.mubr.f32.mxu0 0.0
    %2084 = vmatmul.mubr.f32.gmra.mxu0 %v1881
    %v2085 = vpop.f32.mrf.mxu0
    %v2086 = vadd.f32 0.0, %v2085
    %v2087 = vpop.f32.mrf.mxu0
    %v2088 = vadd.f32 0.0, %v2087
    %2089 = vdwg.mxu0
    %v2090 = vld [vmem:[%s3] sm:$0xff]
    %v2091 = vld [vmem:[%s3 + $0x8] sm:$0xff]
    %v2092 = vld [vmem:[%s3 + $0x10] sm:$0xff]
    %v2093 = vld [vmem:[%s3 + $0x18] sm:$0xff]
    %v2094 = vld [vmem:[%s3 + $0x20] sm:$0xff]
    %v2095 = vld [vmem:[%s3 + $0x28] sm:$0xff]
    %v2096 = vld [vmem:[%s3 + $0x30] sm:$0xff]
    %v2097 = vld [vmem:[%s3 + $0x38] sm:$0xff]
    %v2098 = vld [vmem:[%s3 + $0x40] sm:$0xff]
    %v2099 = vld [vmem:[%s3 + $0x48] sm:$0xff]
    %v2100 = vld [vmem:[%s3 + $0x50] sm:$0xff]
    %v2101 = vld [vmem:[%s3 + $0x58] sm:$0xff]
    %v2102 = vld [vmem:[%s3 + $0x60] sm:$0xff]
    %v2103 = vld [vmem:[%s3 + $0x68] sm:$0xff]
    %v2104 = vld [vmem:[%s3 + $0x70] sm:$0xff]
    %v2105 = vld [vmem:[%s3 + $0x78] sm:$0xff]
    %v2106 = vld [vmem:[%s3 + $0x80] sm:$0xff]
    %v2107 = vld [vmem:[%s3 + $0x88] sm:$0xff]
    %v2108 = vld [vmem:[%s3 + $0x90] sm:$0xff]
    %v2109 = vld [vmem:[%s3 + $0x98] sm:$0xff]
    %v2110 = vld [vmem:[%s3 + $0xa0] sm:$0xff]
    %v2111 = vld [vmem:[%s3 + $0xa8] sm:$0xff]
    %v2112 = vld [vmem:[%s3 + $0xb0] sm:$0xff]
    %v2113 = vld [vmem:[%s3 + $0xb8] sm:$0xff]
    %v2114 = vld [vmem:[%s3 + $0xc0] sm:$0xff]
    %v2115 = vld [vmem:[%s3 + $0xc8] sm:$0xff]
    %v2116 = vld [vmem:[%s3 + $0xd0] sm:$0xff]
    %v2117 = vld [vmem:[%s3 + $0xd8] sm:$0xff]
    %v2118 = vld [vmem:[%s3 + $0xe0] sm:$0xff]
    %v2119 = vld [vmem:[%s3 + $0xe8] sm:$0xff]
    %v2120 = vld [vmem:[%s3 + $0xf0] sm:$0xff]
    %v2121 = vld [vmem:[%s3 + $0xf8] sm:$0xff]
    %v2122 = vld [vmem:[%s3 + $0x100] sm:$0xff]
    %v2123 = vld [vmem:[%s3 + $0x108] sm:$0xff]
    %v2124 = vld [vmem:[%s3 + $0x110] sm:$0xff]
    %v2125 = vld [vmem:[%s3 + $0x118] sm:$0xff]
    %v2126 = vld [vmem:[%s3 + $0x120] sm:$0xff]
    %v2127 = vld [vmem:[%s3 + $0x128] sm:$0xff]
    %v2128 = vld [vmem:[%s3 + $0x130] sm:$0xff]
    %v2129 = vld [vmem:[%s3 + $0x138] sm:$0xff]
    %v2130 = vld [vmem:[%s3 + $0x140] sm:$0xff]
    %v2131 = vld [vmem:[%s3 + $0x148] sm:$0xff]
    %v2132 = vld [vmem:[%s3 + $0x150] sm:$0xff]
    %v2133 = vld [vmem:[%s3 + $0x158] sm:$0xff]
    %v2134 = vld [vmem:[%s3 + $0x160] sm:$0xff]
    %v2135 = vld [vmem:[%s3 + $0x168] sm:$0xff]
    %v2136 = vld [vmem:[%s3 + $0x170] sm:$0xff]
    %v2137 = vld [vmem:[%s3 + $0x178] sm:$0xff]
    %v2138 = vld [vmem:[%s3 + $0x180] sm:$0xff]
    %v2139 = vld [vmem:[%s3 + $0x188] sm:$0xff]
    %v2140 = vld [vmem:[%s3 + $0x190] sm:$0xff]
    %v2141 = vld [vmem:[%s3 + $0x198] sm:$0xff]
    %v2142 = vld [vmem:[%s3 + $0x1a0] sm:$0xff]
    %v2143 = vld [vmem:[%s3 + $0x1a8] sm:$0xff]
    %v2144 = vld [vmem:[%s3 + $0x1b0] sm:$0xff]
    %v2145 = vld [vmem:[%s3 + $0x1b8] sm:$0xff]
    %v2146 = vld [vmem:[%s3 + $0x1c0] sm:$0xff]
    %v2147 = vld [vmem:[%s3 + $0x1c8] sm:$0xff]
    %v2148 = vld [vmem:[%s3 + $0x1d0] sm:$0xff]
    %v2149 = vld [vmem:[%s3 + $0x1d8] sm:$0xff]
    %v2150 = vld [vmem:[%s3 + $0x1e0] sm:$0xff]
    %v2151 = vld [vmem:[%s3 + $0x1e8] sm:$0xff]
    %v2152 = vld [vmem:[%s3 + $0x1f0] sm:$0xff]
    %v2153 = vld [vmem:[%s3 + $0x1f8] sm:$0xff]
    %2154 = vmatprep.subr.mxu0 0.0
    %2155 = vmatpush1.msra.mxu0 %v2105
    %2156 = vmatprep.subr.mxu0 0.0
    %2157 = vmatpush1.msra.mxu0 %v2104
    %2158 = vmatprep.subr.mxu0 0.0
    %2159 = vmatpush1.msra.mxu0 %v2103
    %2160 = vmatprep.subr.mxu0 0.0
    %2161 = vmatpush1.msra.mxu0 %v2102
    %2162 = vmatprep.subr.mxu0 0.0
    %2163 = vmatpush1.msra.mxu0 %v2101
    %2164 = vmatprep.subr.mxu0 0.0
    %2165 = vmatpush1.msra.mxu0 %v2100
    %2166 = vmatprep.subr.mxu0 0.0
    %2167 = vmatpush1.msra.mxu0 %v2099
    %2168 = vmatprep.subr.mxu0 0.0
    %2169 = vmatpush1.msra.mxu0 %v2098
    %2170 = vmatprep.subr.mxu0 0.0
    %2171 = vmatpush1.msra.mxu0 %v2097
    %2172 = vmatprep.subr.mxu0 0.0
    %2173 = vmatpush1.msra.mxu0 %v2096
    %2174 = vmatprep.subr.mxu0 0.0
    %2175 = vmatpush1.msra.mxu0 %v2095
    %2176 = vmatprep.subr.mxu0 0.0
    %2177 = vmatpush1.msra.mxu0 %v2094
    %2178 = vmatprep.subr.mxu0 0.0
    %2179 = vmatpush1.msra.mxu0 %v2093
    %2180 = vmatprep.subr.mxu0 0.0
    %2181 = vmatpush1.msra.mxu0 %v2092
    %2182 = vmatprep.subr.mxu0 0.0
    %2183 = vmatpush1.msra.mxu0 %v2091
    %2184 = vmatprep.subr.mxu0 0.0
    %2185 = vmatpush1.msra.mxu0 %v2090
    %2186 = vmatprep.subr.mxu0 0.0
    %2187 = vmatpush2.msra.mxu0 %v2121
    %2188 = vmatprep.subr.mxu0 0.0
    %2189 = vmatpush2.msra.mxu0 %v2120
    %2190 = vmatprep.subr.mxu0 0.0
    %2191 = vmatpush2.msra.mxu0 %v2119
    %2192 = vmatprep.subr.mxu0 0.0
    %2193 = vmatpush2.msra.mxu0 %v2118
    %2194 = vmatprep.subr.mxu0 0.0
    %2195 = vmatpush2.msra.mxu0 %v2117
    %2196 = vmatprep.subr.mxu0 0.0
    %2197 = vmatpush2.msra.mxu0 %v2116
    %2198 = vmatprep.subr.mxu0 0.0
    %2199 = vmatpush2.msra.mxu0 %v2115
    %2200 = vmatprep.subr.mxu0 0.0
    %2201 = vmatpush2.msra.mxu0 %v2114
    %2202 = vmatprep.subr.mxu0 0.0
    %2203 = vmatpush2.msra.mxu0 %v2113
    %2204 = vmatprep.subr.mxu0 0.0
    %2205 = vmatpush2.msra.mxu0 %v2112
    %2206 = vmatprep.subr.mxu0 0.0
    %2207 = vmatpush2.msra.mxu0 %v2111
    %2208 = vmatprep.subr.mxu0 0.0
    %2209 = vmatpush2.msra.mxu0 %v2110
    %2210 = vmatprep.subr.mxu0 0.0
    %2211 = vmatpush2.msra.mxu0 %v2109
    %2212 = vmatprep.subr.mxu0 0.0
    %2213 = vmatpush2.msra.mxu0 %v2108
    %2214 = vmatprep.subr.mxu0 0.0
    %2215 = vmatpush2.msra.mxu0 %v2107
    %2216 = vmatprep.subr.mxu0 0.0
    %2217 = vmatpush2.msra.mxu0 %v2106
    %2218 = vmatprep.mubr.f32.mxu0 %v418
    %2219 = vmatmul.mubr.f32.gmra.mxu0 %v417
    %v2220 = vpop.f32.mrf.mxu0
    %v2221 = vadd.f32 0.0, %v2220
    %v2222 = vpop.f32.mrf.mxu0
    %2223 = vdwg.mxu0
    %2224 = vmatprep.subr.mxu0 0.0
    %2225 = vmatpush1.msra.mxu0 %v2137
    %2226 = vmatprep.subr.mxu0 0.0
    %2227 = vmatpush1.msra.mxu0 %v2136
    %2228 = vmatprep.subr.mxu0 0.0
    %2229 = vmatpush1.msra.mxu0 %v2135
    %2230 = vmatprep.subr.mxu0 0.0
    %2231 = vmatpush1.msra.mxu0 %v2134
    %2232 = vmatprep.subr.mxu0 0.0
    %2233 = vmatpush1.msra.mxu0 %v2133
    %2234 = vmatprep.subr.mxu0 0.0
    %2235 = vmatpush1.msra.mxu0 %v2132
    %2236 = vmatprep.subr.mxu0 0.0
    %2237 = vmatpush1.msra.mxu0 %v2131
    %2238 = vmatprep.subr.mxu0 0.0
    %2239 = vmatpush1.msra.mxu0 %v2130
    %2240 = vmatprep.subr.mxu0 0.0
    %2241 = vmatpush1.msra.mxu0 %v2129
    %2242 = vmatprep.subr.mxu0 0.0
    %2243 = vmatpush1.msra.mxu0 %v2128
    %2244 = vmatprep.subr.mxu0 0.0
    %2245 = vmatpush1.msra.mxu0 %v2127
    %2246 = vmatprep.subr.mxu0 0.0
    %2247 = vmatpush1.msra.mxu0 %v2126
    %2248 = vmatprep.subr.mxu0 0.0
    %2249 = vmatpush1.msra.mxu0 %v2125
    %2250 = vmatprep.subr.mxu0 0.0
    %2251 = vmatpush1.msra.mxu0 %v2124
    %2252 = vmatprep.subr.mxu0 0.0
    %2253 = vmatpush1.msra.mxu0 %v2123
    %2254 = vmatprep.subr.mxu0 0.0
    %2255 = vmatpush1.msra.mxu0 %v2122
    %2256 = vmatprep.subr.mxu0 0.0
    %2257 = vmatpush2.msra.mxu0 %v2153
    %2258 = vmatprep.subr.mxu0 0.0
    %2259 = vmatpush2.msra.mxu0 %v2152
    %2260 = vmatprep.subr.mxu0 0.0
    %2261 = vmatpush2.msra.mxu0 %v2151
    %2262 = vmatprep.subr.mxu0 0.0
    %2263 = vmatpush2.msra.mxu0 %v2150
    %2264 = vmatprep.subr.mxu0 0.0
    %2265 = vmatpush2.msra.mxu0 %v2149
    %2266 = vmatprep.subr.mxu0 0.0
    %2267 = vmatpush2.msra.mxu0 %v2148
    %2268 = vmatprep.subr.mxu0 0.0
    %2269 = vmatpush2.msra.mxu0 %v2147
    %2270 = vmatprep.subr.mxu0 0.0
    %2271 = vmatpush2.msra.mxu0 %v2146
    %2272 = vmatprep.subr.mxu0 0.0
    %2273 = vmatpush2.msra.mxu0 %v2145
    %2274 = vmatprep.subr.mxu0 0.0
    %2275 = vmatpush2.msra.mxu0 %v2144
    %2276 = vmatprep.subr.mxu0 0.0
    %2277 = vmatpush2.msra.mxu0 %v2143
    %2278 = vmatprep.subr.mxu0 0.0
    %2279 = vmatpush2.msra.mxu0 %v2142
    %2280 = vmatprep.subr.mxu0 0.0
    %2281 = vmatpush2.msra.mxu0 %v2141
    %2282 = vmatprep.subr.mxu0 0.0
    %2283 = vmatpush2.msra.mxu0 %v2140
    %2284 = vmatprep.subr.mxu0 0.0
    %2285 = vmatpush2.msra.mxu0 %v2139
    %2286 = vmatprep.subr.mxu0 0.0
    %2287 = vmatpush2.msra.mxu0 %v2138
    %2288 = vmatprep.mubr.f32.mxu0 %v420
    %2289 = vmatmul.mubr.f32.gmra.mxu0 %v419
    %v2290 = vpop.f32.mrf.mxu0
    %v2291 = vadd.f32 %v2221, %v2290
    %v2292 = vpop.f32.mrf.mxu0
    %2293 = vdwg.mxu0
    %2294 = vmatprep.subr.mxu0 0.0
    %2295 = vmatpush1.msra.mxu0 %v2105
    %2296 = vmatprep.subr.mxu0 0.0
    %2297 = vmatpush1.msra.mxu0 %v2104
    %2298 = vmatprep.subr.mxu0 0.0
    %2299 = vmatpush1.msra.mxu0 %v2103
    %2300 = vmatprep.subr.mxu0 0.0
    %2301 = vmatpush1.msra.mxu0 %v2102
    %2302 = vmatprep.subr.mxu0 0.0
    %2303 = vmatpush1.msra.mxu0 %v2101
    %2304 = vmatprep.subr.mxu0 0.0
    %2305 = vmatpush1.msra.mxu0 %v2100
    %2306 = vmatprep.subr.mxu0 0.0
    %2307 = vmatpush1.msra.mxu0 %v2099
    %2308 = vmatprep.subr.mxu0 0.0
    %2309 = vmatpush1.msra.mxu0 %v2098
    %2310 = vmatprep.subr.mxu0 0.0
    %2311 = vmatpush1.msra.mxu0 %v2097
    %2312 = vmatprep.subr.mxu0 0.0
    %2313 = vmatpush1.msra.mxu0 %v2096
    %2314 = vmatprep.subr.mxu0 0.0
    %2315 = vmatpush1.msra.mxu0 %v2095
    %2316 = vmatprep.subr.mxu0 0.0
    %2317 = vmatpush1.msra.mxu0 %v2094
    %2318 = vmatprep.subr.mxu0 0.0
    %2319 = vmatpush1.msra.mxu0 %v2093
    %2320 = vmatprep.subr.mxu0 0.0
    %2321 = vmatpush1.msra.mxu0 %v2092
    %2322 = vmatprep.subr.mxu0 0.0
    %2323 = vmatpush1.msra.mxu0 %v2091
    %2324 = vmatprep.subr.mxu0 0.0
    %2325 = vmatpush1.msra.mxu0 %v2090
    %2326 = vmatprep.subr.mxu0 0.0
    %2327 = vmatpush2.msra.mxu0 %v2121
    %2328 = vmatprep.subr.mxu0 0.0
    %2329 = vmatpush2.msra.mxu0 %v2120
    %2330 = vmatprep.subr.mxu0 0.0
    %2331 = vmatpush2.msra.mxu0 %v2119
    %2332 = vmatprep.subr.mxu0 0.0
    %2333 = vmatpush2.msra.mxu0 %v2118
    %2334 = vmatprep.subr.mxu0 0.0
    %2335 = vmatpush2.msra.mxu0 %v2117
    %2336 = vmatprep.subr.mxu0 0.0
    %2337 = vmatpush2.msra.mxu0 %v2116
    %2338 = vmatprep.subr.mxu0 0.0
    %2339 = vmatpush2.msra.mxu0 %v2115
    %2340 = vmatprep.subr.mxu0 0.0
    %2341 = vmatpush2.msra.mxu0 %v2114
    %2342 = vmatprep.subr.mxu0 0.0
    %2343 = vmatpush2.msra.mxu0 %v2113
    %2344 = vmatprep.subr.mxu0 0.0
    %2345 = vmatpush2.msra.mxu0 %v2112
    %2346 = vmatprep.subr.mxu0 0.0
    %2347 = vmatpush2.msra.mxu0 %v2111
    %2348 = vmatprep.subr.mxu0 0.0
    %2349 = vmatpush2.msra.mxu0 %v2110
    %2350 = vmatprep.subr.mxu0 0.0
    %2351 = vmatpush2.msra.mxu0 %v2109
    %2352 = vmatprep.subr.mxu0 0.0
    %2353 = vmatpush2.msra.mxu0 %v2108
    %2354 = vmatprep.subr.mxu0 0.0
    %2355 = vmatpush2.msra.mxu0 %v2107
    %2356 = vmatprep.subr.mxu0 0.0
    %2357 = vmatpush2.msra.mxu0 %v2106
    %2358 = vmatprep.mubr.f32.mxu0 %v2017
    %2359 = vmatmul.mubr.f32.gmra.mxu0 %v2015
    %v2360 = vpop.f32.mrf.mxu0
    %v2361 = vadd.f32 0.0, %v2360
    %v2362 = vpop.f32.mrf.mxu0
    %2363 = vdwg.mxu0
    %2364 = vmatprep.subr.mxu0 0.0
    %2365 = vmatpush1.msra.mxu0 %v2137
    %2366 = vmatprep.subr.mxu0 0.0
    %2367 = vmatpush1.msra.mxu0 %v2136
    %2368 = vmatprep.subr.mxu0 0.0
    %2369 = vmatpush1.msra.mxu0 %v2135
    %2370 = vmatprep.subr.mxu0 0.0
    %2371 = vmatpush1.msra.mxu0 %v2134
    %2372 = vmatprep.subr.mxu0 0.0
    %2373 = vmatpush1.msra.mxu0 %v2133
    %2374 = vmatprep.subr.mxu0 0.0
    %2375 = vmatpush1.msra.mxu0 %v2132
    %2376 = vmatprep.subr.mxu0 0.0
    %2377 = vmatpush1.msra.mxu0 %v2131
    %2378 = vmatprep.subr.mxu0 0.0
    %2379 = vmatpush1.msra.mxu0 %v2130
    %2380 = vmatprep.subr.mxu0 0.0
    %2381 = vmatpush1.msra.mxu0 %v2129
    %2382 = vmatprep.subr.mxu0 0.0
    %2383 = vmatpush1.msra.mxu0 %v2128
    %2384 = vmatprep.subr.mxu0 0.0
    %2385 = vmatpush1.msra.mxu0 %v2127
    %2386 = vmatprep.subr.mxu0 0.0
    %2387 = vmatpush1.msra.mxu0 %v2126
    %2388 = vmatprep.subr.mxu0 0.0
    %2389 = vmatpush1.msra.mxu0 %v2125
    %2390 = vmatprep.subr.mxu0 0.0
    %2391 = vmatpush1.msra.mxu0 %v2124
    %2392 = vmatprep.subr.mxu0 0.0
    %2393 = vmatpush1.msra.mxu0 %v2123
    %2394 = vmatprep.subr.mxu0 0.0
    %2395 = vmatpush1.msra.mxu0 %v2122
    %2396 = vmatprep.subr.mxu0 0.0
    %2397 = vmatpush2.msra.mxu0 %v2153
    %2398 = vmatprep.subr.mxu0 0.0
    %2399 = vmatpush2.msra.mxu0 %v2152
    %2400 = vmatprep.subr.mxu0 0.0
    %2401 = vmatpush2.msra.mxu0 %v2151
    %2402 = vmatprep.subr.mxu0 0.0
    %2403 = vmatpush2.msra.mxu0 %v2150
    %2404 = vmatprep.subr.mxu0 0.0
    %2405 = vmatpush2.msra.mxu0 %v2149
    %2406 = vmatprep.subr.mxu0 0.0
    %2407 = vmatpush2.msra.mxu0 %v2148
    %2408 = vmatprep.subr.mxu0 0.0
    %2409 = vmatpush2.msra.mxu0 %v2147
    %2410 = vmatprep.subr.mxu0 0.0
    %2411 = vmatpush2.msra.mxu0 %v2146
    %2412 = vmatprep.subr.mxu0 0.0
    %2413 = vmatpush2.msra.mxu0 %v2145
    %2414 = vmatprep.subr.mxu0 0.0
    %2415 = vmatpush2.msra.mxu0 %v2144
    %2416 = vmatprep.subr.mxu0 0.0
    %2417 = vmatpush2.msra.mxu0 %v2143
    %2418 = vmatprep.subr.mxu0 0.0
    %2419 = vmatpush2.msra.mxu0 %v2142
    %2420 = vmatprep.subr.mxu0 0.0
    %2421 = vmatpush2.msra.mxu0 %v2141
    %2422 = vmatprep.subr.mxu0 0.0
    %2423 = vmatpush2.msra.mxu0 %v2140
    %2424 = vmatprep.subr.mxu0 0.0
    %2425 = vmatpush2.msra.mxu0 %v2139
    %2426 = vmatprep.subr.mxu0 0.0
    %2427 = vmatpush2.msra.mxu0 %v2138
    %2428 = vmatprep.mubr.f32.mxu0 %v2088
    %2429 = vmatmul.mubr.f32.gmra.mxu0 %v2086
    %v2430 = vpop.f32.mrf.mxu0
    %v2431 = vadd.f32 %v2361, %v2430
    %v2432 = vpop.f32.mrf.mxu0
    %2433 = vdwg.mxu0
    %v2434 = vadd.f32 %v2291, %v2431
    %v2435 = vld [vmem:[#allocation15] sm:$0xff]
    %v2436 = vld [vmem:[#allocation15 + $0x8] sm:$0xff]
    %v2437 = vld [vmem:[#allocation15 + $0x10] sm:$0xff]
    %v2438 = vld [vmem:[#allocation15 + $0x18] sm:$0xff]
    %v2439 = vld [vmem:[#allocation16] sm:$0xff]
    %v2440 = vld [vmem:[#allocation16 + $0x8] sm:$0xff]
    %v2441 = vld [vmem:[#allocation16 + $0x10] sm:$0xff]
    %v2442 = vld [vmem:[#allocation16 + $0x18] sm:$0xff]
    %2444 = vset.pattern.permute.xlu0 0
    %2445 = vperm.xlu0 %2444, %v2439
    %v2446 = vpop.permute.xlu0 %2445
    %2449 = vset.pattern.permute.xlu0 0
    %2450 = vperm.xlu0 %2449, %v2440
    %v2451 = vpop.permute.xlu0 %2450
    %2454 = vset.pattern.permute.xlu0 0
    %2455 = vperm.xlu0 %2454, %v2441
    %v2456 = vpop.permute.xlu0 %2455
    %2459 = vset.pattern.permute.xlu0 0
    %2460 = vperm.xlu0 %2459, %v2442
    %v2461 = vpop.permute.xlu0 %2460
    %vm2463 = vcmask 64512
    %v2465 = vsel %vm2463, %v2435, 0
    %v2468 = vsel %vm2463, %v2436, 0
    %v2471 = vsel %vm2463, %v2437, 0
    %v2474 = vsel %vm2463, %v2438, 0
    %2476 = vmatprep.subr.mxu0 0.0
    %2477 = vmatpush1.msra.mxu0 0.0
    %2478 = vmatprep.subr.mxu0 0.0
    %2479 = vmatpush1.msra.mxu0 0.0
    %2480 = vmatprep.subr.mxu0 0.0
    %2481 = vmatpush1.msra.mxu0 0.0
    %2482 = vmatprep.subr.mxu0 0.0
    %2483 = vmatpush1.msra.mxu0 0.0
    %2484 = vmatprep.subr.mxu0 0.0
    %2485 = vmatpush1.msra.mxu0 0.0
    %2486 = vmatprep.subr.mxu0 0.0
    %2487 = vmatpush1.msra.mxu0 0.0
    %2488 = vmatprep.subr.mxu0 0.0
    %2489 = vmatpush1.msra.mxu0 0.0
    %2490 = vmatprep.subr.mxu0 0.0
    %2491 = vmatpush1.msra.mxu0 0.0
    %2492 = vmatprep.subr.mxu0 0.0
    %2493 = vmatpush1.msra.mxu0 0.0
    %2494 = vmatprep.subr.mxu0 0.0
    %2495 = vmatpush1.msra.mxu0 0.0
    %2496 = vmatprep.subr.mxu0 0.0
    %2497 = vmatpush1.msra.mxu0 0.0
    %2498 = vmatprep.subr.mxu0 0.0
    %2499 = vmatpush1.msra.mxu0 0.0
    %2500 = vmatprep.subr.mxu0 0.0
    %2501 = vmatpush1.msra.mxu0 0.0
    %2502 = vmatprep.subr.mxu0 0.0
    %2503 = vmatpush1.msra.mxu0 0.0
    %2504 = vmatprep.subr.mxu0 0.0
    %2505 = vmatpush1.msra.mxu0 0.0
    %2506 = vmatprep.subr.mxu0 0.0
    %2507 = vmatpush1.msra.mxu0 %v2434
    %2508 = vmatprep.subr.mxu0 0.0
    %2509 = vmatpush2.msra.mxu0 0.0
    %2510 = vmatprep.subr.mxu0 0.0
    %2511 = vmatpush2.msra.mxu0 0.0
    %2512 = vmatprep.subr.mxu0 0.0
    %2513 = vmatpush2.msra.mxu0 0.0
    %2514 = vmatprep.subr.mxu0 0.0
    %2515 = vmatpush2.msra.mxu0 0.0
    %2516 = vmatprep.subr.mxu0 0.0
    %2517 = vmatpush2.msra.mxu0 0.0
    %2518 = vmatprep.subr.mxu0 0.0
    %2519 = vmatpush2.msra.mxu0 0.0
    %2520 = vmatprep.subr.mxu0 0.0
    %2521 = vmatpush2.msra.mxu0 0.0
    %2522 = vmatprep.subr.mxu0 0.0
    %2523 = vmatpush2.msra.mxu0 0.0
    %2524 = vmatprep.subr.mxu0 0.0
    %2525 = vmatpush2.msra.mxu0 0.0
    %2526 = vmatprep.subr.mxu0 0.0
    %2527 = vmatpush2.msra.mxu0 0.0
    %2528 = vmatprep.subr.mxu0 0.0
    %2529 = vmatpush2.msra.mxu0 0.0
    %2530 = vmatprep.subr.mxu0 0.0
    %2531 = vmatpush2.msra.mxu0 0.0
    %2532 = vmatprep.subr.mxu0 0.0
    %2533 = vmatpush2.msra.mxu0 0.0
    %2534 = vmatprep.subr.mxu0 0.0
    %2535 = vmatpush2.msra.mxu0 0.0
    %2536 = vmatprep.subr.mxu0 0.0
    %2537 = vmatpush2.msra.mxu0 0.0
    %2538 = vmatprep.subr.mxu0 0.0
    %2539 = vmatpush2.msra.mxu0 0.0
    %2540 = vmatprep.mubr.f32.mxu0 0.0
    %2541 = vmatmul.mubr.f32.gmra.mxu0 %v2465
    %v2542 = vpop.f32.mrf.mxu0
    %v2543 = vadd.f32 %v2446, %v2542
    %v2544 = vpop.f32.mrf.mxu0
    %2545 = vmatprep.mubr.f32.mxu0 0.0
    %2546 = vmatmul.mubr.f32.gmra.mxu0 %v2468
    %v2547 = vpop.f32.mrf.mxu0
    %v2548 = vadd.f32 %v2451, %v2547
    %v2549 = vpop.f32.mrf.mxu0
    %2550 = vmatprep.mubr.f32.mxu0 0.0
    %2551 = vmatmul.mubr.f32.gmra.mxu0 %v2471
    %v2552 = vpop.f32.mrf.mxu0
    %v2553 = vadd.f32 %v2456, %v2552
    %v2554 = vpop.f32.mrf.mxu0
    %2555 = vmatprep.mubr.f32.mxu0 0.0
    %2556 = vmatmul.mubr.f32.gmra.mxu0 %v2474
    %v2557 = vpop.f32.mrf.mxu0
    %v2558 = vadd.f32 %v2461, %v2557
    %v2559 = vpop.f32.mrf.mxu0
    %2560 = vdwg.mxu0
    %v2561 = vmax.f32 %v2543, 0.0
    %v2562 = vmax.f32 %v2548, 0.0
    %v2563 = vmax.f32 %v2553, 0.0
    %v2564 = vmax.f32 %v2558, 0.0
    %v2565 = vld [vmem:[#allocation18] sm:$0xff]
    %v2566 = vld [vmem:[#allocation18 + $0x8] sm:$0xff]
    %v2567 = vld [vmem:[#allocation19] sm:$0xff]
    %v2568 = vld [vmem:[#allocation19 + $0x8] sm:$0xff]
    %2570 = vset.pattern.permute.xlu0 0
    %2571 = vperm.xlu0 %2570, %v2567
    %v2572 = vpop.permute.xlu0 %2571
    %2575 = vset.pattern.permute.xlu0 0
    %2576 = vperm.xlu0 %2575, %v2568
    %v2577 = vpop.permute.xlu0 %2576
    %vm2579 = vcmask 261120
    %v2581 = vsel %vm2579, %v2565, 0
    %v2584 = vsel %vm2579, %v2566, 0
    %2586 = vmatprep.subr.mxu0 0.0
    %2587 = vmatpush1.msra.mxu0 0.0
    %2588 = vmatprep.subr.mxu0 0.0
    %2589 = vmatpush1.msra.mxu0 0.0
    %2590 = vmatprep.subr.mxu0 0.0
    %2591 = vmatpush1.msra.mxu0 0.0
    %2592 = vmatprep.subr.mxu0 0.0
    %2593 = vmatpush1.msra.mxu0 0.0
    %2594 = vmatprep.subr.mxu0 0.0
    %2595 = vmatpush1.msra.mxu0 0.0
    %2596 = vmatprep.subr.mxu0 0.0
    %2597 = vmatpush1.msra.mxu0 0.0
    %2598 = vmatprep.subr.mxu0 0.0
    %2599 = vmatpush1.msra.mxu0 0.0
    %2600 = vmatprep.subr.mxu0 0.0
    %2601 = vmatpush1.msra.mxu0 0.0
    %2602 = vmatprep.subr.mxu0 0.0
    %2603 = vmatpush1.msra.mxu0 0.0
    %2604 = vmatprep.subr.mxu0 0.0
    %2605 = vmatpush1.msra.mxu0 0.0
    %2606 = vmatprep.subr.mxu0 0.0
    %2607 = vmatpush1.msra.mxu0 0.0
    %2608 = vmatprep.subr.mxu0 0.0
    %2609 = vmatpush1.msra.mxu0 0.0
    %2610 = vmatprep.subr.mxu0 0.0
    %2611 = vmatpush1.msra.mxu0 %v2564
    %2612 = vmatprep.subr.mxu0 0.0
    %2613 = vmatpush1.msra.mxu0 %v2563
    %2614 = vmatprep.subr.mxu0 0.0
    %2615 = vmatpush1.msra.mxu0 %v2562
    %2616 = vmatprep.subr.mxu0 0.0
    %2617 = vmatpush1.msra.mxu0 %v2561
    %2618 = vmatprep.subr.mxu0 0.0
    %2619 = vmatpush2.msra.mxu0 0.0
    %2620 = vmatprep.subr.mxu0 0.0
    %2621 = vmatpush2.msra.mxu0 0.0
    %2622 = vmatprep.subr.mxu0 0.0
    %2623 = vmatpush2.msra.mxu0 0.0
    %2624 = vmatprep.subr.mxu0 0.0
    %2625 = vmatpush2.msra.mxu0 0.0
    %2626 = vmatprep.subr.mxu0 0.0
    %2627 = vmatpush2.msra.mxu0 0.0
    %2628 = vmatprep.subr.mxu0 0.0
    %2629 = vmatpush2.msra.mxu0 0.0
    %2630 = vmatprep.subr.mxu0 0.0
    %2631 = vmatpush2.msra.mxu0 0.0
    %2632 = vmatprep.subr.mxu0 0.0
    %2633 = vmatpush2.msra.mxu0 0.0
    %2634 = vmatprep.subr.mxu0 0.0
    %2635 = vmatpush2.msra.mxu0 0.0
    %2636 = vmatprep.subr.mxu0 0.0
    %2637 = vmatpush2.msra.mxu0 0.0
    %2638 = vmatprep.subr.mxu0 0.0
    %2639 = vmatpush2.msra.mxu0 0.0
    %2640 = vmatprep.subr.mxu0 0.0
    %2641 = vmatpush2.msra.mxu0 0.0
    %2642 = vmatprep.subr.mxu0 0.0
    %2643 = vmatpush2.msra.mxu0 0.0
    %2644 = vmatprep.subr.mxu0 0.0
    %2645 = vmatpush2.msra.mxu0 0.0
    %2646 = vmatprep.subr.mxu0 0.0
    %2647 = vmatpush2.msra.mxu0 0.0
    %2648 = vmatprep.subr.mxu0 0.0
    %2649 = vmatpush2.msra.mxu0 0.0
    %2650 = vmatprep.mubr.f32.mxu0 0.0
    %2651 = vmatmul.mubr.f32.gmra.mxu0 %v2581
    %v2652 = vpop.f32.mrf.mxu0
    %v2653 = vadd.f32 %v2572, %v2652
    %v2654 = vpop.f32.mrf.mxu0
    %2655 = vmatprep.mubr.f32.mxu0 0.0
    %2656 = vmatmul.mubr.f32.gmra.mxu0 %v2584
    %v2657 = vpop.f32.mrf.mxu0
    %v2658 = vadd.f32 %v2577, %v2657
    %v2659 = vpop.f32.mrf.mxu0
    %2660 = vdwg.mxu0
    %v2661 = vmax.f32 %v2653, %v2658
    %v2662 = vsub.f32 %v2653, %v2661
    %v2663 = vmul.f32 %v2662, 1.442695
    %v2664 = vpow.pop %v2663
    %v2665 = vsub.f32 %v2658, %v2661
    %v2666 = vmul.f32 %v2665, 1.442695
    %v2667 = vpow.pop %v2666
    %v2668 = vadd.f32 %v2664, %v2667
    %v2669 = vrcp.pop %v2668
    %v2670 = vmul.f32 %v2664, %v2669
    %v2671 = vld [vmem:[#allocation4] sm:$0xff]
    %v2673 = vcombine.high %v2671, %v2671
    %v2675 = vunpack.c.l.s4 1983009808
    %v2676 = vunpack.c.0.s8 %v2675
    %v2677 = vlaneseq
    %v2678 = vshrl.u32 %v2677, 7
    %v2679 = vsub.s32 %v2676, %v2678
    %v2680 = vrot.slane %v2671, %v2679
    %v2682 = vunpack.c.l.s4 1983009808
    %v2683 = vunpack.c.0.s8 %v2682
    %v2684 = vlaneseq
    %v2685 = vshrl.u32 %v2684, 7
    %v2686 = vsub.s32 %v2683, %v2685
    %v2687 = vrot.slane %v2673, %v2686
    %v2688 = vcombine.high %v2680, %v2680
    %v2689 = vcombine.high %v2687, %v2687
    %vm2690 = vcmask 15360
    %v2692 = vsel %vm2690, %v2670, 0
    %vm2694 = vcmask 1041408
    %v2695 = vsel %vm2694, %v2680, 0
    %v2697 = vsel %vm2694, %v2688, 0
    %v2699 = vsel %vm2694, %v2687, 0
    %v2701 = vsel %vm2694, %v2689, 0
    %2703 = vmatprep.subr.mxu0 0.0
    %2704 = vmatpush1.msra.mxu0 0.0
    %2705 = vmatprep.subr.mxu0 0.0
    %2706 = vmatpush1.msra.mxu0 0.0
    %2707 = vmatprep.subr.mxu0 0.0
    %2708 = vmatpush1.msra.mxu0 0.0
    %2709 = vmatprep.subr.mxu0 0.0
    %2710 = vmatpush1.msra.mxu0 0.0
    %2711 = vmatprep.subr.mxu0 0.0
    %2712 = vmatpush1.msra.mxu0 0.0
    %2713 = vmatprep.subr.mxu0 0.0
    %2714 = vmatpush1.msra.mxu0 0.0
    %2715 = vmatprep.subr.mxu0 0.0
    %2716 = vmatpush1.msra.mxu0 0.0
    %2717 = vmatprep.subr.mxu0 0.0
    %2718 = vmatpush1.msra.mxu0 0.0
    %2719 = vmatprep.subr.mxu0 0.0
    %2720 = vmatpush1.msra.mxu0 0.0
    %2721 = vmatprep.subr.mxu0 0.0
    %2722 = vmatpush1.msra.mxu0 0.0
    %2723 = vmatprep.subr.mxu0 0.0
    %2724 = vmatpush1.msra.mxu0 0.0
    %2725 = vmatprep.subr.mxu0 0.0
    %2726 = vmatpush1.msra.mxu0 0.0
    %2727 = vmatprep.subr.mxu0 0.0
    %2728 = vmatpush1.msra.mxu0 0.0
    %2729 = vmatprep.subr.mxu0 0.0
    %2730 = vmatpush1.msra.mxu0 0.0
    %2731 = vmatprep.subr.mxu0 0.0
    %2732 = vmatpush1.msra.mxu0 0.0
    %2733 = vmatprep.subr.mxu0 %v2697
    %2734 = vmatpush1.msra.mxu0 %v2695
    %2735 = vmatprep.subr.mxu0 0.0
    %2736 = vmatpush2.msra.mxu0 0.0
    %2737 = vmatprep.subr.mxu0 0.0
    %2738 = vmatpush2.msra.mxu0 0.0
    %2739 = vmatprep.subr.mxu0 0.0
    %2740 = vmatpush2.msra.mxu0 0.0
    %2741 = vmatprep.subr.mxu0 0.0
    %2742 = vmatpush2.msra.mxu0 0.0
    %2743 = vmatprep.subr.mxu0 0.0
    %2744 = vmatpush2.msra.mxu0 0.0
    %2745 = vmatprep.subr.mxu0 0.0
    %2746 = vmatpush2.msra.mxu0 0.0
    %2747 = vmatprep.subr.mxu0 0.0
    %2748 = vmatpush2.msra.mxu0 0.0
    %2749 = vmatprep.subr.mxu0 0.0
    %2750 = vmatpush2.msra.mxu0 0.0
    %2751 = vmatprep.subr.mxu0 0.0
    %2752 = vmatpush2.msra.mxu0 0.0
    %2753 = vmatprep.subr.mxu0 0.0
    %2754 = vmatpush2.msra.mxu0 0.0
    %2755 = vmatprep.subr.mxu0 0.0
    %2756 = vmatpush2.msra.mxu0 0.0
    %2757 = vmatprep.subr.mxu0 0.0
    %2758 = vmatpush2.msra.mxu0 0.0
    %2759 = vmatprep.subr.mxu0 0.0
    %2760 = vmatpush2.msra.mxu0 0.0
    %2761 = vmatprep.subr.mxu0 0.0
    %2762 = vmatpush2.msra.mxu0 0.0
    %2763 = vmatprep.subr.mxu0 0.0
    %2764 = vmatpush2.msra.mxu0 0.0
    %2765 = vmatprep.subr.mxu0 0.0
    %2766 = vmatpush2.msra.mxu0 0.0
    %2767 = vmatprep.mubr.f32.mxu0 0.0
    %2768 = vmatmul.mubr.f32.gmra.mxu0 %v2692
    %v2769 = vpop.f32.mrf.mxu0
    %v2770 = vadd.f32 0.0, %v2769
    %v2771 = vpop.f32.mrf.mxu0
    %v2772 = vadd.f32 0.0, %v2771
    %2773 = vdwg.mxu0
    %2774 = vmatprep.subr.mxu0 0.0
    %2775 = vmatpush1.msra.mxu0 0.0
    %2776 = vmatprep.subr.mxu0 0.0
    %2777 = vmatpush1.msra.mxu0 0.0
    %2778 = vmatprep.subr.mxu0 0.0
    %2779 = vmatpush1.msra.mxu0 0.0
    %2780 = vmatprep.subr.mxu0 0.0
    %2781 = vmatpush1.msra.mxu0 0.0
    %2782 = vmatprep.subr.mxu0 0.0
    %2783 = vmatpush1.msra.mxu0 0.0
    %2784 = vmatprep.subr.mxu0 0.0
    %2785 = vmatpush1.msra.mxu0 0.0
    %2786 = vmatprep.subr.mxu0 0.0
    %2787 = vmatpush1.msra.mxu0 0.0
    %2788 = vmatprep.subr.mxu0 0.0
    %2789 = vmatpush1.msra.mxu0 0.0
    %2790 = vmatprep.subr.mxu0 0.0
    %2791 = vmatpush1.msra.mxu0 0.0
    %2792 = vmatprep.subr.mxu0 0.0
    %2793 = vmatpush1.msra.mxu0 0.0
    %2794 = vmatprep.subr.mxu0 0.0
    %2795 = vmatpush1.msra.mxu0 0.0
    %2796 = vmatprep.subr.mxu0 0.0
    %2797 = vmatpush1.msra.mxu0 0.0
    %2798 = vmatprep.subr.mxu0 0.0
    %2799 = vmatpush1.msra.mxu0 0.0
    %2800 = vmatprep.subr.mxu0 0.0
    %2801 = vmatpush1.msra.mxu0 0.0
    %2802 = vmatprep.subr.mxu0 0.0
    %2803 = vmatpush1.msra.mxu0 0.0
    %2804 = vmatprep.subr.mxu0 %v2701
    %2805 = vmatpush1.msra.mxu0 %v2699
    %2806 = vmatprep.subr.mxu0 0.0
    %2807 = vmatpush2.msra.mxu0 0.0
    %2808 = vmatprep.subr.mxu0 0.0
    %2809 = vmatpush2.msra.mxu0 0.0
    %2810 = vmatprep.subr.mxu0 0.0
    %2811 = vmatpush2.msra.mxu0 0.0
    %2812 = vmatprep.subr.mxu0 0.0
    %2813 = vmatpush2.msra.mxu0 0.0
    %2814 = vmatprep.subr.mxu0 0.0
    %2815 = vmatpush2.msra.mxu0 0.0
    %2816 = vmatprep.subr.mxu0 0.0
    %2817 = vmatpush2.msra.mxu0 0.0
    %2818 = vmatprep.subr.mxu0 0.0
    %2819 = vmatpush2.msra.mxu0 0.0
    %2820 = vmatprep.subr.mxu0 0.0
    %2821 = vmatpush2.msra.mxu0 0.0
    %2822 = vmatprep.subr.mxu0 0.0
    %2823 = vmatpush2.msra.mxu0 0.0
    %2824 = vmatprep.subr.mxu0 0.0
    %2825 = vmatpush2.msra.mxu0 0.0
    %2826 = vmatprep.subr.mxu0 0.0
    %2827 = vmatpush2.msra.mxu0 0.0
    %2828 = vmatprep.subr.mxu0 0.0
    %2829 = vmatpush2.msra.mxu0 0.0
    %2830 = vmatprep.subr.mxu0 0.0
    %2831 = vmatpush2.msra.mxu0 0.0
    %2832 = vmatprep.subr.mxu0 0.0
    %2833 = vmatpush2.msra.mxu0 0.0
    %2834 = vmatprep.subr.mxu0 0.0
    %2835 = vmatpush2.msra.mxu0 0.0
    %2836 = vmatprep.subr.mxu0 0.0
    %2837 = vmatpush2.msra.mxu0 0.0
    %2838 = vmatprep.mubr.f32.mxu0 0.0
    %2839 = vmatmul.mubr.f32.gmra.mxu0 %v2692
    %v2840 = vpop.f32.mrf.mxu0
    %v2841 = vadd.f32 0.0, %v2840
    %v2842 = vpop.f32.mrf.mxu0
    %v2843 = vadd.f32 0.0, %v2842
    %2844 = vdwg.mxu0
    %v2845 = vmul.f32 %v2770, %v417
    %v2846 = vmul.f32 %v2772, %v418
    %v2847 = vmul.f32 %v2841, %v419
    %v2848 = vmul.f32 %v2843, %v420
    %v2849 = vsub.f32 1.0, %v2770
    %v2850 = vsub.f32 1.0, %v2772
    %v2851 = vsub.f32 1.0, %v2841
    %v2852 = vsub.f32 1.0, %v2843
    %v2853 = vmul.f32 %v2849, %v2015
    %v2854 = vmul.f32 %v2850, %v2017
    %v2855 = vmul.f32 %v2851, %v2086
    %v2856 = vmul.f32 %v2852, %v2088
    %v2857 = vadd.f32 %v2845, %v2853
    %v2858 = vadd.f32 %v2846, %v2854
    %v2859 = vadd.f32 %v2847, %v2855
    %v2860 = vadd.f32 %v2848, %v2856
    %2861 = vmatprep.subr.mxu0 0.0
    %2862 = vmatpush1.msra.mxu0 %v2105
    %2863 = vmatprep.subr.mxu0 0.0
    %2864 = vmatpush1.msra.mxu0 %v2104
    %2865 = vmatprep.subr.mxu0 0.0
    %2866 = vmatpush1.msra.mxu0 %v2103
    %2867 = vmatprep.subr.mxu0 0.0
    %2868 = vmatpush1.msra.mxu0 %v2102
    %2869 = vmatprep.subr.mxu0 0.0
    %2870 = vmatpush1.msra.mxu0 %v2101
    %2871 = vmatprep.subr.mxu0 0.0
    %2872 = vmatpush1.msra.mxu0 %v2100
    %2873 = vmatprep.subr.mxu0 0.0
    %2874 = vmatpush1.msra.mxu0 %v2099
    %2875 = vmatprep.subr.mxu0 0.0
    %2876 = vmatpush1.msra.mxu0 %v2098
    %2877 = vmatprep.subr.mxu0 0.0
    %2878 = vmatpush1.msra.mxu0 %v2097
    %2879 = vmatprep.subr.mxu0 0.0
    %2880 = vmatpush1.msra.mxu0 %v2096
    %2881 = vmatprep.subr.mxu0 0.0
    %2882 = vmatpush1.msra.mxu0 %v2095
    %2883 = vmatprep.subr.mxu0 0.0
    %2884 = vmatpush1.msra.mxu0 %v2094
    %2885 = vmatprep.subr.mxu0 0.0
    %2886 = vmatpush1.msra.mxu0 %v2093
    %2887 = vmatprep.subr.mxu0 0.0
    %2888 = vmatpush1.msra.mxu0 %v2092
    %2889 = vmatprep.subr.mxu0 0.0
    %2890 = vmatpush1.msra.mxu0 %v2091
    %2891 = vmatprep.subr.mxu0 0.0
    %2892 = vmatpush1.msra.mxu0 %v2090
    %2893 = vmatprep.subr.mxu0 0.0
    %2894 = vmatpush2.msra.mxu0 %v2121
    %2895 = vmatprep.subr.mxu0 0.0
    %2896 = vmatpush2.msra.mxu0 %v2120
    %2897 = vmatprep.subr.mxu0 0.0
    %2898 = vmatpush2.msra.mxu0 %v2119
    %2899 = vmatprep.subr.mxu0 0.0
    %2900 = vmatpush2.msra.mxu0 %v2118
    %2901 = vmatprep.subr.mxu0 0.0
    %2902 = vmatpush2.msra.mxu0 %v2117
    %2903 = vmatprep.subr.mxu0 0.0
    %2904 = vmatpush2.msra.mxu0 %v2116
    %2905 = vmatprep.subr.mxu0 0.0
    %2906 = vmatpush2.msra.mxu0 %v2115
    %2907 = vmatprep.subr.mxu0 0.0
    %2908 = vmatpush2.msra.mxu0 %v2114
    %2909 = vmatprep.subr.mxu0 0.0
    %2910 = vmatpush2.msra.mxu0 %v2113
    %2911 = vmatprep.subr.mxu0 0.0
    %2912 = vmatpush2.msra.mxu0 %v2112
    %2913 = vmatprep.subr.mxu0 0.0
    %2914 = vmatpush2.msra.mxu0 %v2111
    %2915 = vmatprep.subr.mxu0 0.0
    %2916 = vmatpush2.msra.mxu0 %v2110
    %2917 = vmatprep.subr.mxu0 0.0
    %2918 = vmatpush2.msra.mxu0 %v2109
    %2919 = vmatprep.subr.mxu0 0.0
    %2920 = vmatpush2.msra.mxu0 %v2108
    %2921 = vmatprep.subr.mxu0 0.0
    %2922 = vmatpush2.msra.mxu0 %v2107
    %2923 = vmatprep.subr.mxu0 0.0
    %2924 = vmatpush2.msra.mxu0 %v2106
    %2925 = vmatprep.mubr.f32.mxu0 %v2858
    %2926 = vmatmul.mubr.f32.gmra.mxu0 %v2857
    %v2927 = vpop.f32.mrf.mxu0
    %v2928 = vadd.f32 0.0, %v2927
    %v2929 = vpop.f32.mrf.mxu0
    %2930 = vdwg.mxu0
    %2931 = vmatprep.subr.mxu0 0.0
    %2932 = vmatpush1.msra.mxu0 %v2137
    %2933 = vmatprep.subr.mxu0 0.0
    %2934 = vmatpush1.msra.mxu0 %v2136
    %2935 = vmatprep.subr.mxu0 0.0
    %2936 = vmatpush1.msra.mxu0 %v2135
    %2937 = vmatprep.subr.mxu0 0.0
    %2938 = vmatpush1.msra.mxu0 %v2134
    %2939 = vmatprep.subr.mxu0 0.0
    %2940 = vmatpush1.msra.mxu0 %v2133
    %2941 = vmatprep.subr.mxu0 0.0
    %2942 = vmatpush1.msra.mxu0 %v2132
    %2943 = vmatprep.subr.mxu0 0.0
    %2944 = vmatpush1.msra.mxu0 %v2131
    %2945 = vmatprep.subr.mxu0 0.0
    %2946 = vmatpush1.msra.mxu0 %v2130
    %2947 = vmatprep.subr.mxu0 0.0
    %2948 = vmatpush1.msra.mxu0 %v2129
    %2949 = vmatprep.subr.mxu0 0.0
    %2950 = vmatpush1.msra.mxu0 %v2128
    %2951 = vmatprep.subr.mxu0 0.0
    %2952 = vmatpush1.msra.mxu0 %v2127
    %2953 = vmatprep.subr.mxu0 0.0
    %2954 = vmatpush1.msra.mxu0 %v2126
    %2955 = vmatprep.subr.mxu0 0.0
    %2956 = vmatpush1.msra.mxu0 %v2125
    %2957 = vmatprep.subr.mxu0 0.0
    %2958 = vmatpush1.msra.mxu0 %v2124
    %2959 = vmatprep.subr.mxu0 0.0
    %2960 = vmatpush1.msra.mxu0 %v2123
    %2961 = vmatprep.subr.mxu0 0.0
    %2962 = vmatpush1.msra.mxu0 %v2122
    %2963 = vmatprep.subr.mxu0 0.0
    %2964 = vmatpush2.msra.mxu0 %v2153
    %2965 = vmatprep.subr.mxu0 0.0
    %2966 = vmatpush2.msra.mxu0 %v2152
    %2967 = vmatprep.subr.mxu0 0.0
    %2968 = vmatpush2.msra.mxu0 %v2151
    %2969 = vmatprep.subr.mxu0 0.0
    %2970 = vmatpush2.msra.mxu0 %v2150
    %2971 = vmatprep.subr.mxu0 0.0
    %2972 = vmatpush2.msra.mxu0 %v2149
    %2973 = vmatprep.subr.mxu0 0.0
    %2974 = vmatpush2.msra.mxu0 %v2148
    %2975 = vmatprep.subr.mxu0 0.0
    %2976 = vmatpush2.msra.mxu0 %v2147
    %2977 = vmatprep.subr.mxu0 0.0
    %2978 = vmatpush2.msra.mxu0 %v2146
    %2979 = vmatprep.subr.mxu0 0.0
    %2980 = vmatpush2.msra.mxu0 %v2145
    %2981 = vmatprep.subr.mxu0 0.0
    %2982 = vmatpush2.msra.mxu0 %v2144
    %2983 = vmatprep.subr.mxu0 0.0
    %2984 = vmatpush2.msra.mxu0 %v2143
    %2985 = vmatprep.subr.mxu0 0.0
    %2986 = vmatpush2.msra.mxu0 %v2142
    %2987 = vmatprep.subr.mxu0 0.0
    %2988 = vmatpush2.msra.mxu0 %v2141
    %2989 = vmatprep.subr.mxu0 0.0
    %2990 = vmatpush2.msra.mxu0 %v2140
    %2991 = vmatprep.subr.mxu0 0.0
    %2992 = vmatpush2.msra.mxu0 %v2139
    %2993 = vmatprep.subr.mxu0 0.0
    %2994 = vmatpush2.msra.mxu0 %v2138
    %2995 = vmatprep.mubr.f32.mxu0 %v2860
    %2996 = vmatmul.mubr.f32.gmra.mxu0 %v2859
    %v2997 = vpop.f32.mrf.mxu0
    %v2998 = vadd.f32 %v2928, %v2997
    %v2999 = vpop.f32.mrf.mxu0
    %3000 = vdwg.mxu0
    %v3001 = vld [vmem:[#allocation21] sm:$0x1f]
    %v3002 = vld [vmem:[#allocation22] sm:$0x1f]
    %3004 = vset.pattern.permute.xlu0 0
    %3005 = vperm.xlu0 %3004, %v3002
    %v3006 = vpop.permute.xlu0 %3005
    %v3009 = vsel %vm2463, %v3001, 0
    %3011 = vmatprep.subr.mxu0 0.0
    %3012 = vmatpush1.msra.mxu0 0.0
    %3013 = vmatprep.subr.mxu0 0.0
    %3014 = vmatpush1.msra.mxu0 0.0
    %3015 = vmatprep.subr.mxu0 0.0
    %3016 = vmatpush1.msra.mxu0 0.0
    %3017 = vmatprep.subr.mxu0 0.0
    %3018 = vmatpush1.msra.mxu0 0.0
    %3019 = vmatprep.subr.mxu0 0.0
    %3020 = vmatpush1.msra.mxu0 0.0
    %3021 = vmatprep.subr.mxu0 0.0
    %3022 = vmatpush1.msra.mxu0 0.0
    %3023 = vmatprep.subr.mxu0 0.0
    %3024 = vmatpush1.msra.mxu0 0.0
    %3025 = vmatprep.subr.mxu0 0.0
    %3026 = vmatpush1.msra.mxu0 0.0
    %3027 = vmatprep.subr.mxu0 0.0
    %3028 = vmatpush1.msra.mxu0 0.0
    %3029 = vmatprep.subr.mxu0 0.0
    %3030 = vmatpush1.msra.mxu0 0.0
    %3031 = vmatprep.subr.mxu0 0.0
    %3032 = vmatpush1.msra.mxu0 0.0
    %3033 = vmatprep.subr.mxu0 0.0
    %3034 = vmatpush1.msra.mxu0 0.0
    %3035 = vmatprep.subr.mxu0 0.0
    %3036 = vmatpush1.msra.mxu0 0.0
    %3037 = vmatprep.subr.mxu0 0.0
    %3038 = vmatpush1.msra.mxu0 0.0
    %3039 = vmatprep.subr.mxu0 0.0
    %3040 = vmatpush1.msra.mxu0 0.0
    %3041 = vmatprep.subr.mxu0 0.0
    %3042 = vmatpush1.msra.mxu0 %v2291
    %3043 = vmatprep.subr.mxu0 0.0
    %3044 = vmatpush2.msra.mxu0 0.0
    %3045 = vmatprep.subr.mxu0 0.0
    %3046 = vmatpush2.msra.mxu0 0.0
    %3047 = vmatprep.subr.mxu0 0.0
    %3048 = vmatpush2.msra.mxu0 0.0
    %3049 = vmatprep.subr.mxu0 0.0
    %3050 = vmatpush2.msra.mxu0 0.0
    %3051 = vmatprep.subr.mxu0 0.0
    %3052 = vmatpush2.msra.mxu0 0.0
    %3053 = vmatprep.subr.mxu0 0.0
    %3054 = vmatpush2.msra.mxu0 0.0
    %3055 = vmatprep.subr.mxu0 0.0
    %3056 = vmatpush2.msra.mxu0 0.0
    %3057 = vmatprep.subr.mxu0 0.0
    %3058 = vmatpush2.msra.mxu0 0.0
    %3059 = vmatprep.subr.mxu0 0.0
    %3060 = vmatpush2.msra.mxu0 0.0
    %3061 = vmatprep.subr.mxu0 0.0
    %3062 = vmatpush2.msra.mxu0 0.0
    %3063 = vmatprep.subr.mxu0 0.0
    %3064 = vmatpush2.msra.mxu0 0.0
    %3065 = vmatprep.subr.mxu0 0.0
    %3066 = vmatpush2.msra.mxu0 0.0
    %3067 = vmatprep.subr.mxu0 0.0
    %3068 = vmatpush2.msra.mxu0 0.0
    %3069 = vmatprep.subr.mxu0 0.0
    %3070 = vmatpush2.msra.mxu0 0.0
    %3071 = vmatprep.subr.mxu0 0.0
    %3072 = vmatpush2.msra.mxu0 0.0
    %3073 = vmatprep.subr.mxu0 0.0
    %3074 = vmatpush2.msra.mxu0 0.0
    %3075 = vmatprep.mubr.f32.mxu0 0.0
    %3076 = vmatmul.mubr.f32.gmra.mxu0 %v3009
    %v3077 = vpop.f32.mrf.mxu0
    %v3078 = vadd.f32 %v3006, %v3077
    %v3079 = vpop.f32.mrf.mxu0
    %3080 = vdwg.mxu0
    %vm3081 = vcmask 12288
    %3082 = vst.msk [vmem:[%s17] sm:$0x1f] %vm3081, %v3078
    %3083 = vmatprep.subr.mxu0 0.0
    %3084 = vmatpush1.msra.mxu0 0.0
    %3085 = vmatprep.subr.mxu0 0.0
    %3086 = vmatpush1.msra.mxu0 0.0
    %3087 = vmatprep.subr.mxu0 0.0
    %3088 = vmatpush1.msra.mxu0 0.0
    %3089 = vmatprep.subr.mxu0 0.0
    %3090 = vmatpush1.msra.mxu0 0.0
    %3091 = vmatprep.subr.mxu0 0.0
    %3092 = vmatpush1.msra.mxu0 0.0
    %3093 = vmatprep.subr.mxu0 0.0
    %3094 = vmatpush1.msra.mxu0 0.0
    %3095 = vmatprep.subr.mxu0 0.0
    %3096 = vmatpush1.msra.mxu0 0.0
    %3097 = vmatprep.subr.mxu0 0.0
    %3098 = vmatpush1.msra.mxu0 0.0
    %3099 = vmatprep.subr.mxu0 0.0
    %3100 = vmatpush1.msra.mxu0 0.0
    %3101 = vmatprep.subr.mxu0 0.0
    %3102 = vmatpush1.msra.mxu0 0.0
    %3103 = vmatprep.subr.mxu0 0.0
    %3104 = vmatpush1.msra.mxu0 0.0
    %3105 = vmatprep.subr.mxu0 0.0
    %3106 = vmatpush1.msra.mxu0 0.0
    %3107 = vmatprep.subr.mxu0 0.0
    %3108 = vmatpush1.msra.mxu0 0.0
    %3109 = vmatprep.subr.mxu0 0.0
    %3110 = vmatpush1.msra.mxu0 0.0
    %3111 = vmatprep.subr.mxu0 0.0
    %3112 = vmatpush1.msra.mxu0 0.0
    %3113 = vmatprep.subr.mxu0 0.0
    %3114 = vmatpush1.msra.mxu0 %v2431
    %3115 = vmatprep.subr.mxu0 0.0
    %3116 = vmatpush2.msra.mxu0 0.0
    %3117 = vmatprep.subr.mxu0 0.0
    %3118 = vmatpush2.msra.mxu0 0.0
    %3119 = vmatprep.subr.mxu0 0.0
    %3120 = vmatpush2.msra.mxu0 0.0
    %3121 = vmatprep.subr.mxu0 0.0
    %3122 = vmatpush2.msra.mxu0 0.0
    %3123 = vmatprep.subr.mxu0 0.0
    %3124 = vmatpush2.msra.mxu0 0.0
    %3125 = vmatprep.subr.mxu0 0.0
    %3126 = vmatpush2.msra.mxu0 0.0
    %3127 = vmatprep.subr.mxu0 0.0
    %3128 = vmatpush2.msra.mxu0 0.0
    %3129 = vmatprep.subr.mxu0 0.0
    %3130 = vmatpush2.msra.mxu0 0.0
    %3131 = vmatprep.subr.mxu0 0.0
    %3132 = vmatpush2.msra.mxu0 0.0
    %3133 = vmatprep.subr.mxu0 0.0
    %3134 = vmatpush2.msra.mxu0 0.0
    %3135 = vmatprep.subr.mxu0 0.0
    %3136 = vmatpush2.msra.mxu0 0.0
    %3137 = vmatprep.subr.mxu0 0.0
    %3138 = vmatpush2.msra.mxu0 0.0
    %3139 = vmatprep.subr.mxu0 0.0
    %3140 = vmatpush2.msra.mxu0 0.0
    %3141 = vmatprep.subr.mxu0 0.0
    %3142 = vmatpush2.msra.mxu0 0.0
    %3143 = vmatprep.subr.mxu0 0.0
    %3144 = vmatpush2.msra.mxu0 0.0
    %3145 = vmatprep.subr.mxu0 0.0
    %3146 = vmatpush2.msra.mxu0 0.0
    %3147 = vmatprep.mubr.f32.mxu0 0.0
    %3148 = vmatmul.mubr.f32.gmra.mxu0 %v3009
    %v3149 = vpop.f32.mrf.mxu0
    %v3150 = vadd.f32 %v3006, %v3149
    %v3151 = vpop.f32.mrf.mxu0
    %3152 = vdwg.mxu0
    %3153 = vst.msk [vmem:[%s18] sm:$0x1f] %vm3081, %v3150
    %3154 = vmatprep.subr.mxu0 0.0
    %3155 = vmatpush1.msra.mxu0 0.0
    %3156 = vmatprep.subr.mxu0 0.0
    %3157 = vmatpush1.msra.mxu0 0.0
    %3158 = vmatprep.subr.mxu0 0.0
    %3159 = vmatpush1.msra.mxu0 0.0
    %3160 = vmatprep.subr.mxu0 0.0
    %3161 = vmatpush1.msra.mxu0 0.0
    %3162 = vmatprep.subr.mxu0 0.0
    %3163 = vmatpush1.msra.mxu0 0.0
    %3164 = vmatprep.subr.mxu0 0.0
    %3165 = vmatpush1.msra.mxu0 0.0
    %3166 = vmatprep.subr.mxu0 0.0
    %3167 = vmatpush1.msra.mxu0 0.0
    %3168 = vmatprep.subr.mxu0 0.0
    %3169 = vmatpush1.msra.mxu0 0.0
    %3170 = vmatprep.subr.mxu0 0.0
    %3171 = vmatpush1.msra.mxu0 0.0
    %3172 = vmatprep.subr.mxu0 0.0
    %3173 = vmatpush1.msra.mxu0 0.0
    %3174 = vmatprep.subr.mxu0 0.0
    %3175 = vmatpush1.msra.mxu0 0.0
    %3176 = vmatprep.subr.mxu0 0.0
    %3177 = vmatpush1.msra.mxu0 0.0
    %3178 = vmatprep.subr.mxu0 0.0
    %3179 = vmatpush1.msra.mxu0 0.0
    %3180 = vmatprep.subr.mxu0 0.0
    %3181 = vmatpush1.msra.mxu0 0.0
    %3182 = vmatprep.subr.mxu0 0.0
    %3183 = vmatpush1.msra.mxu0 0.0
    %3184 = vmatprep.subr.mxu0 0.0
    %3185 = vmatpush1.msra.mxu0 %v2998
    %3186 = vmatprep.subr.mxu0 0.0
    %3187 = vmatpush2.msra.mxu0 0.0
    %3188 = vmatprep.subr.mxu0 0.0
    %3189 = vmatpush2.msra.mxu0 0.0
    %3190 = vmatprep.subr.mxu0 0.0
    %3191 = vmatpush2.msra.mxu0 0.0
    %3192 = vmatprep.subr.mxu0 0.0
    %3193 = vmatpush2.msra.mxu0 0.0
    %3194 = vmatprep.subr.mxu0 0.0
    %3195 = vmatpush2.msra.mxu0 0.0
    %3196 = vmatprep.subr.mxu0 0.0
    %3197 = vmatpush2.msra.mxu0 0.0
    %3198 = vmatprep.subr.mxu0 0.0
    %3199 = vmatpush2.msra.mxu0 0.0
    %3200 = vmatprep.subr.mxu0 0.0
    %3201 = vmatpush2.msra.mxu0 0.0
    %3202 = vmatprep.subr.mxu0 0.0
    %3203 = vmatpush2.msra.mxu0 0.0
    %3204 = vmatprep.subr.mxu0 0.0
    %3205 = vmatpush2.msra.mxu0 0.0
    %3206 = vmatprep.subr.mxu0 0.0
    %3207 = vmatpush2.msra.mxu0 0.0
    %3208 = vmatprep.subr.mxu0 0.0
    %3209 = vmatpush2.msra.mxu0 0.0
    %3210 = vmatprep.subr.mxu0 0.0
    %3211 = vmatpush2.msra.mxu0 0.0
    %3212 = vmatprep.subr.mxu0 0.0
    %3213 = vmatpush2.msra.mxu0 0.0
    %3214 = vmatprep.subr.mxu0 0.0
    %3215 = vmatpush2.msra.mxu0 0.0
    %3216 = vmatprep.subr.mxu0 0.0
    %3217 = vmatpush2.msra.mxu0 0.0
    %3218 = vmatprep.mubr.f32.mxu0 0.0
    %3219 = vmatmul.mubr.f32.gmra.mxu0 %v3009
    %v3220 = vpop.f32.mrf.mxu0
    %v3221 = vadd.f32 %v3006, %v3220
    %v3222 = vpop.f32.mrf.mxu0
    %3223 = vdwg.mxu0
    %3224 = vst.msk [vmem:[%s19] sm:$0x1f] %vm3081, %v3221
    // Predicated region
    $region126: #{_lambda_.1} parent=1 // pred_check
      _
    $region127: #{_lambda_.1} parent=1 // pred_check_branch
      %3226 = sbr.rel (0) target = $region129
    $region128: #{_lambda_.1} parent=1 // pred_region
      _
    $region129: #{_lambda_.1} parent=1 // pred_fallthru
      _
    // Predicated region
    $region130: #{_lambda_.1} parent=1 // pred_check
      _
    $region131: #{_lambda_.1} parent=1 // pred_check_branch
      %3228 = sbr.rel (0) target = $region133
    $region132: #{_lambda_.1} parent=1 // pred_region
      _
    $region133: #{_lambda_.1} parent=1 // pred_fallthru
      _
    // Predicated region
    $region134: #{_lambda_.1} parent=1 // pred_check
      _
    $region135: #{_lambda_.1} parent=1 // pred_check_branch
      %3230 = sbr.rel (0) target = $region137
    $region136: #{_lambda_.1} parent=1 // pred_region
      _
    $region137: #{_lambda_.1} parent=1 // pred_fallthru
      _
    // Predicated region
    $region138: #{_lambda_.1} parent=1 // pred_check
      _
    $region139: #{_lambda_.1} parent=1 // pred_check_branch
      %3232 = sbr.rel (0) target = $region141
    $region140: #{_lambda_.1} parent=1 // pred_region
      _
    $region141: #{_lambda_.1} parent=1 // pred_fallthru
      _
    // Predicated region
    $region142: #{_lambda_.1} parent=1 // pred_check
      _
    $region143: #{_lambda_.1} parent=1 // pred_check_branch
      %3234 = sbr.rel (0) target = $region145
    $region144: #{_lambda_.1} parent=1 // pred_region
      _
    $region145: #{_lambda_.1} parent=1 // pred_fallthru
      _
    // Predicated region
    $region146: #{_lambda_.1} parent=1 // pred_check
      _
    $region147: #{_lambda_.1} parent=1 // pred_check_branch
      %3236 = sbr.rel (0) target = $region149
    $region148: #{_lambda_.1} parent=1 // pred_region
      _
    $region149: #{_lambda_.1} parent=1 // pred_fallthru
      _
    %3237 = vsyncpa [#allocation3], 1
    %3238 = vsyncpa [#allocation5], 1
    %3239 = vsyncpa [#allocation8], 1
    %3240 = vsyncpa [#allocation11], 1
    %3241 = vsyncpa [#allocation14], 1
    %3242 = vsyncpa [#allocation17], 1
    %3243 = vsyncpa [#allocation20], 1
    %3244 = vsyncpa [#allocation23], 1

</llo_original>
